<compile_context>
chip_gen: v5e
topology: v5e:2x2
jax: 0.10.0
libtpu: 0.0.40
codegen_flags: <defaults>
</compile_context>

<pallas_src>
import functools
import math

import jax
import jax.numpy as jnp
from jax import lax
from jax.experimental import pallas as pl
from jax.experimental.pallas import tpu as pltpu

LN_EPS = 1e-5
_NEG_BIG = -1e30


# ----------------------------------------------------------------------------
# sizing helpers (generation-aware)
# ----------------------------------------------------------------------------
def _round_up(n, m):
    return (n + m - 1) // m * m


def _vmem_budget_bytes():
    # ~75% of physical VMEM: v5e/v6e 128 MiB -> ~96 MiB, v7x 64 MiB -> 48 MiB.
    try:
        cap = pltpu.get_tpu_info().vmem_capacity_bytes
    except Exception:
        cap = 64 * 1024 * 1024
    return int(cap) * 3 // 4


VMEM_BUDGET = _vmem_budget_bytes()
MAX_ROW_TILE = 512 if VMEM_BUDGET >= 80 * 1024 * 1024 else 256
MAX_KV_TILE = 1024 if VMEM_BUDGET >= 80 * 1024 * 1024 else 512


def _cparams(dim_sem):
    return pltpu.CompilerParams(dimension_semantics=dim_sem,
                                vmem_limit_bytes=VMEM_BUDGET)


def _row_tile(n_rows, max_tile=None):
    """Largest multiple-of-8 tile <= max_tile that divides n_rows."""
    max_tile = MAX_ROW_TILE if max_tile is None else max_tile
    t = max(8, min(max_tile, n_rows) - (min(max_tile, n_rows) % 8))
    while t > 8 and n_rows % t:
        t -= 8
    return t


def _seq_tiles(s):
    """(q_tile, kv_tile, s_pad) for the flash-attention grid."""
    s8 = _round_up(s, 8)
    if s8 <= 256:
        return s8, s8, s8
    s_pad = _round_up(s8, 256)
    kv_t = 256
    for cand in range(min(MAX_KV_TILE, s_pad), 256, -256):
        if s_pad % cand == 0:
            kv_t = cand
            break
    return 256, kv_t, s_pad


def _const_spec(shape):
    # weights / biases / LN params: constant block index -> fetched once.
    # TODO(synk): single-buffer these with pipeline_mode=pl.Buffered(1) once
    # validated on all target generations (saves 1x weight VMEM).
    nd = len(shape)
    return pl.BlockSpec(shape, lambda i: (0,) * nd)


# ----------------------------------------------------------------------------
# Kernel 1: row-tiled linear  y = x @ w + b   (embedding, QKV proj, final fc)
# ----------------------------------------------------------------------------
def _linear_kernel(x_ref, w_ref, b_ref, o_ref):
    x = x_ref[...].astype(jnp.bfloat16)                      # bf16 MXU operands
    y = jnp.dot(x, w_ref[...], preferred_element_type=jnp.float32) + b_ref[...]
    o_ref[...] = y.astype(o_ref.dtype)


def linear_rows(x, w, b, *, out_dtype=jnp.float32, min_lanes=None):
    """x:(N,Din), w:(Din,Dout) bf16, b:(1,Dout) f32.  N must be a multiple of 8."""
    n, din = x.shape
    dout = w.shape[1]
    if min_lanes is not None and dout < min_lanes:
        # lane-dense output: pad Dout to 128 so stores are full-lane vst's;
        # caller slices the valid columns back out (tiny XLA op).
        w = jnp.pad(w, ((0, 0), (0, min_lanes - dout)))
        b = jnp.pad(b, ((0, 0), (0, min_lanes - dout)))
        dout = min_lanes
    tn = _row_tile(n)
    return pl.pallas_call(
        _linear_kernel,
        out_shape=jax.ShapeDtypeStruct((n, dout), out_dtype),
        grid=(n // tn,),
        in_specs=[
            pl.BlockSpec((tn, din), lambda i: (i, 0)),
            _const_spec((din, dout)),
            _const_spec((1, dout)),
        ],
        out_specs=pl.BlockSpec((tn, dout), lambda i: (i, 0)),
        compiler_params=_cparams(("parallel",)),
    )(x, w, b)


# ----------------------------------------------------------------------------
# Kernel 2: flash attention, grid (B, H, q_tiles, kv_tiles)
# ----------------------------------------------------------------------------
def _flash_kernel(q_ref, k_ref, v_ref, o_ref, m_sc, l_sc, acc_sc, *,
                  kv_tile, s_actual, s_pad):
    ki = pl.program_id(3)

    @pl.when(ki == 0)
    def _():
        m_sc[...] = jnp.full(m_sc.shape, _NEG_BIG, jnp.float32)
        l_sc[...] = jnp.zeros(l_sc.shape, jnp.float32)
        acc_sc[...] = jnp.zeros(acc_sc.shape, jnp.float32)

    q = q_ref[...]                           # (tq, hd) bf16; scale folded into Wq
    k = k_ref[...]                           # (tk, hd) bf16
    v = v_ref[...]                           # (tk, hd) bf16
    s = lax.dot_general(q, k, (((1,), (1,)), ((), ())),
                        preferred_element_type=jnp.float32)          # (tq, tk)
    if s_pad != s_actual:                    # static branch: mask padded KV cols
        col = ki * kv_tile + lax.broadcasted_iota(jnp.int32, s.shape, 1)
        s = jnp.where(col < s_actual, s, _NEG_BIG)

    m_prev = m_sc[...]
    m_new = jnp.maximum(m_prev, jnp.max(s, axis=-1, keepdims=True))
    alpha = jnp.exp(m_prev - m_new)
    p = jnp.exp(s - m_new)
    l_sc[...] = alpha * l_sc[...] + jnp.sum(p, axis=-1, keepdims=True)
    acc_sc[...] = alpha * acc_sc[...] + jnp.dot(
        p.astype(jnp.bfloat16), v, preferred_element_type=jnp.float32)
    m_sc[...] = m_new

    @pl.when(ki == pl.num_programs(3) - 1)
    def _():
        # normalize the output, not the probabilities; approx recip -> EUP slot
        o_ref[...] = (acc_sc[...] * pl.reciprocal(l_sc[...], approx=True)
                      ).astype(o_ref.dtype)


def flash_attention(q, k, v, *, s_actual, q_tile, kv_tile):
    """q/k/v: (B, H, S_pad, hd) bf16, 1/sqrt(hd) already folded into q."""
    b, h, s_pad, hd = q.shape
    nq, nk = s_pad // q_tile, s_pad // kv_tile
    kern = functools.partial(_flash_kernel, kv_tile=kv_tile,
                             s_actual=s_actual, s_pad=s_pad)
    return pl.pallas_call(
        kern,
        out_shape=jax.ShapeDtypeStruct((b, h, s_pad, hd), jnp.bfloat16),
        grid=(b, h, nq, nk),
        in_specs=[
            pl.BlockSpec((None, None, q_tile, hd),
                         lambda bi, hi, qi, ki: (bi, hi, qi, 0)),
            pl.BlockSpec((None, None, kv_tile, hd),
                         lambda bi, hi, qi, ki: (bi, hi, ki, 0)),
            pl.BlockSpec((None, None, kv_tile, hd),
                         lambda bi, hi, qi, ki: (bi, hi, ki, 0)),
        ],
        out_specs=pl.BlockSpec((None, None, q_tile, hd),
                               lambda bi, hi, qi, ki: (bi, hi, qi, 0)),
        scratch_shapes=[pltpu.VMEM((q_tile, 1), jnp.float32),
                        pltpu.VMEM((q_tile, 1), jnp.float32),
                        pltpu.VMEM((q_tile, hd), jnp.float32)],
        compiler_params=_cparams(("parallel", "parallel", "parallel", "arbitrary")),
    )(q, k, v)


# ----------------------------------------------------------------------------
# Kernel 3: out-proj + residual + LayerNorm (row-tiled)
# ----------------------------------------------------------------------------
def _proj_add_ln_kernel(attn_ref, h_ref, w_ref, b_ref, g_ref, beta_ref, o_ref):
    y = jnp.dot(attn_ref[...], w_ref[...],
                preferred_element_type=jnp.float32) + b_ref[...]
    x = h_ref[...].astype(jnp.float32) + y          # residual (dropout = identity)
    mean = jnp.mean(x, axis=-1, keepdims=True)
    xc = x - mean
    var = jnp.mean(xc * xc, axis=-1, keepdims=True)
    o_ref[...] = ((xc * lax.rsqrt(var + LN_EPS)) * g_ref[...]
                  + beta_ref[...]).astype(o_ref.dtype)


def proj_add_ln(attn2d, h2d, w, b, g, beta):
    n, e = h2d.shape
    tn = _row_tile(n)
    return pl.pallas_call(
        _proj_add_ln_kernel,
        out_shape=jax.ShapeDtypeStruct((n, e), jnp.bfloat16),
        grid=(n // tn,),
        in_specs=[
            pl.BlockSpec((tn, e), lambda i: (i, 0)),
            pl.BlockSpec((tn, e), lambda i: (i, 0)),
            _const_spec((e, e)),
            _const_spec((1, e)),
            _const_spec((1, e)),
            _const_spec((1, e)),
        ],
        out_specs=pl.BlockSpec((tn, e), lambda i: (i, 0)),
        compiler_params=_cparams(("parallel",)),
    )(attn2d, h2d, w, b, g, beta)


# ----------------------------------------------------------------------------
# Kernel 4: FFN (W1 -> ReLU -> W2) + residual + LayerNorm (row-tiled)
# ----------------------------------------------------------------------------
def _ffn_ln_kernel(h_ref, w1_ref, b1_ref, w2_ref, b2_ref, g_ref, beta_ref, o_ref):
    h = h_ref[...]                                           # (tn, E) bf16 residual
    ff = jnp.dot(h, w1_ref[...], preferred_element_type=jnp.float32) + b1_ref[...]
    ff = jnp.maximum(ff, 0.0)                                # ReLU in f32
    y = jnp.dot(ff.astype(jnp.bfloat16), w2_ref[...],
                preferred_element_type=jnp.float32) + b2_ref[...]
    x = h.astype(jnp.float32) + y                            # residual
    mean = jnp.mean(x, axis=-1, keepdims=True)
    xc = x - mean
    var = jnp.mean(xc * xc, axis=-1, keepdims=True)
    o_ref[...] = ((xc * lax.rsqrt(var + LN_EPS)) * g_ref[...]
                  + beta_ref[...]).astype(o_ref.dtype)


def ffn_ln(h2d, layer):
    n, e = h2d.shape
    f = layer["ff1_w"].shape[1]
    tn = _row_tile(n)                       # (tn, F) f32 intermediate stays in VMEM
    return pl.pallas_call(
        _ffn_ln_kernel,
        out_shape=jax.ShapeDtypeStruct((n, e), jnp.bfloat16),
        grid=(n // tn,),
        in_specs=[
            pl.BlockSpec((tn, e), lambda i: (i, 0)),
            _const_spec((e, f)),
            _const_spec((1, f)),
            _const_spec((f, e)),
            _const_spec((1, e)),
            _const_spec((1, e)),
            _const_spec((1, e)),
        ],
        out_specs=pl.BlockSpec((tn, e), lambda i: (i, 0)),
        compiler_params=_cparams(("parallel",)),
    )(h2d, layer["ff1_w"], layer["ff1_b"], layer["ff2_w"], layer["ff2_b"],
      layer["ln2_g"], layer["ln2_b"])


# ----------------------------------------------------------------------------
# Parameters (matmul weights bf16, biases/LN params f32)
# ----------------------------------------------------------------------------
def _init_linear(key, din, dout):
    kw, kb = jax.random.split(key)
    w = jax.random.normal(kw, (din, dout), jnp.float32) * (1.0 / math.sqrt(din))
    b = jax.random.normal(kb, (dout,), jnp.float32) * 0.01
    return w.astype(jnp.bfloat16), b.reshape(1, dout)


def init_params(key, input_dim, output_dim, embed_dim, num_heads, num_layers,
                dim_feedforward=2048):
    assert embed_dim % num_heads == 0
    keys = jax.random.split(key, 3 + num_layers)
    emb_w, emb_b = _init_linear(keys[0], input_dim, embed_dim)
    # positional_encoding is nn.Parameter(zeros(1,1,E)); initialized small-random
    # here to exercise the add, and folded into the embedding bias (exactly
    # equivalent to the (1,1,E) broadcast add).
    pos = jax.random.normal(keys[1], (1, embed_dim), jnp.float32) * 0.01
    fc_w, fc_b = _init_linear(keys[2], embed_dim, output_dim)

    layers = []
    for li in range(num_layers):
        lk = jax.random.split(keys[3 + li], 4)
        in_w, in_b = _init_linear(lk[0], embed_dim, 3 * embed_dim)
        out_w, out_b = _init_linear(lk[1], embed_dim, embed_dim)
        ff1_w, ff1_b = _init_linear(lk[2], embed_dim, dim_feedforward)
        ff2_w, ff2_b = _init_linear(lk[3], dim_feedforward, embed_dim)
        layers.append(dict(
            in_proj_w=in_w, in_proj_b=in_b,
            out_proj_w=out_w, out_proj_b=out_b,
            ff1_w=ff1_w, ff1_b=ff1_b, ff2_w=ff2_w, ff2_b=ff2_b,
            ln1_g=jnp.ones((1, embed_dim), jnp.float32),
            ln1_b=jnp.zeros((1, embed_dim), jnp.float32),
            ln2_g=jnp.ones((1, embed_dim), jnp.float32),
            ln2_b=jnp.zeros((1, embed_dim), jnp.float32),
        ))
    return dict(emb_w=emb_w, emb_b=emb_b + pos, fc_w=fc_w, fc_b=fc_b, layers=layers)


# ----------------------------------------------------------------------------
# Forward pass
# ----------------------------------------------------------------------------
def transformer_encoder_forward(x, params, num_heads):
    """x: (S, B, input_dim) -> (S, B, output_dim)  (PyTorch batch_first=False)."""
    s_len, bsz, _ = x.shape
    e = params["emb_w"].shape[1]
    hd = e // num_heads
    scale = 1.0 / math.sqrt(hd)
    q_tile, kv_tile, s_pad = _seq_tiles(s_len)
    n_pad = bsz * s_pad

    # batch-first internally; pad the sequence ONCE (padded rows stay through
    # all layers, are masked as KV inside attention, and are sliced off at the
    # very end — no per-kernel pad/slice HBM passes).
    xb = jnp.transpose(x, (1, 0, 2))                         # (B, S, Din)
    if s_pad != s_len:
        xb = jnp.pad(xb, ((0, 0), (0, s_pad - s_len), (0, 0)))
    xb = xb.reshape(n_pad, -1)

    # embedding + positional encoding (pos folded into bias); bf16 activations
    h2d = linear_rows(xb, params["emb_w"], params["emb_b"], out_dtype=jnp.bfloat16)

    for layer in params["layers"]:
        # fold the 1/sqrt(hd) score scale into the Q columns of in_proj
        w_in, b_in = layer["in_proj_w"], layer["in_proj_b"]
        w_in = jnp.concatenate(
            [(w_in[:, :e].astype(jnp.float32) * scale).astype(jnp.bfloat16),
             w_in[:, e:]], axis=1)
        b_in = jnp.concatenate([b_in[:, :e] * scale, b_in[:, e:]], axis=1)

        # QKV projection (row-tiled linear, bf16 out), head split done in HBM
        qkv = linear_rows(h2d, w_in, b_in, out_dtype=jnp.bfloat16)   # (N, 3E)
        qkv = qkv.reshape(bsz, s_pad, 3, num_heads, hd)
        q = jnp.transpose(qkv[:, :, 0], (0, 2, 1, 3))                # (B,H,S,hd)
        k = jnp.transpose(qkv[:, :, 1], (0, 2, 1, 3))
        v = jnp.transpose(qkv[:, :, 2], (0, 2, 1, 3))

        attn = flash_attention(q, k, v, s_actual=s_len,
                               q_tile=q_tile, kv_tile=kv_tile)       # (B,H,S,hd)
        attn2d = jnp.transpose(attn, (0, 2, 1, 3)).reshape(n_pad, e)

        h2d = proj_add_ln(attn2d, h2d, layer["out_proj_w"], layer["out_proj_b"],
                          layer["ln1_g"], layer["ln1_b"])
        h2d = ffn_ln(h2d, layer)

    # final fc with lane-dense (128-padded) output columns
    out = linear_rows(h2d, params["fc_w"], params["fc_b"],
                      out_dtype=jnp.float32, min_lanes=128)
    out_dim = params["fc_w"].shape[1]
    out = out[:, :out_dim].reshape(bsz, s_pad, out_dim)[:, :s_len]
    return jnp.transpose(out, (1, 0, 2))


# ----------------------------------------------------------------------------
# Pure-JAX f32 reference (loose numerical sanity check vs bf16 kernels)
# ----------------------------------------------------------------------------
def _ln_ref(x, g, b):
    mean = x.mean(-1, keepdims=True)
    xc = x - mean
    var = (xc * xc).mean(-1, keepdims=True)
    return xc / jnp.sqrt(var + LN_EPS) * g + b


def reference_forward(x, params, num_heads):
    s_len, bsz, _ = x.shape
    e = params["emb_w"].shape[1]
    hd = e // num_heads

    def lin(t, w, b):
        return t @ w.astype(jnp.float32) + b

    h = lin(x.reshape(s_len * bsz, -1), params["emb_w"], params["emb_b"])
    for layer in params["layers"]:
        qkv = lin(h, layer["in_proj_w"], layer["in_proj_b"])
        q, k, v = jnp.split(qkv, 3, axis=-1)

        def heads(t):
            return t.reshape(s_len, bsz, num_heads, hd).transpose(1, 2, 0, 3)

        sc = jnp.einsum("bhqd,bhkd->bhqk", heads(q), heads(k)) / math.sqrt(hd)
        p = jax.nn.softmax(sc, axis=-1)
        o = jnp.einsum("bhqk,bhkd->bhqd", p, heads(v))
        o = o.transpose(2, 0, 1, 3).reshape(s_len * bsz, e)
        attn = lin(o, layer["out_proj_w"], layer["out_proj_b"])
        h = _ln_ref(h + attn, layer["ln1_g"], layer["ln1_b"])
        ff = jax.nn.relu(lin(h, layer["ff1_w"], layer["ff1_b"]))
        ff = lin(ff, layer["ff2_w"], layer["ff2_b"])
        h = _ln_ref(h + ff, layer["ln2_g"], layer["ln2_b"])
    out = lin(h, params["fc_w"], params["fc_b"])
    return out.reshape(s_len, bsz, -1)


# ----------------------------------------------------------------------------
if __name__ == "__main__":
    input_dim, output_dim = 4, 4
    embed_dim, num_heads, num_layers = 32, 4, 2
    seq_len, batch = 8, 2

    key = jax.random.PRNGKey(0)
    kx, kp = jax.random.split(key)
    x = jax.random.normal(kx, (seq_len, batch, input_dim), jnp.float32)
    params = init_params(kp, input_dim, output_dim, embed_dim, num_heads, num_layers)

    fwd = jax.jit(lambda inp: transformer_encoder_forward(inp, params, num_heads))
    out = jax.block_until_ready(fwd(x))

    assert out.shape == (seq_len, batch, output_dim)
    assert bool(jnp.all(jnp.isfinite(out)))

    # loose tolerance: kernels use bf16 matmul operands, bf16 inter-kernel
    # activations, and an approx reciprocal in the softmax normalization
    ref = reference_forward(x, params, num_heads)
    assert float(jnp.max(jnp.abs(out - ref))) < 0.15

    print("KERNEL_OK")
</pallas_src>

<mosaic_0001>
module attributes {stable_mosaic.version = 11 : i64} {
  func.func @_linear_kernel(%arg0: i32, %arg1: memref<16x32xbf16, #tpu.memory_space<vmem>>, %arg2: memref<32x96xbf16, #tpu.memory_space<vmem>>, %arg3: memref<1x96xf32, #tpu.memory_space<vmem>>, %arg4: memref<16x96xbf16, #tpu.memory_space<vmem>>) attributes {dimension_semantics = [#tpu.dimension_semantics<parallel>], iteration_bounds = array<i64: 1>, scalar_prefetch = 0 : i64, scratch_operands = 0 : i64, tpu.core_type = #tpu.core_type<tc>, window_params = [{transform_indices = @transform_0, window_bounds = array<i64: 16, 32>}, {pipeline_mode = #tpu.pipeline_mode<synchronous>, transform_indices = @transform_1, window_bounds = array<i64: 32, 96>}, {pipeline_mode = #tpu.pipeline_mode<synchronous>, transform_indices = @transform_2, window_bounds = array<i64: 1, 96>}, {transform_indices = @transform_3, window_bounds = array<i64: 16, 96>}]} {
    %c0 = arith.constant 0 : index
    %c0_0 = arith.constant 0 : index
    %0 = vector.load %arg1[%c0, %c0_0] : memref<16x32xbf16, #tpu.memory_space<vmem>>, vector<16x32xbf16>
    %c0_1 = arith.constant 0 : index
    %c0_2 = arith.constant 0 : index
    %1 = vector.load %arg2[%c0_1, %c0_2] : memref<32x96xbf16, #tpu.memory_space<vmem>>, vector<32x96xbf16>
    %cst = arith.constant dense<0.000000e+00> : vector<16x96xf32>
    %2 = tpu.matmul %0, %1, %cst {dimension_numbers = #tpu.dot_dimension_numbers<[1], [0], [0], [1], [0, 0, 1, 1], [], []>} : vector<16x32xbf16>, vector<32x96xbf16>, vector<16x96xf32> -> vector<16x96xf32>
    %c0_3 = arith.constant 0 : index
    %c0_4 = arith.constant 0 : index
    %3 = vector.load %arg3[%c0_3, %c0_4] : memref<1x96xf32, #tpu.memory_space<vmem>>, vector<1x96xf32>
    %4 = vector.broadcast %3 : vector<1x96xf32> to vector<16x96xf32>
    %5 = arith.addf %2, %4 : vector<16x96xf32>
    %6 = arith.truncf %5 : vector<16x96xf32> to vector<16x96xbf16>
    %c0_5 = arith.constant 0 : index
    %c0_6 = arith.constant 0 : index
    %7 = vector.load %arg4[%c0_5, %c0_6] : memref<16x96xbf16, #tpu.memory_space<vmem>>, vector<16x96xbf16>
    tpu.vector_store %arg4[%c0_5, %c0_6], %6 {strides = array<i32>} : memref<16x96xbf16, #tpu.memory_space<vmem>>, vector<16x96xbf16>,
    return
  }
  func.func @transform_0(%arg0: i32) -> (i32, i32) {
    %c0_i32 = arith.constant 0 : i32
    %c0_i32_0 = arith.constant 0 : i32
    return %arg0, %c0_i32 : i32, i32
  }
  func.func @transform_1(%arg0: i32) -> (i32, i32) {
    %c0_i32 = arith.constant 0 : i32
    %c0_i32_0 = arith.constant 0 : i32
    %c0_i32_1 = arith.constant 0 : i32
    return %c0_i32, %c0_i32_0 : i32, i32
  }
  func.func @transform_2(%arg0: i32) -> (i32, i32) {
    %c0_i32 = arith.constant 0 : i32
    %c0_i32_0 = arith.constant 0 : i32
    %c0_i32_1 = arith.constant 0 : i32
    return %c0_i32, %c0_i32_0 : i32, i32
  }
  func.func @transform_3(%arg0: i32) -> (i32, i32) {
    %c0_i32 = arith.constant 0 : i32
    %c0_i32_0 = arith.constant 0 : i32
    return %arg0, %c0_i32 : i32, i32
  }
}

module attributes {stable_mosaic.version = 11 : i64} {
  func.func @_linear_kernel(%arg0: i32, %arg1: memref<16x4xf32, #tpu.memory_space<vmem>>, %arg2: memref<4x32xbf16, #tpu.memory_space<vmem>>, %arg3: memref<1x32xf32, #tpu.memory_space<vmem>>, %arg4: memref<16x32xbf16, #tpu.memory_space<vmem>>) attributes {dimension_semantics = [#tpu.dimension_semantics<parallel>], iteration_bounds = array<i64: 1>, scalar_prefetch = 0 : i64, scratch_operands = 0 : i64, tpu.core_type = #tpu.core_type<tc>, window_params = [{transform_indices = @transform_0, window_bounds = array<i64: 16, 4>}, {pipeline_mode = #tpu.pipeline_mode<synchronous>, transform_indices = @transform_1, window_bounds = array<i64: 4, 32>}, {pipeline_mode = #tpu.pipeline_mode<synchronous>, transform_indices = @transform_2, window_bounds = array<i64: 1, 32>}, {transform_indices = @transform_3, window_bounds = array<i64: 16, 32>}]} {
    %c0 = arith.constant 0 : index
    %c0_0 = arith.constant 0 : index
    %0 = vector.load %arg1[%c0, %c0_0] : memref<16x4xf32, #tpu.memory_space<vmem>>, vector<16x4xf32>
    %1 = arith.truncf %0 : vector<16x4xf32> to vector<16x4xbf16>
    %c0_1 = arith.constant 0 : index
    %c0_2 = arith.constant 0 : index
    %2 = vector.load %arg2[%c0_1, %c0_2] : memref<4x32xbf16, #tpu.memory_space<vmem>>, vector<4x32xbf16>
    %cst = arith.constant dense<0.000000e+00> : vector<16x32xf32>
    %3 = tpu.matmul %1, %2, %cst {dimension_numbers = #tpu.dot_dimension_numbers<[1], [0], [0], [1], [0, 0, 1, 1], [], []>} : vector<16x4xbf16>, vector<4x32xbf16>, vector<16x32xf32> -> vector<16x32xf32>
    %c0_3 = arith.constant 0 : index
    %c0_4 = arith.constant 0 : index
    %4 = vector.load %arg3[%c0_3, %c0_4] : memref<1x32xf32, #tpu.memory_space<vmem>>, vector<1x32xf32>
    %5 = vector.broadcast %4 : vector<1x32xf32> to vector<16x32xf32>
    %6 = arith.addf %3, %5 : vector<16x32xf32>
    %7 = arith.truncf %6 : vector<16x32xf32> to vector<16x32xbf16>
    %c0_5 = arith.constant 0 : index
    %c0_6 = arith.constant 0 : index
    %8 = vector.load %arg4[%c0_5, %c0_6] : memref<16x32xbf16, #tpu.memory_space<vmem>>, vector<16x32xbf16>
    tpu.vector_store %arg4[%c0_5, %c0_6], %7 {strides = array<i32>} : memref<16x32xbf16, #tpu.memory_space<vmem>>, vector<16x32xbf16>,
    return
  }
  func.func @transform_0(%arg0: i32) -> (i32, i32) {
    %c0_i32 = arith.constant 0 : i32
    %c0_i32_0 = arith.constant 0 : i32
    return %arg0, %c0_i32 : i32, i32
  }
  func.func @transform_1(%arg0: i32) -> (i32, i32) {
    %c0_i32 = arith.constant 0 : i32
    %c0_i32_0 = arith.constant 0 : i32
    %c0_i32_1 = arith.constant 0 : i32
    return %c0_i32, %c0_i32_0 : i32, i32
  }
  func.func @transform_2(%arg0: i32) -> (i32, i32) {
    %c0_i32 = arith.constant 0 : i32
    %c0_i32_0 = arith.constant 0 : i32
    %c0_i32_1 = arith.constant 0 : i32
    return %c0_i32, %c0_i32_0 : i32, i32
  }
  func.func @transform_3(%arg0: i32) -> (i32, i32) {
    %c0_i32 = arith.constant 0 : i32
    %c0_i32_0 = arith.constant 0 : i32
    return %arg0, %c0_i32 : i32, i32
  }
}

module attributes {stable_mosaic.version = 11 : i64} {
  func.func @_flash_kernel(%arg0: i32, %arg1: i32, %arg2: i32, %arg3: i32, %arg4: memref<1x1x8x8xbf16, #tpu.memory_space<vmem>>, %arg5: memref<1x1x8x8xbf16, #tpu.memory_space<vmem>>, %arg6: memref<1x1x8x8xbf16, #tpu.memory_space<vmem>>, %arg7: memref<1x1x8x8xbf16, #tpu.memory_space<vmem>>, %arg8: memref<8x1xf32, #tpu.memory_space<vmem>>, %arg9: memref<8x1xf32, #tpu.memory_space<vmem>>, %arg10: memref<8x8xf32, #tpu.memory_space<vmem>>) attributes {dimension_semantics = [#tpu.dimension_semantics<parallel>, #tpu.dimension_semantics<parallel>, #tpu.dimension_semantics<parallel>, #tpu.dimension_semantics<arbitrary>], iteration_bounds = array<i64: 2, 4, 1, 1>, scalar_prefetch = 0 : i64, scratch_operands = 3 : i64, tpu.core_type = #tpu.core_type<tc>, window_params = [{transform_indices = @transform_0, window_bounds = array<i64: 1, 1, 8, 8>}, {transform_indices = @transform_1, window_bounds = array<i64: 1, 1, 8, 8>}, {transform_indices = @transform_2, window_bounds = array<i64: 1, 1, 8, 8>}, {transform_indices = @transform_3, window_bounds = array<i64: 1, 1, 8, 8>}]} {
    %c0_i32 = arith.constant 0 : i32
    %0 = arith.cmpi eq, %arg3, %c0_i32 : i32
    %1 = arith.extui %0 : i1 to i32
    %c0_i32_0 = arith.constant 0 : i32
    %2 = arith.cmpi ne, %1, %c0_i32_0 : i32
    scf.if %2 {
      %cst_29 = arith.constant -1.000000e+30 : f32
      %36 = vector.broadcast %cst_29 : f32 to vector<8x1xf32>
      %c0_30 = arith.constant 0 : index
      %c0_31 = arith.constant 0 : index
      %37 = vector.load %arg8[%c0_30, %c0_31] : memref<8x1xf32, #tpu.memory_space<vmem>>, vector<8x1xf32>
      tpu.vector_store %arg8[%c0_30, %c0_31], %36 {strides = array<i32>} : memref<8x1xf32, #tpu.memory_space<vmem>>, vector<8x1xf32>,
      %cst_32 = arith.constant 0.000000e+00 : f32
      %38 = vector.broadcast %cst_32 : f32 to vector<8x1xf32>
      %c0_33 = arith.constant 0 : index
      %c0_34 = arith.constant 0 : index
      %39 = vector.load %arg9[%c0_33, %c0_34] : memref<8x1xf32, #tpu.memory_space<vmem>>, vector<8x1xf32>
      tpu.vector_store %arg9[%c0_33, %c0_34], %38 {strides = array<i32>} : memref<8x1xf32, #tpu.memory_space<vmem>>, vector<8x1xf32>,
      %cst_35 = arith.constant 0.000000e+00 : f32
      %40 = vector.broadcast %cst_35 : f32 to vector<8x8xf32>
      %c0_36 = arith.constant 0 : index
      %c0_37 = arith.constant 0 : index
      %41 = vector.load %arg10[%c0_36, %c0_37] : memref<8x8xf32, #tpu.memory_space<vmem>>, vector<8x8xf32>
      tpu.vector_store %arg10[%c0_36, %c0_37], %40 {strides = array<i32>} : memref<8x8xf32, #tpu.memory_space<vmem>>, vector<8x8xf32>,
    } else {
    }
    %c0 = arith.constant 0 : index
    %c0_1 = arith.constant 0 : index
    %c0_2 = arith.constant 0 : index
    %c0_3 = arith.constant 0 : index
    %3 = vector.load %arg4[%c0, %c0_1, %c0_2, %c0_3] : memref<1x1x8x8xbf16, #tpu.memory_space<vmem>>, vector<1x1x8x8xbf16>
    %4 = vector.shape_cast %3 : vector<1x1x8x8xbf16> to vector<8x8xbf16>
    %c0_4 = arith.constant 0 : index
    %c0_5 = arith.constant 0 : index
    %c0_6 = arith.constant 0 : index
    %c0_7 = arith.constant 0 : index
    %5 = vector.load %arg5[%c0_4, %c0_5, %c0_6, %c0_7] : memref<1x1x8x8xbf16, #tpu.memory_space<vmem>>, vector<1x1x8x8xbf16>
    %6 = vector.shape_cast %5 : vector<1x1x8x8xbf16> to vector<8x8xbf16>
    %c0_8 = arith.constant 0 : index
    %c0_9 = arith.constant 0 : index
    %c0_10 = arith.constant 0 : index
    %c0_11 = arith.constant 0 : index
    %7 = vector.load %arg6[%c0_8, %c0_9, %c0_10, %c0_11] : memref<1x1x8x8xbf16, #tpu.memory_space<vmem>>, vector<1x1x8x8xbf16>
    %8 = vector.shape_cast %7 : vector<1x1x8x8xbf16> to vector<8x8xbf16>
    %cst = arith.constant dense<0.000000e+00> : vector<8x8xf32>
    %9 = tpu.matmul %4, %6, %cst {dimension_numbers = #tpu.dot_dimension_numbers<[1], [1], [0], [0], [0, 0, 1, 0], [], []>} : vector<8x8xbf16>, vector<8x8xbf16>, vector<8x8xf32> -> vector<8x8xf32>
    %c0_12 = arith.constant 0 : index
    %c0_13 = arith.constant 0 : index
    %10 = vector.load %arg8[%c0_12, %c0_13] : memref<8x1xf32, #tpu.memory_space<vmem>>, vector<8x1xf32>
    %cst_14 = arith.constant dense<0xFF800000> : vector<8xf32>
    %11 = vector.multi_reduction <maximumf>, %9, %cst_14 [1] : vector<8x8xf32> to vector<8xf32>
    %12 = vector.shape_cast %11 : vector<8xf32> to vector<8x1xf32>
    %13 = arith.maximumf %10, %12 : vector<8x1xf32>
    %14 = arith.subf %10, %13 : vector<8x1xf32>
    %15 = math.exp %14 : vector<8x1xf32>
    %16 = vector.broadcast %13 : vector<8x1xf32> to vector<8x8xf32>
    %17 = arith.subf %9, %16 : vector<8x8xf32>
    %18 = math.exp %17 : vector<8x8xf32>
    %c0_15 = arith.constant 0 : index
    %c0_16 = arith.constant 0 : index
    %19 = vector.load %arg9[%c0_15, %c0_16] : memref<8x1xf32, #tpu.memory_space<vmem>>, vector<8x1xf32>
    %20 = arith.mulf %15, %19 : vector<8x1xf32>
    %cst_17 = arith.constant dense<0.000000e+00> : vector<8xf32>
    %21 = vector.multi_reduction <add>, %18, %cst_17 [1] : vector<8x8xf32> to vector<8xf32>
    %22 = vector.shape_cast %21 : vector<8xf32> to vector<8x1xf32>
    %23 = arith.addf %20, %22 : vector<8x1xf32>
    %c0_18 = arith.constant 0 : index
    %c0_19 = arith.constant 0 : index
    %24 = vector.load %arg9[%c0_18, %c0_19] : memref<8x1xf32, #tpu.memory_space<vmem>>, vector<8x1xf32>
    tpu.vector_store %arg9[%c0_18, %c0_19], %23 {strides = array<i32>} : memref<8x1xf32, #tpu.memory_space<vmem>>, vector<8x1xf32>,
    %c0_20 = arith.constant 0 : index
    %c0_21 = arith.constant 0 : index
    %25 = vector.load %arg10[%c0_20, %c0_21] : memref<8x8xf32, #tpu.memory_space<vmem>>, vector<8x8xf32>
    %26 = vector.broadcast %15 : vector<8x1xf32> to vector<8x8xf32>
    %27 = arith.mulf %26, %25 : vector<8x8xf32>
    %28 = arith.truncf %18 : vector<8x8xf32> to vector<8x8xbf16>
    %cst_22 = arith.constant dense<0.000000e+00> : vector<8x8xf32>
    %29 = tpu.matmul %28, %8, %cst_22 {dimension_numbers = #tpu.dot_dimension_numbers<[1], [0], [0], [1], [0, 0, 1, 1], [], []>} : vector<8x8xbf16>, vector<8x8xbf16>, vector<8x8xf32> -> vector<8x8xf32>
    %30 = arith.addf %27, %29 : vector<8x8xf32>
    %c0_23 = arith.constant 0 : index
    %c0_24 = arith.constant 0 : index
    %31 = vector.load %arg10[%c0_23, %c0_24] : memref<8x8xf32, #tpu.memory_space<vmem>>, vector<8x8xf32>
    tpu.vector_store %arg10[%c0_23, %c0_24], %30 {strides = array<i32>} : memref<8x8xf32, #tpu.memory_space<vmem>>, vector<8x8xf32>,
    %c0_25 = arith.constant 0 : index
    %c0_26 = arith.constant 0 : index
    %32 = vector.load %arg8[%c0_25, %c0_26] : memref<8x1xf32, #tpu.memory_space<vmem>>, vector<8x1xf32>
    tpu.vector_store %arg8[%c0_25, %c0_26], %13 {strides = array<i32>} : memref<8x1xf32, #tpu.memory_space<vmem>>, vector<8x1xf32>,
    %c0_i32_27 = arith.constant 0 : i32
    %33 = arith.cmpi eq, %arg3, %c0_i32_27 : i32
    %34 = arith.extui %33 : i1 to i32
    %c0_i32_28 = arith.constant 0 : i32
    %35 = arith.cmpi ne, %34, %c0_i32_28 : i32
    scf.if %35 {
      %c0_29 = arith.constant 0 : index
      %c0_30 = arith.constant 0 : index
      %36 = vector.load %arg10[%c0_29, %c0_30] : memref<8x8xf32, #tpu.memory_space<vmem>>, vector<8x8xf32>
      %c0_31 = arith.constant 0 : index
      %c0_32 = arith.constant 0 : index
      %37 = vector.load %arg9[%c0_31, %c0_32] : memref<8x1xf32, #tpu.memory_space<vmem>>, vector<8x1xf32>
      %38 = tpu.reciprocal %37 {approx = true} : vector<8x1xf32> -> vector<8x1xf32>
      %39 = vector.broadcast %38 : vector<8x1xf32> to vector<8x8xf32>
      %40 = arith.mulf %36, %39 : vector<8x8xf32>
      %41 = arith.truncf %40 : vector<8x8xf32> to vector<8x8xbf16>
      %c0_33 = arith.constant 0 : index
      %c0_34 = arith.constant 0 : index
      %c0_35 = arith.constant 0 : index
      %c0_36 = arith.constant 0 : index
      %42 = vector.load %arg7[%c0_33, %c0_34, %c0_35, %c0_36] : memref<1x1x8x8xbf16, #tpu.memory_space<vmem>>, vector<1x1x8x8xbf16>
      %43 = vector.shape_cast %42 : vector<1x1x8x8xbf16> to vector<8x8xbf16>
      %44 = vector.shape_cast %41 : vector<8x8xbf16> to vector<1x1x8x8xbf16>
      tpu.vector_store %arg7[%c0_33, %c0_34, %c0_35, %c0_36], %44 {strides = array<i32>} : memref<1x1x8x8xbf16, #tpu.memory_space<vmem>>, vector<1x1x8x8xbf16>,
    } else {
    }
    return
  }
  func.func @transform_0(%arg0: i32, %arg1: i32, %arg2: i32, %arg3: i32) -> (i32, i32, i32, i32) {
    %c0_i32 = arith.constant 0 : i32
    %c0_i32_0 = arith.constant 0 : i32
    return %arg0, %arg1, %arg2, %c0_i32 : i32, i32, i32, i32
  }
  func.func @transform_1(%arg0: i32, %arg1: i32, %arg2: i32, %arg3: i32) -> (i32, i32, i32, i32) {
    %c0_i32 = arith.constant 0 : i32
    %c0_i32_0 = arith.constant 0 : i32
    return %arg0, %arg1, %arg3, %c0_i32 : i32, i32, i32, i32
  }
  func.func @transform_2(%arg0: i32, %arg1: i32, %arg2: i32, %arg3: i32) -> (i32, i32, i32, i32) {
    %c0_i32 = arith.constant 0 : i32
    %c0_i32_0 = arith.constant 0 : i32
    return %arg0, %arg1, %arg3, %c0_i32 : i32, i32, i32, i32
  }
  func.func @transform_3(%arg0: i32, %arg1: i32, %arg2: i32, %arg3: i32) -> (i32, i32, i32, i32) {
    %c0_i32 = arith.constant 0 : i32
    %c0_i32_0 = arith.constant 0 : i32
    return %arg0, %arg1, %arg2, %c0_i32 : i32, i32, i32, i32
  }
}

module attributes {stable_mosaic.version = 11 : i64} {
  func.func @_proj_add_ln_kernel(%arg0: i32, %arg1: memref<16x32xbf16, #tpu.memory_space<vmem>>, %arg2: memref<16x32xbf16, #tpu.memory_space<vmem>>, %arg3: memref<32x32xbf16, #tpu.memory_space<vmem>>, %arg4: memref<1x32xf32, #tpu.memory_space<vmem>>, %arg5: memref<1x32xf32, #tpu.memory_space<vmem>>, %arg6: memref<1x32xf32, #tpu.memory_space<vmem>>, %arg7: memref<16x32xbf16, #tpu.memory_space<vmem>>) attributes {dimension_semantics = [#tpu.dimension_semantics<parallel>], iteration_bounds = array<i64: 1>, scalar_prefetch = 0 : i64, scratch_operands = 0 : i64, tpu.core_type = #tpu.core_type<tc>, window_params = [{transform_indices = @transform_0, window_bounds = array<i64: 16, 32>}, {transform_indices = @transform_1, window_bounds = array<i64: 16, 32>}, {pipeline_mode = #tpu.pipeline_mode<synchronous>, transform_indices = @transform_2, window_bounds = array<i64: 32, 32>}, {pipeline_mode = #tpu.pipeline_mode<synchronous>, transform_indices = @transform_3, window_bounds = array<i64: 1, 32>}, {pipeline_mode = #tpu.pipeline_mode<synchronous>, transform_indices = @transform_4, window_bounds = array<i64: 1, 32>}, {pipeline_mode = #tpu.pipeline_mode<synchronous>, transform_indices = @transform_5, window_bounds = array<i64: 1, 32>}, {transform_indices = @transform_6, window_bounds = array<i64: 16, 32>}]} {
    %c0 = arith.constant 0 : index
    %c0_0 = arith.constant 0 : index
    %0 = vector.load %arg1[%c0, %c0_0] : memref<16x32xbf16, #tpu.memory_space<vmem>>, vector<16x32xbf16>
    %c0_1 = arith.constant 0 : index
    %c0_2 = arith.constant 0 : index
    %1 = vector.load %arg3[%c0_1, %c0_2] : memref<32x32xbf16, #tpu.memory_space<vmem>>, vector<32x32xbf16>
    %cst = arith.constant dense<0.000000e+00> : vector<16x32xf32>
    %2 = tpu.matmul %0, %1, %cst {dimension_numbers = #tpu.dot_dimension_numbers<[1], [0], [0], [1], [0, 0, 1, 1], [], []>} : vector<16x32xbf16>, vector<32x32xbf16>, vector<16x32xf32> -> vector<16x32xf32>
    %c0_3 = arith.constant 0 : index
    %c0_4 = arith.constant 0 : index
    %3 = vector.load %arg4[%c0_3, %c0_4] : memref<1x32xf32, #tpu.memory_space<vmem>>, vector<1x32xf32>
    %4 = vector.broadcast %3 : vector<1x32xf32> to vector<16x32xf32>
    %5 = arith.addf %2, %4 : vector<16x32xf32>
    %c0_5 = arith.constant 0 : index
    %c0_6 = arith.constant 0 : index
    %6 = vector.load %arg2[%c0_5, %c0_6] : memref<16x32xbf16, #tpu.memory_space<vmem>>, vector<16x32xbf16>
    %7 = arith.extf %6 : vector<16x32xbf16> to vector<16x32xf32>
    %8 = arith.addf %7, %5 : vector<16x32xf32>
    %cst_7 = arith.constant dense<0.000000e+00> : vector<16xf32>
    %9 = vector.multi_reduction <add>, %8, %cst_7 [1] : vector<16x32xf32> to vector<16xf32>
    %10 = vector.shape_cast %9 : vector<16xf32> to vector<16x1xf32>
    %cst_8 = arith.constant 3.200000e+01 : f32
    %11 = vector.broadcast %cst_8 : f32 to vector<16x1xf32>
    %12 = arith.divf %10, %11 : vector<16x1xf32>
    %13 = vector.broadcast %12 : vector<16x1xf32> to vector<16x32xf32>
    %14 = arith.subf %8, %13 : vector<16x32xf32>
    %15 = arith.mulf %14, %14 : vector<16x32xf32>
    %cst_9 = arith.constant dense<0.000000e+00> : vector<16xf32>
    %16 = vector.multi_reduction <add>, %15, %cst_9 [1] : vector<16x32xf32> to vector<16xf32>
    %17 = vector.shape_cast %16 : vector<16xf32> to vector<16x1xf32>
    %cst_10 = arith.constant 3.200000e+01 : f32
    %18 = vector.broadcast %cst_10 : f32 to vector<16x1xf32>
    %19 = arith.divf %17, %18 : vector<16x1xf32>
    %cst_11 = arith.constant 9.99999974E-6 : f32
    %20 = vector.broadcast %cst_11 : f32 to vector<16x1xf32>
    %21 = arith.addf %19, %20 : vector<16x1xf32>
    %22 = math.rsqrt %21 : vector<16x1xf32>
    %23 = vector.broadcast %22 : vector<16x1xf32> to vector<16x32xf32>
    %24 = arith.mulf %14, %23 : vector<16x32xf32>
    %c0_12 = arith.constant 0 : index
    %c0_13 = arith.constant 0 : index
    %25 = vector.load %arg5[%c0_12, %c0_13] : memref<1x32xf32, #tpu.memory_space<vmem>>, vector<1x32xf32>
    %26 = vector.broadcast %25 : vector<1x32xf32> to vector<16x32xf32>
    %27 = arith.mulf %24, %26 : vector<16x32xf32>
    %c0_14 = arith.constant 0 : index
    %c0_15 = arith.constant 0 : index
    %28 = vector.load %arg6[%c0_14, %c0_15] : memref<1x32xf32, #tpu.memory_space<vmem>>, vector<1x32xf32>
    %29 = vector.broadcast %28 : vector<1x32xf32> to vector<16x32xf32>
    %30 = arith.addf %27, %29 : vector<16x32xf32>
    %31 = arith.truncf %30 : vector<16x32xf32> to vector<16x32xbf16>
    %c0_16 = arith.constant 0 : index
    %c0_17 = arith.constant 0 : index
    %32 = vector.load %arg7[%c0_16, %c0_17] : memref<16x32xbf16, #tpu.memory_space<vmem>>, vector<16x32xbf16>
    tpu.vector_store %arg7[%c0_16, %c0_17], %31 {strides = array<i32>} : memref<16x32xbf16, #tpu.memory_space<vmem>>, vector<16x32xbf16>,
    return
  }
  func.func @transform_0(%arg0: i32) -> (i32, i32) {
    %c0_i32 = arith.constant 0 : i32
    %c0_i32_0 = arith.constant 0 : i32
    return %arg0, %c0_i32 : i32, i32
  }
  func.func @transform_1(%arg0: i32) -> (i32, i32) {
    %c0_i32 = arith.constant 0 : i32
    %c0_i32_0 = arith.constant 0 : i32
    return %arg0, %c0_i32 : i32, i32
  }
  func.func @transform_2(%arg0: i32) -> (i32, i32) {
    %c0_i32 = arith.constant 0 : i32
    %c0_i32_0 = arith.constant 0 : i32
    %c0_i32_1 = arith.constant 0 : i32
    return %c0_i32, %c0_i32_0 : i32, i32
  }
  func.func @transform_3(%arg0: i32) -> (i32, i32) {
    %c0_i32 = arith.constant 0 : i32
    %c0_i32_0 = arith.constant 0 : i32
    %c0_i32_1 = arith.constant 0 : i32
    return %c0_i32, %c0_i32_0 : i32, i32
  }
  func.func @transform_4(%arg0: i32) -> (i32, i32) {
    %c0_i32 = arith.constant 0 : i32
    %c0_i32_0 = arith.constant 0 : i32
    %c0_i32_1 = arith.constant 0 : i32
    return %c0_i32, %c0_i32_0 : i32, i32
  }
  func.func @transform_5(%arg0: i32) -> (i32, i32) {
    %c0_i32 = arith.constant 0 : i32
    %c0_i32_0 = arith.constant 0 : i32
    %c0_i32_1 = arith.constant 0 : i32
    return %c0_i32, %c0_i32_0 : i32, i32
  }
  func.func @transform_6(%arg0: i32) -> (i32, i32) {
    %c0_i32 = arith.constant 0 : i32
    %c0_i32_0 = arith.constant 0 : i32
    return %arg0, %c0_i32 : i32, i32
  }
}

module attributes {stable_mosaic.version = 11 : i64} {
  func.func @_ffn_ln_kernel(%arg0: i32, %arg1: memref<16x32xbf16, #tpu.memory_space<vmem>>, %arg2: memref<32x2048xbf16, #tpu.memory_space<vmem>>, %arg3: memref<1x2048xf32, #tpu.memory_space<vmem>>, %arg4: memref<2048x32xbf16, #tpu.memory_space<vmem>>, %arg5: memref<1x32xf32, #tpu.memory_space<vmem>>, %arg6: memref<1x32xf32, #tpu.memory_space<vmem>>, %arg7: memref<1x32xf32, #tpu.memory_space<vmem>>, %arg8: memref<16x32xbf16, #tpu.memory_space<vmem>>) attributes {dimension_semantics = [#tpu.dimension_semantics<parallel>], iteration_bounds = array<i64: 1>, scalar_prefetch = 0 : i64, scratch_operands = 0 : i64, tpu.core_type = #tpu.core_type<tc>, window_params = [{transform_indices = @transform_0, window_bounds = array<i64: 16, 32>}, {pipeline_mode = #tpu.pipeline_mode<synchronous>, transform_indices = @transform_1, window_bounds = array<i64: 32, 2048>}, {pipeline_mode = #tpu.pipeline_mode<synchronous>, transform_indices = @transform_2, window_bounds = array<i64: 1, 2048>}, {pipeline_mode = #tpu.pipeline_mode<synchronous>, transform_indices = @transform_3, window_bounds = array<i64: 2048, 32>}, {pipeline_mode = #tpu.pipeline_mode<synchronous>, transform_indices = @transform_4, window_bounds = array<i64: 1, 32>}, {pipeline_mode = #tpu.pipeline_mode<synchronous>, transform_indices = @transform_5, window_bounds = array<i64: 1, 32>}, {pipeline_mode = #tpu.pipeline_mode<synchronous>, transform_indices = @transform_6, window_bounds = array<i64: 1, 32>}, {transform_indices = @transform_7, window_bounds = array<i64: 16, 32>}]} {
    %c0 = arith.constant 0 : index
    %c0_0 = arith.constant 0 : index
    %0 = vector.load %arg1[%c0, %c0_0] : memref<16x32xbf16, #tpu.memory_space<vmem>>, vector<16x32xbf16>
    %c0_1 = arith.constant 0 : index
    %c0_2 = arith.constant 0 : index
    %1 = vector.load %arg2[%c0_1, %c0_2] : memref<32x2048xbf16, #tpu.memory_space<vmem>>, vector<32x2048xbf16>
    %cst = arith.constant dense<0.000000e+00> : vector<16x2048xf32>
    %2 = tpu.matmul %0, %1, %cst {dimension_numbers = #tpu.dot_dimension_numbers<[1], [0], [0], [1], [0, 0, 1, 1], [], []>} : vector<16x32xbf16>, vector<32x2048xbf16>, vector<16x2048xf32> -> vector<16x2048xf32>
    %c0_3 = arith.constant 0 : index
    %c0_4 = arith.constant 0 : index
    %3 = vector.load %arg3[%c0_3, %c0_4] : memref<1x2048xf32, #tpu.memory_space<vmem>>, vector<1x2048xf32>
    %4 = vector.broadcast %3 : vector<1x2048xf32> to vector<16x2048xf32>
    %5 = arith.addf %2, %4 : vector<16x2048xf32>
    %cst_5 = arith.constant 0.000000e+00 : f32
    %6 = vector.broadcast %cst_5 : f32 to vector<16x2048xf32>
    %7 = arith.maximumf %5, %6 : vector<16x2048xf32>
    %8 = arith.truncf %7 : vector<16x2048xf32> to vector<16x2048xbf16>
    %c0_6 = arith.constant 0 : index
    %c0_7 = arith.constant 0 : index
    %9 = vector.load %arg4[%c0_6, %c0_7] : memref<2048x32xbf16, #tpu.memory_space<vmem>>, vector<2048x32xbf16>
    %cst_8 = arith.constant dense<0.000000e+00> : vector<16x32xf32>
    %10 = tpu.matmul %8, %9, %cst_8 {dimension_numbers = #tpu.dot_dimension_numbers<[1], [0], [0], [1], [0, 0, 1, 1], [], []>} : vector<16x2048xbf16>, vector<2048x32xbf16>, vector<16x32xf32> -> vector<16x32xf32>
    %c0_9 = arith.constant 0 : index
    %c0_10 = arith.constant 0 : index
    %11 = vector.load %arg5[%c0_9, %c0_10] : memref<1x32xf32, #tpu.memory_space<vmem>>, vector<1x32xf32>
    %12 = vector.broadcast %11 : vector<1x32xf32> to vector<16x32xf32>
    %13 = arith.addf %10, %12 : vector<16x32xf32>
    %14 = arith.extf %0 : vector<16x32xbf16> to vector<16x32xf32>
    %15 = arith.addf %14, %13 : vector<16x32xf32>
    %cst_11 = arith.constant dense<0.000000e+00> : vector<16xf32>
    %16 = vector.multi_reduction <add>, %15, %cst_11 [1] : vector<16x32xf32> to vector<16xf32>
    %17 = vector.shape_cast %16 : vector<16xf32> to vector<16x1xf32>
    %cst_12 = arith.constant 3.200000e+01 : f32
    %18 = vector.broadcast %cst_12 : f32 to vector<16x1xf32>
    %19 = arith.divf %17, %18 : vector<16x1xf32>
    %20 = vector.broadcast %19 : vector<16x1xf32> to vector<16x32xf32>
    %21 = arith.subf %15, %20 : vector<16x32xf32>
    %22 = arith.mulf %21, %21 : vector<16x32xf32>
    %cst_13 = arith.constant dense<0.000000e+00> : vector<16xf32>
    %23 = vector.multi_reduction <add>, %22, %cst_13 [1] : vector<16x32xf32> to vector<16xf32>
    %24 = vector.shape_cast %23 : vector<16xf32> to vector<16x1xf32>
    %cst_14 = arith.constant 3.200000e+01 : f32
    %25 = vector.broadcast %cst_14 : f32 to vector<16x1xf32>
    %26 = arith.divf %24, %25 : vector<16x1xf32>
    %cst_15 = arith.constant 9.99999974E-6 : f32
    %27 = vector.broadcast %cst_15 : f32 to vector<16x1xf32>
    %28 = arith.addf %26, %27 : vector<16x1xf32>
    %29 = math.rsqrt %28 : vector<16x1xf32>
    %30 = vector.broadcast %29 : vector<16x1xf32> to vector<16x32xf32>
    %31 = arith.mulf %21, %30 : vector<16x32xf32>
    %c0_16 = arith.constant 0 : index
    %c0_17 = arith.constant 0 : index
    %32 = vector.load %arg6[%c0_16, %c0_17] : memref<1x32xf32, #tpu.memory_space<vmem>>, vector<1x32xf32>
    %33 = vector.broadcast %32 : vector<1x32xf32> to vector<16x32xf32>
    %34 = arith.mulf %31, %33 : vector<16x32xf32>
    %c0_18 = arith.constant 0 : index
    %c0_19 = arith.constant 0 : index
    %35 = vector.load %arg7[%c0_18, %c0_19] : memref<1x32xf32, #tpu.memory_space<vmem>>, vector<1x32xf32>
    %36 = vector.broadcast %35 : vector<1x32xf32> to vector<16x32xf32>
    %37 = arith.addf %34, %36 : vector<16x32xf32>
    %38 = arith.truncf %37 : vector<16x32xf32> to vector<16x32xbf16>
    %c0_20 = arith.constant 0 : index
    %c0_21 = arith.constant 0 : index
    %39 = vector.load %arg8[%c0_20, %c0_21] : memref<16x32xbf16, #tpu.memory_space<vmem>>, vector<16x32xbf16>
    tpu.vector_store %arg8[%c0_20, %c0_21], %38 {strides = array<i32>} : memref<16x32xbf16, #tpu.memory_space<vmem>>, vector<16x32xbf16>,
    return
  }
  func.func @transform_0(%arg0: i32) -> (i32, i32) {
    %c0_i32 = arith.constant 0 : i32
    %c0_i32_0 = arith.constant 0 : i32
    return %arg0, %c0_i32 : i32, i32
  }
  func.func @transform_1(%arg0: i32) -> (i32, i32) {
    %c0_i32 = arith.constant 0 : i32
    %c0_i32_0 = arith.constant 0 : i32
    %c0_i32_1 = arith.constant 0 : i32
    return %c0_i32, %c0_i32_0 : i32, i32
  }
  func.func @transform_2(%arg0: i32) -> (i32, i32) {
    %c0_i32 = arith.constant 0 : i32
    %c0_i32_0 = arith.constant 0 : i32
    %c0_i32_1 = arith.constant 0 : i32
    return %c0_i32, %c0_i32_0 : i32, i32
  }
  func.func @transform_3(%arg0: i32) -> (i32, i32) {
    %c0_i32 = arith.constant 0 : i32
    %c0_i32_0 = arith.constant 0 : i32
    %c0_i32_1 = arith.constant 0 : i32
    return %c0_i32, %c0_i32_0 : i32, i32
  }
  func.func @transform_4(%arg0: i32) -> (i32, i32) {
    %c0_i32 = arith.constant 0 : i32
    %c0_i32_0 = arith.constant 0 : i32
    %c0_i32_1 = arith.constant 0 : i32
    return %c0_i32, %c0_i32_0 : i32, i32
  }
  func.func @transform_5(%arg0: i32) -> (i32, i32) {
    %c0_i32 = arith.constant 0 : i32
    %c0_i32_0 = arith.constant 0 : i32
    %c0_i32_1 = arith.constant 0 : i32
    return %c0_i32, %c0_i32_0 : i32, i32
  }
  func.func @transform_6(%arg0: i32) -> (i32, i32) {
    %c0_i32 = arith.constant 0 : i32
    %c0_i32_0 = arith.constant 0 : i32
    %c0_i32_1 = arith.constant 0 : i32
    return %c0_i32, %c0_i32_0 : i32, i32
  }
  func.func @transform_7(%arg0: i32) -> (i32, i32) {
    %c0_i32 = arith.constant 0 : i32
    %c0_i32_0 = arith.constant 0 : i32
    return %arg0, %c0_i32 : i32, i32
  }
}

module attributes {stable_mosaic.version = 11 : i64} {
  func.func @_ffn_ln_kernel(%arg0: i32, %arg1: memref<16x32xbf16, #tpu.memory_space<vmem>>, %arg2: memref<32x2048xbf16, #tpu.memory_space<vmem>>, %arg3: memref<1x2048xf32, #tpu.memory_space<vmem>>, %arg4: memref<2048x32xbf16, #tpu.memory_space<vmem>>, %arg5: memref<1x32xf32, #tpu.memory_space<vmem>>, %arg6: memref<1x32xf32, #tpu.memory_space<vmem>>, %arg7: memref<1x32xf32, #tpu.memory_space<vmem>>, %arg8: memref<16x32xbf16, #tpu.memory_space<vmem>>) attributes {dimension_semantics = [#tpu.dimension_semantics<parallel>], iteration_bounds = array<i64: 1>, scalar_prefetch = 0 : i64, scratch_operands = 0 : i64, tpu.core_type = #tpu.core_type<tc>, window_params = [{transform_indices = @transform_0, window_bounds = array<i64: 16, 32>}, {pipeline_mode = #tpu.pipeline_mode<synchronous>, transform_indices = @transform_1, window_bounds = array<i64: 32, 2048>}, {pipeline_mode = #tpu.pipeline_mode<synchronous>, transform_indices = @transform_2, window_bounds = array<i64: 1, 2048>}, {pipeline_mode = #tpu.pipeline_mode<synchronous>, transform_indices = @transform_3, window_bounds = array<i64: 2048, 32>}, {pipeline_mode = #tpu.pipeline_mode<synchronous>, transform_indices = @transform_4, window_bounds = array<i64: 1, 32>}, {pipeline_mode = #tpu.pipeline_mode<synchronous>, transform_indices = @transform_5, window_bounds = array<i64: 1, 32>}, {pipeline_mode = #tpu.pipeline_mode<synchronous>, transform_indices = @transform_6, window_bounds = array<i64: 1, 32>}, {transform_indices = @transform_7, window_bounds = array<i64: 16, 32>}]} {
    %c0 = arith.constant 0 : index
    %c0_0 = arith.constant 0 : index
    %0 = vector.load %arg1[%c0, %c0_0] : memref<16x32xbf16, #tpu.memory_space<vmem>>, vector<16x32xbf16>
    %c0_1 = arith.constant 0 : index
    %c0_2 = arith.constant 0 : index
    %1 = vector.load %arg2[%c0_1, %c0_2] : memref<32x2048xbf16, #tpu.memory_space<vmem>>, vector<32x2048xbf16>
    %cst = arith.constant dense<0.000000e+00> : vector<16x2048xf32>
    %2 = tpu.matmul %0, %1, %cst {dimension_numbers = #tpu.dot_dimension_numbers<[1], [0], [0], [1], [0, 0, 1, 1], [], []>} : vector<16x32xbf16>, vector<32x2048xbf16>, vector<16x2048xf32> -> vector<16x2048xf32>
    %c0_3 = arith.constant 0 : index
    %c0_4 = arith.constant 0 : index
    %3 = vector.load %arg3[%c0_3, %c0_4] : memref<1x2048xf32, #tpu.memory_space<vmem>>, vector<1x2048xf32>
    %4 = vector.broadcast %3 : vector<1x2048xf32> to vector<16x2048xf32>
    %5 = arith.addf %2, %4 : vector<16x2048xf32>
    %cst_5 = arith.constant 0.000000e+00 : f32
    %6 = vector.broadcast %cst_5 : f32 to vector<16x2048xf32>
    %7 = arith.maximumf %5, %6 : vector<16x2048xf32>
    %8 = arith.truncf %7 : vector<16x2048xf32> to vector<16x2048xbf16>
    %c0_6 = arith.constant 0 : index
    %c0_7 = arith.constant 0 : index
    %9 = vector.load %arg4[%c0_6, %c0_7] : memref<2048x32xbf16, #tpu.memory_space<vmem>>, vector<2048x32xbf16>
    %cst_8 = arith.constant dense<0.000000e+00> : vector<16x32xf32>
    %10 = tpu.matmul %8, %9, %cst_8 {dimension_numbers = #tpu.dot_dimension_numbers<[1], [0], [0], [1], [0, 0, 1, 1], [], []>} : vector<16x2048xbf16>, vector<2048x32xbf16>, vector<16x32xf32> -> vector<16x32xf32>
    %c0_9 = arith.constant 0 : index
    %c0_10 = arith.constant 0 : index
    %11 = vector.load %arg5[%c0_9, %c0_10] : memref<1x32xf32, #tpu.memory_space<vmem>>, vector<1x32xf32>
    %12 = vector.broadcast %11 : vector<1x32xf32> to vector<16x32xf32>
    %13 = arith.addf %10, %12 : vector<16x32xf32>
    %14 = arith.extf %0 : vector<16x32xbf16> to vector<16x32xf32>
    %15 = arith.addf %14, %13 : vector<16x32xf32>
    %cst_11 = arith.constant dense<0.000000e+00> : vector<16xf32>
    %16 = vector.multi_reduction <add>, %15, %cst_11 [1] : vector<16x32xf32> to vector<16xf32>
    %17 = vector.shape_cast %16 : vector<16xf32> to vector<16x1xf32>
    %cst_12 = arith.constant 3.200000e+01 : f32
    %18 = vector.broadcast %cst_12 : f32 to vector<16x1xf32>
    %19 = arith.divf %17, %18 : vector<16x1xf32>
    %20 = vector.broadcast %19 : vector<16x1xf32> to vector<16x32xf32>
    %21 = arith.subf %15, %20 : vector<16x32xf32>
    %22 = arith.mulf %21, %21 : vector<16x32xf32>
    %cst_13 = arith.constant dense<0.000000e+00> : vector<16xf32>
    %23 = vector.multi_reduction <add>, %22, %cst_13 [1] : vector<16x32xf32> to vector<16xf32>
    %24 = vector.shape_cast %23 : vector<16xf32> to vector<16x1xf32>
    %cst_14 = arith.constant 3.200000e+01 : f32
    %25 = vector.broadcast %cst_14 : f32 to vector<16x1xf32>
    %26 = arith.divf %24, %25 : vector<16x1xf32>
    %cst_15 = arith.constant 9.99999974E-6 : f32
    %27 = vector.broadcast %cst_15 : f32 to vector<16x1xf32>
    %28 = arith.addf %26, %27 : vector<16x1xf32>
    %29 = math.rsqrt %28 : vector<16x1xf32>
    %30 = vector.broadcast %29 : vector<16x1xf32> to vector<16x32xf32>
    %31 = arith.mulf %21, %30 : vector<16x32xf32>
    %c0_16 = arith.constant 0 : index
    %c0_17 = arith.constant 0 : index
    %32 = vector.load %arg6[%c0_16, %c0_17] : memref<1x32xf32, #tpu.memory_space<vmem>>, vector<1x32xf32>
    %33 = vector.broadcast %32 : vector<1x32xf32> to vector<16x32xf32>
    %34 = arith.mulf %31, %33 : vector<16x32xf32>
    %c0_18 = arith.constant 0 : index
    %c0_19 = arith.constant 0 : index
    %35 = vector.load %arg7[%c0_18, %c0_19] : memref<1x32xf32, #tpu.memory_space<vmem>>, vector<1x32xf32>
    %36 = vector.broadcast %35 : vector<1x32xf32> to vector<16x32xf32>
    %37 = arith.addf %34, %36 : vector<16x32xf32>
    %38 = arith.truncf %37 : vector<16x32xf32> to vector<16x32xbf16>
    %c0_20 = arith.constant 0 : index
    %c0_21 = arith.constant 0 : index
    %39 = vector.load %arg8[%c0_20, %c0_21] : memref<16x32xbf16, #tpu.memory_space<vmem>>, vector<16x32xbf16>
    tpu.vector_store %arg8[%c0_20, %c0_21], %38 {strides = array<i32>} : memref<16x32xbf16, #tpu.memory_space<vmem>>, vector<16x32xbf16>,
    return
  }
  func.func @transform_0(%arg0: i32) -> (i32, i32) {
    %c0_i32 = arith.constant 0 : i32
    %c0_i32_0 = arith.constant 0 : i32
    return %arg0, %c0_i32 : i32, i32
  }
  func.func @transform_1(%arg0: i32) -> (i32, i32) {
    %c0_i32 = arith.constant 0 : i32
    %c0_i32_0 = arith.constant 0 : i32
    %c0_i32_1 = arith.constant 0 : i32
    return %c0_i32, %c0_i32_0 : i32, i32
  }
  func.func @transform_2(%arg0: i32) -> (i32, i32) {
    %c0_i32 = arith.constant 0 : i32
    %c0_i32_0 = arith.constant 0 : i32
    %c0_i32_1 = arith.constant 0 : i32
    return %c0_i32, %c0_i32_0 : i32, i32
  }
  func.func @transform_3(%arg0: i32) -> (i32, i32) {
    %c0_i32 = arith.constant 0 : i32
    %c0_i32_0 = arith.constant 0 : i32
    %c0_i32_1 = arith.constant 0 : i32
    return %c0_i32, %c0_i32_0 : i32, i32
  }
  func.func @transform_4(%arg0: i32) -> (i32, i32) {
    %c0_i32 = arith.constant 0 : i32
    %c0_i32_0 = arith.constant 0 : i32
    %c0_i32_1 = arith.constant 0 : i32
    return %c0_i32, %c0_i32_0 : i32, i32
  }
  func.func @transform_5(%arg0: i32) -> (i32, i32) {
    %c0_i32 = arith.constant 0 : i32
    %c0_i32_0 = arith.constant 0 : i32
    %c0_i32_1 = arith.constant 0 : i32
    return %c0_i32, %c0_i32_0 : i32, i32
  }
  func.func @transform_6(%arg0: i32) -> (i32, i32) {
    %c0_i32 = arith.constant 0 : i32
    %c0_i32_0 = arith.constant 0 : i32
    %c0_i32_1 = arith.constant 0 : i32
    return %c0_i32, %c0_i32_0 : i32, i32
  }
  func.func @transform_7(%arg0: i32) -> (i32, i32) {
    %c0_i32 = arith.constant 0 : i32
    %c0_i32_0 = arith.constant 0 : i32
    return %arg0, %c0_i32 : i32, i32
  }
}

module attributes {stable_mosaic.version = 11 : i64} {
  func.func @_linear_kernel(%arg0: i32, %arg1: memref<16x32xbf16, #tpu.memory_space<vmem>>, %arg2: memref<32x128xbf16, #tpu.memory_space<vmem>>, %arg3: memref<1x128xf32, #tpu.memory_space<vmem>>, %arg4: memref<16x128xf32, #tpu.memory_space<vmem>>) attributes {dimension_semantics = [#tpu.dimension_semantics<parallel>], iteration_bounds = array<i64: 1>, scalar_prefetch = 0 : i64, scratch_operands = 0 : i64, tpu.core_type = #tpu.core_type<tc>, window_params = [{transform_indices = @transform_0, window_bounds = array<i64: 16, 32>}, {pipeline_mode = #tpu.pipeline_mode<synchronous>, transform_indices = @transform_1, window_bounds = array<i64: 32, 128>}, {pipeline_mode = #tpu.pipeline_mode<synchronous>, transform_indices = @transform_2, window_bounds = array<i64: 1, 128>}, {transform_indices = @transform_3, window_bounds = array<i64: 16, 128>}]} {
    %c0 = arith.constant 0 : index
    %c0_0 = arith.constant 0 : index
    %0 = vector.load %arg1[%c0, %c0_0] : memref<16x32xbf16, #tpu.memory_space<vmem>>, vector<16x32xbf16>
    %c0_1 = arith.constant 0 : index
    %c0_2 = arith.constant 0 : index
    %1 = vector.load %arg2[%c0_1, %c0_2] : memref<32x128xbf16, #tpu.memory_space<vmem>>, vector<32x128xbf16>
    %cst = arith.constant dense<0.000000e+00> : vector<16x128xf32>
    %2 = tpu.matmul %0, %1, %cst {dimension_numbers = #tpu.dot_dimension_numbers<[1], [0], [0], [1], [0, 0, 1, 1], [], []>} : vector<16x32xbf16>, vector<32x128xbf16>, vector<16x128xf32> -> vector<16x128xf32>
    %c0_3 = arith.constant 0 : index
    %c0_4 = arith.constant 0 : index
    %3 = vector.load %arg3[%c0_3, %c0_4] : memref<1x128xf32, #tpu.memory_space<vmem>>, vector<1x128xf32>
    %4 = vector.broadcast %3 : vector<1x128xf32> to vector<16x128xf32>
    %5 = arith.addf %2, %4 : vector<16x128xf32>
    %c0_5 = arith.constant 0 : index
    %c0_6 = arith.constant 0 : index
    %6 = vector.load %arg4[%c0_5, %c0_6] : memref<16x128xf32, #tpu.memory_space<vmem>>, vector<16x128xf32>
    tpu.vector_store %arg4[%c0_5, %c0_6], %5 {strides = array<i32>} : memref<16x128xf32, #tpu.memory_space<vmem>>, vector<16x128xf32>,
    return
  }
  func.func @transform_0(%arg0: i32) -> (i32, i32) {
    %c0_i32 = arith.constant 0 : i32
    %c0_i32_0 = arith.constant 0 : i32
    return %arg0, %c0_i32 : i32, i32
  }
  func.func @transform_1(%arg0: i32) -> (i32, i32) {
    %c0_i32 = arith.constant 0 : i32
    %c0_i32_0 = arith.constant 0 : i32
    %c0_i32_1 = arith.constant 0 : i32
    return %c0_i32, %c0_i32_0 : i32, i32
  }
  func.func @transform_2(%arg0: i32) -> (i32, i32) {
    %c0_i32 = arith.constant 0 : i32
    %c0_i32_0 = arith.constant 0 : i32
    %c0_i32_1 = arith.constant 0 : i32
    return %c0_i32, %c0_i32_0 : i32, i32
  }
  func.func @transform_3(%arg0: i32) -> (i32, i32) {
    %c0_i32 = arith.constant 0 : i32
    %c0_i32_0 = arith.constant 0 : i32
    return %arg0, %c0_i32 : i32, i32
  }
}

</mosaic_0001>

<llo_original>
// kernel: _lambda_.11
$region0: #{_lambda_.11}
  #allocation0 [shape = 'u32[]', space=smem, size = 0x4, offset = 0x4, fixed_abs, tag = 'smem constant byte address 0x4 - core index']
  #allocation1 [shape = 'u32[72,128]{1,0:T(1,128)}', space=vmem, size = 0x9000, scoped, tag = 'internal scratch']
  %s0 = inlined_call_operand.vmem [shape: bf16[16,32], index: 0, kind: input, shape index: {}]
  %s1 = inlined_call_operand.vmem [shape: bf16[32,96], index: 1, kind: input, shape index: {}]
  %s2 = inlined_call_operand.vmem [shape: f32[1,96], index: 2, kind: input, shape index: {}]
  %s3 = inlined_call_operand.vmem [shape: bf16[16,96], index: 3, kind: output, shape index: {}]
  %s4 = sld [smem:[#allocation0]]
  $region22: #{_lambda_.11} parent=0
    _
  %s6 = ssub.s32 1, %s4
  %s7 = scalar_select 0, %s6, %s4
  // Predicated region
  $region2: #{_lambda_.11} parent=0 // pred_check
    _
  $region3: #{_lambda_.11} parent=0 // pred_check_branch
    %9 = sbr.rel (0) target = $region5
  $region4: #{_lambda_.11} parent=0 // pred_region
    _
  $region5: #{_lambda_.11} parent=0 // pred_fallthru
    _
  // Predicated region
  $region6: #{_lambda_.11} parent=0 // pred_check
    _
  $region7: #{_lambda_.11} parent=0 // pred_check_branch
    %11 = sbr.rel (0) target = $region9
  $region8: #{_lambda_.11} parent=0 // pred_region
    _
  $region9: #{_lambda_.11} parent=0 // pred_fallthru
    _
  // Predicated region
  $region10: #{_lambda_.11} parent=0 // pred_check
    _
  $region11: #{_lambda_.11} parent=0 // pred_check_branch
    %13 = sbr.rel (0) target = $region13
  $region12: #{_lambda_.11} parent=0 // pred_region
    _
  $region13: #{_lambda_.11} parent=0 // pred_fallthru
    _
  %v15 = vld [vmem:[%s0] sm:$0xf]
  %v16 = vld [vmem:[%s0 + $0x4] sm:$0xf]
  %v17 = vld [vmem:[%s1] sm:$0xf]
  %v18 = vld [vmem:[%s1 + $0x4] sm:$0xf]
  %v19 = vld [vmem:[%s1 + $0x8] sm:$0xf]
  %v20 = vld [vmem:[%s1 + $0xc] sm:$0xf]
  %v21 = vld [vmem:[%s2] sm:$0x1]
  %v23 = vperm.slane %v21, 0
  %v27 = vunpack.c.l.b16 %v15
  %v28 = vunpack.c.l.b16 %v16
  %v29 = vpack.c.b16 %v28, %v27
  %v34 = vunpack.c.l.b16 %v17
  %v35 = vunpack.c.l.b16 %v18
  %v36 = vunpack.c.l.b16 %v19
  %v37 = vunpack.c.l.b16 %v20
  %v38 = vpack.c.b16 %v35, %v34
  %v39 = vpack.c.b16 %v37, %v36
  %vm42 = vcmask 261120
  %v44 = vsel %vm42, %v29, 0
  %46 = vmatpush.bf16.msra.mxu0 0
  %47 = vmatpush.bf16.msra.mxu0 0
  %48 = vmatpush.bf16.msra.mxu0 0
  %49 = vmatpush.bf16.msra.mxu0 0
  %50 = vmatpush.bf16.msra.mxu0 0
  %51 = vmatpush.bf16.msra.mxu0 0
  %52 = vmatpush.bf16.msra.mxu0 %v39
  %53 = vmatpush.bf16.msra.mxu0 %v38
  %54 = vmatmul.bf16.gmra.mxu0 %v44
  %v55 = vpop.f32.mrf.mxu0
  %v56 = vadd.f32 %v23, %v55
  %v57 = vpop.f32.mrf.mxu0
  %v58 = vadd.f32 %v23, %v57
  %59 = vdwg.mxu0
  %v60 = vpack.c.bf16 %v56, %v56
  %v61 = vpack.c.bf16 %v58, %v58
  %vm62 = vcmask 781312
  %63 = vst.msk [vmem:[%s3] sm:$0xf] %vm62, %v60
  %64 = vst.msk [vmem:[%s3 + $0x4] sm:$0xf] %vm62, %v61
  // Predicated region
  $region14: #{_lambda_.11} parent=0 // pred_check
    _
  $region15: #{_lambda_.11} parent=0 // pred_check_branch
    %66 = sbr.rel (0) target = $region17
  $region16: #{_lambda_.11} parent=0 // pred_region
    _
  $region17: #{_lambda_.11} parent=0 // pred_fallthru
    _
  // Predicated region
  $region18: #{_lambda_.11} parent=0 // pred_check
    _
  $region19: #{_lambda_.11} parent=0 // pred_check_branch
    %68 = sbr.rel (0) target = $region21
  $region20: #{_lambda_.11} parent=0 // pred_region
    _
  $region21: #{_lambda_.11} parent=0 // pred_fallthru
    _

// kernel: _lambda_.10
$region0: #{_lambda_.10}
  #allocation0 [shape = 'u32[]', space=smem, size = 0x4, offset = 0x4, fixed_abs, tag = 'smem constant byte address 0x4 - core index']
  #allocation1 [shape = 'u32[72,128]{1,0:T(1,128)}', space=vmem, size = 0x9000, scoped, tag = 'internal scratch']
  %s0 = inlined_call_operand.vmem [shape: f32[16,4], index: 0, kind: input, shape index: {}]
  %s1 = inlined_call_operand.vmem [shape: bf16[4,32], index: 1, kind: input, shape index: {}]
  %s2 = inlined_call_operand.vmem [shape: f32[1,32], index: 2, kind: input, shape index: {}]
  %s3 = inlined_call_operand.vmem [shape: bf16[16,32], index: 3, kind: output, shape index: {}]
  %s4 = sld [smem:[#allocation0]]
  $region22: #{_lambda_.10} parent=0
    _
  %s6 = ssub.s32 1, %s4
  %s7 = scalar_select 0, %s6, %s4
  // Predicated region
  $region2: #{_lambda_.10} parent=0 // pred_check
    _
  $region3: #{_lambda_.10} parent=0 // pred_check_branch
    %9 = sbr.rel (0) target = $region5
  $region4: #{_lambda_.10} parent=0 // pred_region
    _
  $region5: #{_lambda_.10} parent=0 // pred_fallthru
    _
  // Predicated region
  $region6: #{_lambda_.10} parent=0 // pred_check
    _
  $region7: #{_lambda_.10} parent=0 // pred_check_branch
    %11 = sbr.rel (0) target = $region9
  $region8: #{_lambda_.10} parent=0 // pred_region
    _
  $region9: #{_lambda_.10} parent=0 // pred_fallthru
    _
  // Predicated region
  $region10: #{_lambda_.10} parent=0 // pred_check
    _
  $region11: #{_lambda_.10} parent=0 // pred_check_branch
    %13 = sbr.rel (0) target = $region13
  $region12: #{_lambda_.10} parent=0 // pred_region
    _
  $region13: #{_lambda_.10} parent=0 // pred_fallthru
    _
  %v15 = vld [vmem:[%s0] sm:$0xff]
  %v16 = vld [vmem:[%s0 + $0x8] sm:$0xff]
  %v17 = vpack.c.bf16 %v16, %v15
  %v18 = vld [vmem:[%s1] sm:$0x3]
  %v19 = vld [vmem:[%s2] sm:$0x1]
  %v21 = vperm.slane %v19, 0
  %vm23 = vcmask 31744
  %v25 = vsel %vm23, %v17, 0
  %vm27 = vcmask 1041408
  %v29 = vsel %vm27, %v18, 0
  %31 = vmatpush.bf16.msra.mxu0 0
  %32 = vmatpush.bf16.msra.mxu0 0
  %33 = vmatpush.bf16.msra.mxu0 0
  %34 = vmatpush.bf16.msra.mxu0 0
  %35 = vmatpush.bf16.msra.mxu0 0
  %36 = vmatpush.bf16.msra.mxu0 0
  %37 = vmatpush.bf16.msra.mxu0 0
  %38 = vmatpush.bf16.msra.mxu0 %v29
  %39 = vmatmul.bf16.gmra.mxu0 %v25
  %v40 = vpop.f32.mrf.mxu0
  %v41 = vadd.f32 %v21, %v40
  %v42 = vpop.f32.mrf.mxu0
  %v43 = vadd.f32 %v21, %v42
  %44 = vdwg.mxu0
  %v45 = vpack.c.bf16 %v41, %v41
  %v46 = vpack.c.bf16 %v43, %v43
  %vm47 = vcmask 257024
  %48 = vst.msk [vmem:[%s3] sm:$0xf] %vm47, %v45
  %49 = vst.msk [vmem:[%s3 + $0x4] sm:$0xf] %vm47, %v46
  // Predicated region
  $region14: #{_lambda_.10} parent=0 // pred_check
    _
  $region15: #{_lambda_.10} parent=0 // pred_check_branch
    %51 = sbr.rel (0) target = $region17
  $region16: #{_lambda_.10} parent=0 // pred_region
    _
  $region17: #{_lambda_.10} parent=0 // pred_fallthru
    _
  // Predicated region
  $region18: #{_lambda_.10} parent=0 // pred_check
    _
  $region19: #{_lambda_.10} parent=0 // pred_check_branch
    %53 = sbr.rel (0) target = $region21
  $region20: #{_lambda_.10} parent=0 // pred_region
    _
  $region21: #{_lambda_.10} parent=0 // pred_fallthru
    _

// kernel: _lambda_.12
$region0: #{_lambda_.12}
  #allocation0 [shape = 'u32[]', space=smem, size = 0x4, offset = 0x4, fixed_abs, tag = 'smem constant byte address 0x4 - core index']
  #allocation1 [shape = 'u32[72,128]{1,0:T(1,128)}', space=vmem, size = 0x9000, scoped, tag = 'internal scratch']
  #allocation2 [shape = 'f32[8,1]{1,0:T(8,128)}', space=vmem, size = 0x1000, scoped, tag = 'scratch operand']
  #allocation3 [shape = 'f32[8,1]{1,0:T(8,128)}', space=vmem, size = 0x1000, scoped, tag = 'scratch operand']
  #allocation4 [shape = 'f32[8,8]{1,0:T(8,128)}', space=vmem, size = 0x1000, scoped, tag = 'scratch operand']
  %s0 = inlined_call_operand.vmem [shape: bf16[2,4,8,8], index: 0, kind: input, shape index: {}]
  %s1 = inlined_call_operand.vmem [shape: bf16[2,4,8,8], index: 1, kind: input, shape index: {}]
  %s2 = inlined_call_operand.vmem [shape: bf16[2,4,8,8], index: 2, kind: input, shape index: {}]
  %s3 = inlined_call_operand.vmem [shape: bf16[2,4,8,8], index: 3, kind: output, shape index: {}]
  %s4 = sld [smem:[#allocation0]]
  $region53: #{_lambda_.12} parent=0
    _
  %s6 = ssub.s32 1, %s4
  %s7 = scalar_select 0, %s6, %s4
  loop: start=0, step=1, limit=10
  $region2: #{_lambda_.12} parent=0 // loop_pre_header
    _
  $region3: #{_lambda_.12} parent=0 // loop_header
    %s9 = sphi 0, %s13
    %p10 = scmp.ge.s32.totalorder %s9, 10
    %s16 = sphi 0, %s42
    %s17 = sphi 0, %s38
    %s18 = sphi 0, %s34
    %s19 = sphi 0, %s30
    %s20 = sphi 0, %s16
    %s21 = sphi 0, %s17
    %s22 = sphi 0, %s18
    %s23 = sphi 0, %s19
    %s24 = sphi 0, %s20
    %s25 = sphi 0, %s21
    %s26 = sphi 0, %s22
    %s27 = sphi 0, %s23
    %s49 = sphi 0, %s51
    %s52 = sphi 0, %s49
    %s53 = sphi 0, %s52
    %s69 = sphi 0, %s53
    %s79 = sphi 0, %s81
    %s82 = sphi 0, %s79
    %s83 = sphi 0, %s82
    %s99 = sphi 0, %s83
    %s109 = sphi 0, %s111
    %s112 = sphi 0, %s109
    %s113 = sphi 0, %s112
    %s129 = sphi 0, %s113
    %s139 = sphi 0, %s141
    %s142 = sphi 0, %s139
    %s143 = sphi 0, %s142
    %s159 = sphi 0, %s143
  $region4: #{_lambda_.12} parent=0 // loop_header_branch
    %12 = sbr.rel (%p10) target = $region8
  $region5: #{_lambda_.12} parent=0 // loop_body
    %s14 = ssub.s32 %s9, 1
    %s15 = ssub.s32 %s9, 2
    %s28 = sadd.s32 1, %s19
    %p29 = scmp.ge.s32.totalorder %s28, 1
    %s30 = scalar_select %p29, 0, %s28
    %s31 = sadd.s32 1, %s18
    %s32 = scalar_select %p29, %s31, %s18
    %p33 = scmp.ge.s32.totalorder %s32, 1
    %s34 = scalar_select %p33, 0, %s32
    %s35 = sadd.s32 1, %s17
    %s36 = scalar_select %p33, %s35, %s17
    %p37 = scmp.ge.s32.totalorder %s36, 4
    %s38 = scalar_select %p37, 0, %s36
    %s39 = sadd.s32 1, %s16
    %s40 = scalar_select %p37, %s39, %s16
    %p41 = scmp.ge.s32.totalorder %s40, 2
    %s42 = scalar_select %p41, 0, %s40
    %s43 = ssub.s32 %s16, %s42
    %s44 = ssub.s32 %s17, %s38
    %s45 = sor.u32 %s43, %s44
    %s46 = ssub.s32 %s18, %s34
    %s47 = sor.u32 %s45, %s46
    %p48 = scmp.eq.s32.totalorder %s47, 0
    %s50 = sadd.s32 %s49, 1
    %s51 = scalar_select %p48, %s49, %s50
    %p54 = pneg %p48
    %p55 = scmp.eq.s32.totalorder %s9, 7
    %p56 = por %p54, %p55
    %p57 = scmp.ne.s32.totalorder %s49, %s52
    %p58 = scmp.eq.s32.totalorder %s9, 0
    %p59 = por %p57, %p58
    %p60 = scmp.ne.s32.totalorder %s49, %s52
    %p61 = scmp.eq.s32.totalorder %s14, 7
    %p62 = por %p60, %p61
    %p63 = scmp.ne.s32.totalorder %s52, %s53
    %p64 = scmp.eq.s32.totalorder %s14, 0
    %p65 = por %p63, %p64
    %p66 = scmp.ne.s32.totalorder %s52, %s53
    %p67 = scmp.eq.s32.totalorder %s15, 7
    %p68 = por %p66, %p67
    %p70 = scmp.ne.s32.totalorder %s53, %s69
    %p71 = scmp.eq.s32.totalorder %s15, 0
    %p72 = por %p70, %p71
    %s73 = ssub.s32 %s16, %s42
    %s74 = ssub.s32 %s17, %s38
    %s75 = sor.u32 %s73, %s74
    %s76 = ssub.s32 %s19, %s30
    %s77 = sor.u32 %s75, %s76
    %p78 = scmp.eq.s32.totalorder %s77, 0
    %s80 = sadd.s32 %s79, 1
    %s81 = scalar_select %p78, %s79, %s80
    %p84 = pneg %p78
    %p85 = scmp.eq.s32.totalorder %s9, 7
    %p86 = por %p84, %p85
    %p87 = scmp.ne.s32.totalorder %s79, %s82
    %p88 = scmp.eq.s32.totalorder %s9, 0
    %p89 = por %p87, %p88
    %p90 = scmp.ne.s32.totalorder %s79, %s82
    %p91 = scmp.eq.s32.totalorder %s14, 7
    %p92 = por %p90, %p91
    %p93 = scmp.ne.s32.totalorder %s82, %s83
    %p94 = scmp.eq.s32.totalorder %s14, 0
    %p95 = por %p93, %p94
    %p96 = scmp.ne.s32.totalorder %s82, %s83
    %p97 = scmp.eq.s32.totalorder %s15, 7
    %p98 = por %p96, %p97
    %p100 = scmp.ne.s32.totalorder %s83, %s99
    %p101 = scmp.eq.s32.totalorder %s15, 0
    %p102 = por %p100, %p101
    %s103 = ssub.s32 %s16, %s42
    %s104 = ssub.s32 %s17, %s38
    %s105 = sor.u32 %s103, %s104
    %s106 = ssub.s32 %s19, %s30
    %s107 = sor.u32 %s105, %s106
    %p108 = scmp.eq.s32.totalorder %s107, 0
    %s110 = sadd.s32 %s109, 1
    %s111 = scalar_select %p108, %s109, %s110
    %p114 = pneg %p108
    %p115 = scmp.eq.s32.totalorder %s9, 7
    %p116 = por %p114, %p115
    %p117 = scmp.ne.s32.totalorder %s109, %s112
    %p118 = scmp.eq.s32.totalorder %s9, 0
    %p119 = por %p117, %p118
    %p120 = scmp.ne.s32.totalorder %s109, %s112
    %p121 = scmp.eq.s32.totalorder %s14, 7
    %p122 = por %p120, %p121
    %p123 = scmp.ne.s32.totalorder %s112, %s113
    %p124 = scmp.eq.s32.totalorder %s14, 0
    %p125 = por %p123, %p124
    %p126 = scmp.ne.s32.totalorder %s112, %s113
    %p127 = scmp.eq.s32.totalorder %s15, 7
    %p128 = por %p126, %p127
    %p130 = scmp.ne.s32.totalorder %s113, %s129
    %p131 = scmp.eq.s32.totalorder %s15, 0
    %p132 = por %p130, %p131
    %s133 = ssub.s32 %s16, %s42
    %s134 = ssub.s32 %s17, %s38
    %s135 = sor.u32 %s133, %s134
    %s136 = ssub.s32 %s18, %s34
    %s137 = sor.u32 %s135, %s136
    %p138 = scmp.eq.s32.totalorder %s137, 0
    %s140 = sadd.s32 %s139, 1
    %s141 = scalar_select %p138, %s139, %s140
    %p144 = pneg %p138
    %p145 = scmp.eq.s32.totalorder %s9, 7
    %p146 = por %p144, %p145
    %p147 = scmp.ne.s32.totalorder %s139, %s142
    %p148 = scmp.eq.s32.totalorder %s9, 0
    %p149 = por %p147, %p148
    %p150 = scmp.ne.s32.totalorder %s139, %s142
    %p151 = scmp.eq.s32.totalorder %s14, 7
    %p152 = por %p150, %p151
    %p153 = scmp.ne.s32.totalorder %s142, %s143
    %p154 = scmp.eq.s32.totalorder %s14, 0
    %p155 = por %p153, %p154
    %p156 = scmp.ne.s32.totalorder %s142, %s143
    %p157 = scmp.eq.s32.totalorder %s15, 7
    %p158 = por %p156, %p157
    %p160 = scmp.ne.s32.totalorder %s143, %s159
    %p161 = scmp.eq.s32.totalorder %s15, 0
    %p162 = por %p160, %p161
    %p163 = scmp.le.s32.totalorder 1, %s9
    %p164 = scmp.lt.s32.totalorder %s9, 9
    %p165 = pnand %p163, %p164
    %p166 = pneg %p165
    // Predicated region
    $region9: #{_lambda_.12} parent=5 // pred_check
      _
    $region10: #{_lambda_.12} parent=5 // pred_check_branch
      %168 = sbr.rel (%p165) target = $region12
    $region11: #{_lambda_.12} parent=5 // pred_region
      %s169 = ssub.s32 %s9, 1
    $region12: #{_lambda_.12} parent=5 // pred_fallthru
      _
    %p170 = scmp.lt.s32.totalorder %s9, 8
    // Predicated region
    $region13: #{_lambda_.12} parent=5 // pred_check
      %p171 = pneg %p170
    $region14: #{_lambda_.12} parent=5 // pred_check_branch
      %173 = sbr.rel (%p171) target = $region16
    $region15: #{_lambda_.12} parent=5 // pred_region
      // Predicated region
      $region17: #{_lambda_.12} parent=15 // pred_check
        %p174 = pneg %p59
      $region18: #{_lambda_.12} parent=15 // pred_check_branch
        %176 = sbr.rel (%p174) target = $region20
      $region19: #{_lambda_.12} parent=15 // pred_region
        %p177 = scmp.lt.s32.totalorder %s16, 1
        %s178 = scalar_select %p177, %s16, 1
        %p179 = scmp.lt.s32.totalorder %s17, 3
        %s180 = scalar_select %p179, %s17, 3
        %p181 = scmp.lt.s32.totalorder %s18, 0
        %s182 = scalar_select %p181, %s18, 0
        %s183 = sadd.s32 %s182, %s180
        %s184 = smul.addr %s178, 4
        %s185 = sadd.s32 %s183, %s184
        %s186 = smul.addr %s185, 4
        %s187 = scalar_lea.vmem %s0, %s186
      $region20: #{_lambda_.12} parent=15 // pred_fallthru
        _
      // Predicated region
      $region21: #{_lambda_.12} parent=15 // pred_check
        %p188 = pneg %p89
      $region22: #{_lambda_.12} parent=15 // pred_check_branch
        %190 = sbr.rel (%p188) target = $region24
      $region23: #{_lambda_.12} parent=15 // pred_region
        %p191 = scmp.lt.s32.totalorder %s16, 1
        %s192 = scalar_select %p191, %s16, 1
        %p193 = scmp.lt.s32.totalorder %s17, 3
        %s194 = scalar_select %p193, %s17, 3
        %p195 = scmp.lt.s32.totalorder %s19, 0
        %s196 = scalar_select %p195, %s19, 0
        %s197 = sadd.s32 %s196, %s194
        %s198 = smul.addr %s192, 4
        %s199 = sadd.s32 %s197, %s198
        %s200 = smul.addr %s199, 4
        %s201 = scalar_lea.vmem %s1, %s200
      $region24: #{_lambda_.12} parent=15 // pred_fallthru
        _
      // Predicated region
      $region25: #{_lambda_.12} parent=15 // pred_check
        %p202 = pneg %p119
      $region26: #{_lambda_.12} parent=15 // pred_check_branch
        %204 = sbr.rel (%p202) target = $region28
      $region27: #{_lambda_.12} parent=15 // pred_region
        %p205 = scmp.lt.s32.totalorder %s16, 1
        %s206 = scalar_select %p205, %s16, 1
        %p207 = scmp.lt.s32.totalorder %s17, 3
        %s208 = scalar_select %p207, %s17, 3
        %p209 = scmp.lt.s32.totalorder %s19, 0
        %s210 = scalar_select %p209, %s19, 0
        %s211 = sadd.s32 %s210, %s208
        %s212 = smul.addr %s206, 4
        %s213 = sadd.s32 %s211, %s212
        %s214 = smul.addr %s213, 4
        %s215 = scalar_lea.vmem %s2, %s214
      $region28: #{_lambda_.12} parent=15 // pred_fallthru
        _
    $region16: #{_lambda_.12} parent=5 // pred_fallthru
      _
    %p216 = scmp.le.s32.totalorder 1, %s9
    %p217 = scmp.lt.s32.totalorder %s9, 9
    %p218 = pnand %p216, %p217
    %p219 = pneg %p218
    // Predicated region
    $region29: #{_lambda_.12} parent=5 // pred_check
      _
    $region30: #{_lambda_.12} parent=5 // pred_check_branch
      %221 = sbr.rel (%p218) target = $region32
    $region31: #{_lambda_.12} parent=5 // pred_region
      %s222 = ssub.s32 %s9, 1
      %p223 = scmp.lt.s32.totalorder %s20, 1
      %s224 = scalar_select %p223, %s20, 1
      %p225 = scmp.lt.s32.totalorder %s21, 3
      %s226 = scalar_select %p225, %s21, 3
      %p227 = scmp.lt.s32.totalorder %s22, 0
      %s228 = scalar_select %p227, %s22, 0
      %s229 = sadd.s32 %s228, %s226
      %s230 = smul.addr %s224, 4
      %s231 = sadd.s32 %s229, %s230
      %s232 = smul.addr %s231, 4
      %s233 = scalar_lea.vmem %s0, %s232
      %p234 = pneg %p65
      %p235 = pneg %p62
      %p236 = scmp.lt.s32.totalorder %s20, 1
      %s237 = scalar_select %p236, %s20, 1
      %p238 = scmp.lt.s32.totalorder %s21, 3
      %s239 = scalar_select %p238, %s21, 3
      %p240 = scmp.lt.s32.totalorder %s23, 0
      %s241 = scalar_select %p240, %s23, 0
      %s242 = sadd.s32 %s241, %s239
      %s243 = smul.addr %s237, 4
      %s244 = sadd.s32 %s242, %s243
      %s245 = smul.addr %s244, 4
      %s246 = scalar_lea.vmem %s1, %s245
      %p247 = pneg %p95
      %p248 = pneg %p92
      %p249 = scmp.lt.s32.totalorder %s20, 1
      %s250 = scalar_select %p249, %s20, 1
      %p251 = scmp.lt.s32.totalorder %s21, 3
      %s252 = scalar_select %p251, %s21, 3
      %p253 = scmp.lt.s32.totalorder %s23, 0
      %s254 = scalar_select %p253, %s23, 0
      %s255 = sadd.s32 %s254, %s252
      %s256 = smul.addr %s250, 4
      %s257 = sadd.s32 %s255, %s256
      %s258 = smul.addr %s257, 4
      %s259 = scalar_lea.vmem %s2, %s258
      %p260 = pneg %p125
      %p261 = pneg %p122
      %p262 = pneg %p155
      %p263 = pneg %p152
      %p264 = scmp.lt.s32.totalorder %s20, 1
      %s265 = scalar_select %p264, %s20, 1
      %p266 = scmp.lt.s32.totalorder %s21, 3
      %s267 = scalar_select %p266, %s21, 3
      %p268 = scmp.lt.s32.totalorder %s22, 0
      %s269 = scalar_select %p268, %s22, 0
      %s270 = sadd.s32 %s269, %s267
      %s271 = smul.addr %s265, 4
      %s272 = sadd.s32 %s270, %s271
      %s273 = smul.addr %s272, 4
      %s274 = scalar_lea.vmem %s3, %s273
      %p275 = scmp.lt.s32.totalorder %s20, 1
      %s276 = scalar_select %p275, %s20, 1
      %p277 = scmp.lt.s32.totalorder %s21, 3
      %s278 = scalar_select %p277, %s21, 3
      %p279 = scmp.lt.s32.totalorder %s22, 0
      %s280 = scalar_select %p279, %s22, 0
      %s281 = sadd.s32 %s280, %s278
      %s282 = smul.addr %s276, 4
      %s283 = sadd.s32 %s281, %s282
      %s284 = smul.addr %s283, 4
      %s285 = scalar_lea.vmem %s0, %s284
      %p286 = scmp.lt.s32.totalorder %s20, 1
      %s287 = scalar_select %p286, %s20, 1
      %p288 = scmp.lt.s32.totalorder %s21, 3
      %s289 = scalar_select %p288, %s21, 3
      %p290 = scmp.lt.s32.totalorder %s23, 0
      %s291 = scalar_select %p290, %s23, 0
      %s292 = sadd.s32 %s291, %s289
      %s293 = smul.addr %s287, 4
      %s294 = sadd.s32 %s292, %s293
      %s295 = smul.addr %s294, 4
      %s296 = scalar_lea.vmem %s1, %s295
      %p297 = scmp.lt.s32.totalorder %s20, 1
      %s298 = scalar_select %p297, %s20, 1
      %p299 = scmp.lt.s32.totalorder %s21, 3
      %s300 = scalar_select %p299, %s21, 3
      %p301 = scmp.lt.s32.totalorder %s23, 0
      %s302 = scalar_select %p301, %s23, 0
      %s303 = sadd.s32 %s302, %s300
      %s304 = smul.addr %s298, 4
      %s305 = sadd.s32 %s303, %s304
      %s306 = smul.addr %s305, 4
      %s307 = scalar_lea.vmem %s2, %s306
      %p308 = scmp.lt.s32.totalorder %s20, 1
      %s309 = scalar_select %p308, %s20, 1
      %p310 = scmp.lt.s32.totalorder %s21, 3
      %s311 = scalar_select %p310, %s21, 3
      %p312 = scmp.lt.s32.totalorder %s22, 0
      %s313 = scalar_select %p312, %s22, 0
      %s314 = sadd.s32 %s313, %s311
      %s315 = smul.addr %s309, 4
      %s316 = sadd.s32 %s314, %s315
      %s317 = smul.addr %s316, 4
      %s318 = scalar_lea.vmem %s3, %s317
      %p320 = scmp.eq.s32.totalorder %s23, 0
      // Predicated region
      $region33: #{_lambda_.12} parent=31 // pred_check
        %p321 = pneg %p320
      $region34: #{_lambda_.12} parent=31 // pred_check_branch
        %323 = sbr.rel (%p321) target = $region36
      $region35: #{_lambda_.12} parent=31 // pred_region
        %vm324 = vcmask 7168
        %325 = vst.msk [vmem:[#allocation2] sm:$0xff] %vm324, -1e+30
        %326 = vst.msk [vmem:[#allocation3] sm:$0xff] %vm324, 0.0
        %vm327 = vcmask 64512
        %328 = vst.msk [vmem:[#allocation4] sm:$0xff] %vm327, 0.0
      $region36: #{_lambda_.12} parent=31 // pred_fallthru
        _
      %v329 = vld [vmem:[%s285] sm:$0xf]
      %v330 = vld [vmem:[%s296] sm:$0xf]
      %v331 = vld [vmem:[%s307] sm:$0xf]
      %vm332 = vcmask 64512
      %v334 = vsel %vm332, %v329, 0
      %v337 = vsel %vm332, %v330, 0
      %339 = vmatpush.bf16.xpose.msra.mxu0 0
      %340 = vmatpush.bf16.xpose.msra.mxu0 0
      %341 = vmatpush.bf16.xpose.msra.mxu0 0
      %342 = vmatpush.bf16.xpose.msra.mxu0 0
      %343 = vmatpush.bf16.xpose.msra.mxu0 0
      %344 = vmatpush.bf16.xpose.msra.mxu0 0
      %345 = vmatpush.bf16.xpose.msra.mxu0 0
      %346 = vmatpush.bf16.xpose.msra.mxu0 %v337
      %347 = vmatmul.bf16.gmra.mxu0 %v334
      %v348 = vpop.f32.mrf.mxu0
      %v349 = vadd.f32 0.0, %v348
      %v350 = vpop.f32.mrf.mxu0
      %351 = vdwg.mxu0
      %v352 = vld [vmem:[#allocation2] sm:$0xff]
      %v353 = vsel %vm332, %v349, -inf
      %354 = vmax.xlane.f32.xlu0 %v353
      %v355 = vpop.xlane.xlu0 %354
      %v356 = vmax.f32 %v352, %v355
      %v357 = vsub.f32 %v352, %v356
      %v358 = vmul.f32 %v357, 1.442695
      %v359 = vpow.pop %v358
      %361 = vset.pattern.permute.xlu0 0
      %362 = vperm.xlu0 %361, %v356
      %v363 = vpop.permute.xlu0 %362
      %v365 = vsub.f32 %v349, %v363
      %v366 = vmul.f32 %v365, 1.442695
      %v367 = vpow.pop %v366
      %v368 = vld [vmem:[#allocation3] sm:$0xff]
      %v369 = vmul.f32 %v359, %v368
      %v370 = vsel %vm332, %v367, 0.0
      %371 = vadd.xlane.f32.xlu0 %v370
      %v372 = vpop.xlane.xlu0 %371
      %v373 = vadd.f32 %v369, %v372
      %vm374 = vcmask 7168
      %375 = vst.msk [vmem:[#allocation3] sm:$0xff] %vm374, %v373
      %v376 = vld [vmem:[#allocation4] sm:$0xff]
      %378 = vset.pattern.permute.xlu0 0
      %379 = vperm.xlu0 %378, %v359
      %v380 = vpop.permute.xlu0 %379
      %v382 = vmul.f32 %v380, %v376
      %v383 = vpack.c.bf16 %v367, %v367
      %v385 = vsel %vm332, %v383, 0
      %vm387 = vcmask 1043456
      %v389 = vsel %vm387, %v331, 0
      %391 = vmatpush.bf16.msra.mxu0 0
      %392 = vmatpush.bf16.msra.mxu0 0
      %393 = vmatpush.bf16.msra.mxu0 0
      %394 = vmatpush.bf16.msra.mxu0 0
      %395 = vmatpush.bf16.msra.mxu0 0
      %396 = vmatpush.bf16.msra.mxu0 0
      %397 = vmatpush.bf16.msra.mxu0 0
      %398 = vmatpush.bf16.msra.mxu0 %v389
      %399 = vmatmul.bf16.gmra.mxu0 %v385
      %v400 = vpop.f32.mrf.mxu0
      %v401 = vadd.f32 0.0, %v400
      %v402 = vpop.f32.mrf.mxu0
      %403 = vdwg.mxu0
      %v404 = vadd.f32 %v382, %v401
      %405 = vst.msk [vmem:[#allocation4] sm:$0xff] %vm332, %v404
      %406 = vst.msk [vmem:[#allocation2] sm:$0xff] %vm374, %v356
      // Predicated region
      $region37: #{_lambda_.12} parent=31 // pred_check
        %p407 = pneg %p320
      $region38: #{_lambda_.12} parent=31 // pred_check_branch
        %409 = sbr.rel (%p407) target = $region40
      $region39: #{_lambda_.12} parent=31 // pred_region
        %v410 = vld [vmem:[#allocation4] sm:$0xff]
        %v411 = vld [vmem:[#allocation3] sm:$0xff]
        %v412 = vrcp.pop %v411
        %414 = vset.pattern.permute.xlu0 0
        %415 = vperm.xlu0 %414, %v412
        %v416 = vpop.permute.xlu0 %415
        %v418 = vmul.f32 %v410, %v416
        %v419 = vpack.c.bf16 %v418, %v418
        %vm420 = vcmask 60416
        %421 = vst.msk [vmem:[%s318] sm:$0xf] %vm420, %v419
      $region40: #{_lambda_.12} parent=31 // pred_fallthru
        _
      %p422 = scmp.lt.s32.totalorder %s20, 1
      %s423 = scalar_select %p422, %s20, 1
      %p424 = scmp.lt.s32.totalorder %s21, 3
      %s425 = scalar_select %p424, %s21, 3
      %p426 = scmp.lt.s32.totalorder %s22, 0
      %s427 = scalar_select %p426, %s22, 0
      %s428 = sadd.s32 %s427, %s425
      %s429 = smul.addr %s423, 4
      %s430 = sadd.s32 %s428, %s429
      %s431 = smul.addr %s430, 4
      %s432 = scalar_lea.vmem %s3, %s431
      // Predicated region
      $region41: #{_lambda_.12} parent=31 // pred_check
        %p433 = pneg %p152
      $region42: #{_lambda_.12} parent=31 // pred_check_branch
        %435 = sbr.rel (%p433) target = $region44
      $region43: #{_lambda_.12} parent=31 // pred_region
        _
      $region44: #{_lambda_.12} parent=31 // pred_fallthru
        _
    $region32: #{_lambda_.12} parent=5 // pred_fallthru
      _
    %p436 = scmp.le.s32.totalorder 2, %s9
    // Predicated region
    $region45: #{_lambda_.12} parent=5 // pred_check
      %p437 = pneg %p436
    $region46: #{_lambda_.12} parent=5 // pred_check_branch
      %439 = sbr.rel (%p437) target = $region48
    $region47: #{_lambda_.12} parent=5 // pred_region
      %s440 = ssub.s32 %s9, 2
      // Predicated region
      $region49: #{_lambda_.12} parent=47 // pred_check
        %p441 = pneg %p158
      $region50: #{_lambda_.12} parent=47 // pred_check_branch
        %443 = sbr.rel (%p441) target = $region52
      $region51: #{_lambda_.12} parent=47 // pred_region
        %p444 = scmp.lt.s32.totalorder %s24, 1
        %s445 = scalar_select %p444, %s24, 1
        %p446 = scmp.lt.s32.totalorder %s25, 3
        %s447 = scalar_select %p446, %s25, 3
        %p448 = scmp.lt.s32.totalorder %s26, 0
        %s449 = scalar_select %p448, %s26, 0
        %s450 = sadd.s32 %s449, %s447
        %s451 = smul.addr %s445, 4
        %s452 = sadd.s32 %s450, %s451
        %s453 = smul.addr %s452, 4
        %s454 = scalar_lea.vmem %s3, %s453
      $region52: #{_lambda_.12} parent=47 // pred_fallthru
        _
    $region48: #{_lambda_.12} parent=5 // pred_fallthru
      _
  $region6: #{_lambda_.12} parent=0 // loop_footer
    %s13 = sadd.s32 1, %s9
  $region7: #{_lambda_.12} parent=0 // loop_footer_branch
    %8 = sbr.rel target = $region3
  $region8: #{_lambda_.12} parent=0 // loop_exit
    _

// kernel: _lambda_.13
$region0: #{_lambda_.13}
  #allocation0 [shape = 'u32[]', space=smem, size = 0x4, offset = 0x4, fixed_abs, tag = 'smem constant byte address 0x4 - core index']
  #allocation1 [shape = 'u32[72,128]{1,0:T(1,128)}', space=vmem, size = 0x9000, scoped, tag = 'internal scratch']
  %s0 = inlined_call_operand.vmem [shape: bf16[16,32], index: 0, kind: input, shape index: {}]
  %s1 = inlined_call_operand.vmem [shape: bf16[16,32], index: 1, kind: input, shape index: {}]
  %s2 = inlined_call_operand.vmem [shape: bf16[32,32], index: 2, kind: input, shape index: {}]
  %s3 = inlined_call_operand.vmem [shape: f32[1,32], index: 3, kind: input, shape index: {}]
  %s4 = inlined_call_operand.vmem [shape: f32[1,32], index: 4, kind: input, shape index: {}]
  %s5 = inlined_call_operand.vmem [shape: f32[1,32], index: 5, kind: input, shape index: {}]
  %s6 = inlined_call_operand.vmem [shape: bf16[16,32], index: 6, kind: output, shape index: {}]
  %s7 = sld [smem:[#allocation0]]
  $region34: #{_lambda_.13} parent=0
    _
  %s9 = ssub.s32 1, %s7
  %s10 = scalar_select 0, %s9, %s7
  // Predicated region
  $region2: #{_lambda_.13} parent=0 // pred_check
    _
  $region3: #{_lambda_.13} parent=0 // pred_check_branch
    %12 = sbr.rel (0) target = $region5
  $region4: #{_lambda_.13} parent=0 // pred_region
    _
  $region5: #{_lambda_.13} parent=0 // pred_fallthru
    _
  // Predicated region
  $region6: #{_lambda_.13} parent=0 // pred_check
    _
  $region7: #{_lambda_.13} parent=0 // pred_check_branch
    %14 = sbr.rel (0) target = $region9
  $region8: #{_lambda_.13} parent=0 // pred_region
    _
  $region9: #{_lambda_.13} parent=0 // pred_fallthru
    _
  // Predicated region
  $region10: #{_lambda_.13} parent=0 // pred_check
    _
  $region11: #{_lambda_.13} parent=0 // pred_check_branch
    %16 = sbr.rel (0) target = $region13
  $region12: #{_lambda_.13} parent=0 // pred_region
    _
  $region13: #{_lambda_.13} parent=0 // pred_fallthru
    _
  // Predicated region
  $region14: #{_lambda_.13} parent=0 // pred_check
    _
  $region15: #{_lambda_.13} parent=0 // pred_check_branch
    %18 = sbr.rel (0) target = $region17
  $region16: #{_lambda_.13} parent=0 // pred_region
    _
  $region17: #{_lambda_.13} parent=0 // pred_fallthru
    _
  // Predicated region
  $region18: #{_lambda_.13} parent=0 // pred_check
    _
  $region19: #{_lambda_.13} parent=0 // pred_check_branch
    %20 = sbr.rel (0) target = $region21
  $region20: #{_lambda_.13} parent=0 // pred_region
    _
  $region21: #{_lambda_.13} parent=0 // pred_fallthru
    _
  // Predicated region
  $region22: #{_lambda_.13} parent=0 // pred_check
    _
  $region23: #{_lambda_.13} parent=0 // pred_check_branch
    %22 = sbr.rel (0) target = $region25
  $region24: #{_lambda_.13} parent=0 // pred_region
    _
  $region25: #{_lambda_.13} parent=0 // pred_fallthru
    _
  %v24 = vld [vmem:[%s0] sm:$0xf]
  %v25 = vld [vmem:[%s0 + $0x4] sm:$0xf]
  %v26 = vld [vmem:[%s2] sm:$0xf]
  %v27 = vld [vmem:[%s2 + $0x4] sm:$0xf]
  %v28 = vld [vmem:[%s2 + $0x8] sm:$0xf]
  %v29 = vld [vmem:[%s2 + $0xc] sm:$0xf]
  %v30 = vld [vmem:[%s3] sm:$0x1]
  %v32 = vperm.slane %v30, 0
  %v36 = vunpack.c.l.b16 %v24
  %v37 = vunpack.c.l.b16 %v25
  %v38 = vpack.c.b16 %v37, %v36
  %v43 = vunpack.c.l.b16 %v26
  %v44 = vunpack.c.l.b16 %v27
  %v45 = vunpack.c.l.b16 %v28
  %v46 = vunpack.c.l.b16 %v29
  %v47 = vpack.c.b16 %v44, %v43
  %v48 = vpack.c.b16 %v46, %v45
  %vm51 = vcmask 261120
  %v53 = vsel %vm51, %v38, 0
  %55 = vmatpush.bf16.msra.mxu0 0
  %56 = vmatpush.bf16.msra.mxu0 0
  %57 = vmatpush.bf16.msra.mxu0 0
  %58 = vmatpush.bf16.msra.mxu0 0
  %59 = vmatpush.bf16.msra.mxu0 0
  %60 = vmatpush.bf16.msra.mxu0 0
  %61 = vmatpush.bf16.msra.mxu0 %v48
  %62 = vmatpush.bf16.msra.mxu0 %v47
  %63 = vmatmul.bf16.gmra.mxu0 %v53
  %v64 = vpop.f32.mrf.mxu0
  %v65 = vadd.f32 %v32, %v64
  %v66 = vpop.f32.mrf.mxu0
  %v67 = vadd.f32 %v32, %v66
  %68 = vdwg.mxu0
  %v69 = vld [vmem:[%s1] sm:$0xf]
  %v70 = vld [vmem:[%s1 + $0x4] sm:$0xf]
  %v71 = vunpack.c.l.bf16 %v69
  %v72 = vunpack.c.l.bf16 %v70
  %v73 = vadd.f32 %v71, %v65
  %v74 = vadd.f32 %v72, %v67
  %v75 = vsel %vm51, %v73, 0.0
  %76 = vadd.xlane.f32.xlu0 %v75
  %v77 = vpop.xlane.xlu0 %76
  %v78 = vsel %vm51, %v74, 0.0
  %79 = vadd.xlane.f32.xlu0 %v78
  %v80 = vpop.xlane.xlu0 %79
  %v81 = vrcp.pop 32.0
  %v82 = vmul.f32 32.0, %v81
  %v83 = vsub.f32 1.0, %v82
  %v84 = vmul.f32 %v81, %v83
  %v85 = vadd.f32 %v81, %v84
  %vm86 = vweird.f32 %v81
  %v87 = vsel %vm86, %v81, %v85
  %v88 = vmul.f32 %v77, %v87
  %v89 = vmul.f32 %v80, %v87
  %v90 = vsub.f32 %v73, %v88
  %v91 = vsub.f32 %v74, %v89
  %v92 = vmul.f32 %v90, %v90
  %v93 = vmul.f32 %v91, %v91
  %v94 = vsel %vm51, %v92, 0.0
  %95 = vadd.xlane.f32.xlu0 %v94
  %v96 = vpop.xlane.xlu0 %95
  %v97 = vsel %vm51, %v93, 0.0
  %98 = vadd.xlane.f32.xlu0 %v97
  %v99 = vpop.xlane.xlu0 %98
  %v100 = vmul.f32 %v96, %v87
  %v101 = vmul.f32 %v99, %v87
  %v102 = vadd.f32 %v100, 1e-05
  %v103 = vadd.f32 %v101, 1e-05
  %v104 = vrsqrt.pop %v102
  %v105 = vmul.f32 %v104, %v102
  %v106 = vmul.f32 %v105, %v104
  %v107 = vmul.f32 0.5, %v106
  %v108 = vsub.f32 1.5, %v107
  %v109 = vmul.f32 %v104, %v108
  %vm110 = vweird.f32 %v102
  %vm111 = vweird.f32 %v104
  %vm112 = vmor %vm110, %vm111
  %v113 = vsel %vm112, %v104, %v109
  %v114 = vrsqrt.pop %v103
  %v115 = vmul.f32 %v114, %v103
  %v116 = vmul.f32 %v115, %v114
  %v117 = vmul.f32 0.5, %v116
  %v118 = vsub.f32 1.5, %v117
  %v119 = vmul.f32 %v114, %v118
  %vm120 = vweird.f32 %v103
  %vm121 = vweird.f32 %v114
  %vm122 = vmor %vm120, %vm121
  %v123 = vsel %vm122, %v114, %v119
  %v124 = vmul.f32 %v90, %v113
  %v125 = vmul.f32 %v91, %v123
  %v126 = vld [vmem:[%s4] sm:$0x1]
  %v128 = vperm.slane %v126, 0
  %v130 = vmul.f32 %v124, %v128
  %v131 = vmul.f32 %v125, %v128
  %v132 = vld [vmem:[%s5] sm:$0x1]
  %v134 = vperm.slane %v132, 0
  %v136 = vadd.f32 %v130, %v134
  %v137 = vadd.f32 %v131, %v134
  %v138 = vpack.c.bf16 %v136, %v136
  %v139 = vpack.c.bf16 %v137, %v137
  %vm140 = vcmask 257024
  %141 = vst.msk [vmem:[%s6] sm:$0xf] %vm140, %v138
  %142 = vst.msk [vmem:[%s6 + $0x4] sm:$0xf] %vm140, %v139
  // Predicated region
  $region26: #{_lambda_.13} parent=0 // pred_check
    _
  $region27: #{_lambda_.13} parent=0 // pred_check_branch
    %144 = sbr.rel (0) target = $region29
  $region28: #{_lambda_.13} parent=0 // pred_region
    _
  $region29: #{_lambda_.13} parent=0 // pred_fallthru
    _
  // Predicated region
  $region30: #{_lambda_.13} parent=0 // pred_check
    _
  $region31: #{_lambda_.13} parent=0 // pred_check_branch
    %146 = sbr.rel (0) target = $region33
  $region32: #{_lambda_.13} parent=0 // pred_region
    _
  $region33: #{_lambda_.13} parent=0 // pred_fallthru
    _

// kernel: _lambda_.19
$region0: #{_lambda_.19}
  #allocation0 [shape = 'u32[]', space=smem, size = 0x4, offset = 0x4, fixed_abs, tag = 'smem constant byte address 0x4 - core index']
  #allocation1 [shape = 'u32[72,128]{1,0:T(1,128)}', space=vmem, size = 0x9000, scoped, tag = 'internal scratch']
  %s0 = inlined_call_operand.vmem [shape: bf16[16,32], index: 0, kind: input, shape index: {}]
  %s1 = inlined_call_operand.vmem [shape: bf16[32,128], index: 1, kind: input, shape index: {}]
  %s2 = inlined_call_operand.vmem [shape: f32[1,128], index: 2, kind: input, shape index: {}]
  %s3 = inlined_call_operand.vmem [shape: f32[16,128], index: 3, kind: output, shape index: {}]
  %s4 = sld [smem:[#allocation0]]
  $region22: #{_lambda_.19} parent=0
    _
  %s6 = ssub.s32 1, %s4
  %s7 = scalar_select 0, %s6, %s4
  // Predicated region
  $region2: #{_lambda_.19} parent=0 // pred_check
    _
  $region3: #{_lambda_.19} parent=0 // pred_check_branch
    %9 = sbr.rel (0) target = $region5
  $region4: #{_lambda_.19} parent=0 // pred_region
    _
  $region5: #{_lambda_.19} parent=0 // pred_fallthru
    _
  // Predicated region
  $region6: #{_lambda_.19} parent=0 // pred_check
    _
  $region7: #{_lambda_.19} parent=0 // pred_check_branch
    %11 = sbr.rel (0) target = $region9
  $region8: #{_lambda_.19} parent=0 // pred_region
    _
  $region9: #{_lambda_.19} parent=0 // pred_fallthru
    _
  // Predicated region
  $region10: #{_lambda_.19} parent=0 // pred_check
    _
  $region11: #{_lambda_.19} parent=0 // pred_check_branch
    %13 = sbr.rel (0) target = $region13
  $region12: #{_lambda_.19} parent=0 // pred_region
    _
  $region13: #{_lambda_.19} parent=0 // pred_fallthru
    _
  %v15 = vld [vmem:[%s0] sm:$0xf]
  %v16 = vld [vmem:[%s0 + $0x4] sm:$0xf]
  %v17 = vld [vmem:[%s1] sm:$0xf]
  %v18 = vld [vmem:[%s1 + $0x4] sm:$0xf]
  %v19 = vld [vmem:[%s1 + $0x8] sm:$0xf]
  %v20 = vld [vmem:[%s1 + $0xc] sm:$0xf]
  %v21 = vld [vmem:[%s2] sm:$0x1]
  %v23 = vperm.slane %v21, 0
  %v27 = vunpack.c.l.b16 %v15
  %v28 = vunpack.c.l.b16 %v16
  %v29 = vpack.c.b16 %v28, %v27
  %v34 = vunpack.c.l.b16 %v17
  %v35 = vunpack.c.l.b16 %v18
  %v36 = vunpack.c.l.b16 %v19
  %v37 = vunpack.c.l.b16 %v20
  %v38 = vpack.c.b16 %v35, %v34
  %v39 = vpack.c.b16 %v37, %v36
  %vm42 = vcmask 261120
  %v44 = vsel %vm42, %v29, 0
  %46 = vmatpush.bf16.msra.mxu0 0
  %47 = vmatpush.bf16.msra.mxu0 0
  %48 = vmatpush.bf16.msra.mxu0 0
  %49 = vmatpush.bf16.msra.mxu0 0
  %50 = vmatpush.bf16.msra.mxu0 0
  %51 = vmatpush.bf16.msra.mxu0 0
  %52 = vmatpush.bf16.msra.mxu0 %v39
  %53 = vmatpush.bf16.msra.mxu0 %v38
  %54 = vmatmul.bf16.gmra.mxu0 %v44
  %v55 = vpop.f32.mrf.mxu0
  %v56 = vadd.f32 %v23, %v55
  %v57 = vpop.f32.mrf.mxu0
  %v58 = vadd.f32 %v23, %v57
  %59 = vdwg.mxu0
  %60 = vst [vmem:[%s3] sm:$0xff] %v56
  %61 = vst [vmem:[%s3 + $0x8] sm:$0xff] %v58
  // Predicated region
  $region14: #{_lambda_.19} parent=0 // pred_check
    _
  $region15: #{_lambda_.19} parent=0 // pred_check_branch
    %63 = sbr.rel (0) target = $region17
  $region16: #{_lambda_.19} parent=0 // pred_region
    _
  $region17: #{_lambda_.19} parent=0 // pred_fallthru
    _
  // Predicated region
  $region18: #{_lambda_.19} parent=0 // pred_check
    _
  $region19: #{_lambda_.19} parent=0 // pred_check_branch
    %65 = sbr.rel (0) target = $region21
  $region20: #{_lambda_.19} parent=0 // pred_region
    _
  $region21: #{_lambda_.19} parent=0 // pred_fallthru
    _

// kernel: _lambda_.18
$region0: #{_lambda_.18}
  #allocation0 [shape = 'u32[]', space=smem, size = 0x4, offset = 0x4, fixed_abs, tag = 'smem constant byte address 0x4 - core index']
  #allocation1 [shape = 'u32[72,128]{1,0:T(1,128)}', space=vmem, size = 0x9000, scoped, tag = 'internal scratch']
  %s0 = inlined_call_operand.vmem [shape: bf16[16,32], index: 0, kind: input, shape index: {}]
  %s1 = inlined_call_operand.hbm [shape: bf16[32,2048], index: 1, kind: input, shape index: {}]
  %s2 = inlined_call_operand.vmem [shape: f32[1,2048], index: 2, kind: input, shape index: {}]
  %s3 = inlined_call_operand.vmem [shape: bf16[2048,32], index: 3, kind: input, shape index: {}]
  %s4 = inlined_call_operand.vmem [shape: f32[1,32], index: 4, kind: input, shape index: {}]
  %s5 = inlined_call_operand.vmem [shape: f32[1,32], index: 5, kind: input, shape index: {}]
  %s6 = inlined_call_operand.vmem [shape: f32[1,32], index: 6, kind: input, shape index: {}]
  %s7 = inlined_call_operand.vmem [shape: bf16[16,32], index: 7, kind: output, shape index: {}]
  %s8 = sld [smem:[#allocation0]]
  $region42: #{_lambda_.18} parent=0
    _
  %s10 = ssub.s32 1, %s8
  %s11 = scalar_select 0, %s10, %s8
  $region1: #{_lambda_.18} parent=0
    #allocation2 [shape = 'u8[131072]{0}', space=vmem, size = 0x20000, scoped, tag = 'input window, operand 1, single buffered']
    #allocation3 [shape = 's32[1]{0}', space=sflag, size = 0x4, scoped, tag = 'scoped memory for _lambda_.18']
    %12 = vsyncpa [#allocation3], 0
    // Predicated region
    $region2: #{_lambda_.18} parent=1 // pred_check
      _
    $region3: #{_lambda_.18} parent=1 // pred_check_branch
      %14 = sbr.rel (0) target = $region5
    $region4: #{_lambda_.18} parent=1 // pred_region
      _
    $region5: #{_lambda_.18} parent=1 // pred_fallthru
      _
    // Predicated region
    $region6: #{_lambda_.18} parent=1 // pred_check
      _
    $region7: #{_lambda_.18} parent=1 // pred_check_branch
      %16 = sbr.rel (0) target = $region9
    $region8: #{_lambda_.18} parent=1 // pred_region
      %18 = vsyncadd [#allocation3], 0
      %s19 = sshll.u32 %s1, 4
      %s20 = int_to_ptr.hbm [resolvable:$true] %s19
      %s21 = sshll.u32 [#allocation2], 4
      %s22 = int_to_ptr.vmem [resolvable:$true] %s21
      %27 = dma.hbm_to_vmem [thread:$0]  %s20, 4096, %s22, [#allocation3], 1024, 1024, 64
    $region9: #{_lambda_.18} parent=1 // pred_fallthru
      _
    // Predicated region
    $region10: #{_lambda_.18} parent=1 // pred_check
      _
    $region11: #{_lambda_.18} parent=1 // pred_check_branch
      %29 = sbr.rel (0) target = $region13
    $region12: #{_lambda_.18} parent=1 // pred_region
      _
    $region13: #{_lambda_.18} parent=1 // pred_fallthru
      _
    // Predicated region
    $region14: #{_lambda_.18} parent=1 // pred_check
      _
    $region15: #{_lambda_.18} parent=1 // pred_check_branch
      %31 = sbr.rel (0) target = $region17
    $region16: #{_lambda_.18} parent=1 // pred_region
      _
    $region17: #{_lambda_.18} parent=1 // pred_fallthru
      _
    // Predicated region
    $region18: #{_lambda_.18} parent=1 // pred_check
      _
    $region19: #{_lambda_.18} parent=1 // pred_check_branch
      %33 = sbr.rel (0) target = $region21
    $region20: #{_lambda_.18} parent=1 // pred_region
      _
    $region21: #{_lambda_.18} parent=1 // pred_fallthru
      _
    // Predicated region
    $region22: #{_lambda_.18} parent=1 // pred_check
      _
    $region23: #{_lambda_.18} parent=1 // pred_check_branch
      %35 = sbr.rel (0) target = $region25
    $region24: #{_lambda_.18} parent=1 // pred_region
      _
    $region25: #{_lambda_.18} parent=1 // pred_fallthru
      _
    // Predicated region
    $region26: #{_lambda_.18} parent=1 // pred_check
      _
    $region27: #{_lambda_.18} parent=1 // pred_check_branch
      %37 = sbr.rel (0) target = $region29
    $region28: #{_lambda_.18} parent=1 // pred_region
      _
    $region29: #{_lambda_.18} parent=1 // pred_fallthru
      _
    // Predicated region
    $region30: #{_lambda_.18} parent=1 // pred_check
      _
    $region31: #{_lambda_.18} parent=1 // pred_check_branch
      %39 = sbr.rel (0) target = $region33
    $region32: #{_lambda_.18} parent=1 // pred_region
      %41 = dma.done [#allocation3], 4096
    $region33: #{_lambda_.18} parent=1 // pred_fallthru
      _
    %v43 = vld [vmem:[%s0] sm:$0xf]
    %v44 = vld [vmem:[%s0 + $0x4] sm:$0xf]
    %v45 = vld [vmem:[#allocation2] sm:$0xff]
    %v46 = vld [vmem:[#allocation2 + $0x8] sm:$0xff]
    %v47 = vld [vmem:[#allocation2 + $0x10] sm:$0xff]
    %v48 = vld [vmem:[#allocation2 + $0x18] sm:$0xff]
    %v49 = vld [vmem:[#allocation2 + $0x20] sm:$0xff]
    %v50 = vld [vmem:[#allocation2 + $0x28] sm:$0xff]
    %v51 = vld [vmem:[#allocation2 + $0x30] sm:$0xff]
    %v52 = vld [vmem:[#allocation2 + $0x38] sm:$0xff]
    %v53 = vld [vmem:[#allocation2 + $0x40] sm:$0xff]
    %v54 = vld [vmem:[#allocation2 + $0x48] sm:$0xff]
    %v55 = vld [vmem:[#allocation2 + $0x50] sm:$0xff]
    %v56 = vld [vmem:[#allocation2 + $0x58] sm:$0xff]
    %v57 = vld [vmem:[#allocation2 + $0x60] sm:$0xff]
    %v58 = vld [vmem:[#allocation2 + $0x68] sm:$0xff]
    %v59 = vld [vmem:[#allocation2 + $0x70] sm:$0xff]
    %v60 = vld [vmem:[#allocation2 + $0x78] sm:$0xff]
    %v61 = vld [vmem:[#allocation2 + $0x80] sm:$0xff]
    %v62 = vld [vmem:[#allocation2 + $0x88] sm:$0xff]
    %v63 = vld [vmem:[#allocation2 + $0x90] sm:$0xff]
    %v64 = vld [vmem:[#allocation2 + $0x98] sm:$0xff]
    %v65 = vld [vmem:[#allocation2 + $0xa0] sm:$0xff]
    %v66 = vld [vmem:[#allocation2 + $0xa8] sm:$0xff]
    %v67 = vld [vmem:[#allocation2 + $0xb0] sm:$0xff]
    %v68 = vld [vmem:[#allocation2 + $0xb8] sm:$0xff]
    %v69 = vld [vmem:[#allocation2 + $0xc0] sm:$0xff]
    %v70 = vld [vmem:[#allocation2 + $0xc8] sm:$0xff]
    %v71 = vld [vmem:[#allocation2 + $0xd0] sm:$0xff]
    %v72 = vld [vmem:[#allocation2 + $0xd8] sm:$0xff]
    %v73 = vld [vmem:[#allocation2 + $0xe0] sm:$0xff]
    %v74 = vld [vmem:[#allocation2 + $0xe8] sm:$0xff]
    %v75 = vld [vmem:[#allocation2 + $0xf0] sm:$0xff]
    %v76 = vld [vmem:[#allocation2 + $0xf8] sm:$0xff]
    %v77 = vld [vmem:[%s2] sm:$0xff]
    %v78 = vld [vmem:[%s2 + $0x8] sm:$0xff]
    %v81 = vperm.slane %v77, 0
    %v82 = vperm.slane %v77, 1
    %v83 = vperm.slane %v77, 2
    %v84 = vperm.slane %v77, 3
    %v85 = vperm.slane %v77, 4
    %v86 = vperm.slane %v77, 5
    %v87 = vperm.slane %v77, 6
    %v88 = vperm.slane %v77, 7
    %v89 = vperm.slane %v78, 0
    %v90 = vperm.slane %v78, 1
    %v91 = vperm.slane %v78, 2
    %v92 = vperm.slane %v78, 3
    %v93 = vperm.slane %v78, 4
    %v94 = vperm.slane %v78, 5
    %v95 = vperm.slane %v78, 6
    %v96 = vperm.slane %v78, 7
    %v115 = vunpack.c.l.b16 %v43
    %v116 = vunpack.c.l.b16 %v44
    %v117 = vpack.c.b16 %v116, %v115
    %v150 = vunpack.c.l.b16 %v45
    %v151 = vunpack.c.h.b16 %v45
    %v152 = vunpack.c.l.b16 %v46
    %v153 = vunpack.c.h.b16 %v46
    %v154 = vunpack.c.l.b16 %v47
    %v155 = vunpack.c.h.b16 %v47
    %v156 = vunpack.c.l.b16 %v48
    %v157 = vunpack.c.h.b16 %v48
    %v158 = vunpack.c.l.b16 %v49
    %v159 = vunpack.c.h.b16 %v49
    %v160 = vunpack.c.l.b16 %v50
    %v161 = vunpack.c.h.b16 %v50
    %v162 = vunpack.c.l.b16 %v51
    %v163 = vunpack.c.h.b16 %v51
    %v164 = vunpack.c.l.b16 %v52
    %v165 = vunpack.c.h.b16 %v52
    %v166 = vunpack.c.l.b16 %v53
    %v167 = vunpack.c.h.b16 %v53
    %v168 = vunpack.c.l.b16 %v54
    %v169 = vunpack.c.h.b16 %v54
    %v170 = vunpack.c.l.b16 %v55
    %v171 = vunpack.c.h.b16 %v55
    %v172 = vunpack.c.l.b16 %v56
    %v173 = vunpack.c.h.b16 %v56
    %v174 = vunpack.c.l.b16 %v57
    %v175 = vunpack.c.h.b16 %v57
    %v176 = vunpack.c.l.b16 %v58
    %v177 = vunpack.c.h.b16 %v58
    %v178 = vunpack.c.l.b16 %v59
    %v179 = vunpack.c.h.b16 %v59
    %v180 = vunpack.c.l.b16 %v60
    %v181 = vunpack.c.h.b16 %v60
    %v182 = vunpack.c.l.b16 %v61
    %v183 = vunpack.c.h.b16 %v61
    %v184 = vunpack.c.l.b16 %v62
    %v185 = vunpack.c.h.b16 %v62
    %v186 = vunpack.c.l.b16 %v63
    %v187 = vunpack.c.h.b16 %v63
    %v188 = vunpack.c.l.b16 %v64
    %v189 = vunpack.c.h.b16 %v64
    %v190 = vunpack.c.l.b16 %v65
    %v191 = vunpack.c.h.b16 %v65
    %v192 = vunpack.c.l.b16 %v66
    %v193 = vunpack.c.h.b16 %v66
    %v194 = vunpack.c.l.b16 %v67
    %v195 = vunpack.c.h.b16 %v67
    %v196 = vunpack.c.l.b16 %v68
    %v197 = vunpack.c.h.b16 %v68
    %v198 = vunpack.c.l.b16 %v69
    %v199 = vunpack.c.h.b16 %v69
    %v200 = vunpack.c.l.b16 %v70
    %v201 = vunpack.c.h.b16 %v70
    %v202 = vunpack.c.l.b16 %v71
    %v203 = vunpack.c.h.b16 %v71
    %v204 = vunpack.c.l.b16 %v72
    %v205 = vunpack.c.h.b16 %v72
    %v206 = vunpack.c.l.b16 %v73
    %v207 = vunpack.c.h.b16 %v73
    %v208 = vunpack.c.l.b16 %v74
    %v209 = vunpack.c.h.b16 %v74
    %v210 = vunpack.c.l.b16 %v75
    %v211 = vunpack.c.h.b16 %v75
    %v212 = vunpack.c.l.b16 %v76
    %v213 = vunpack.c.h.b16 %v76
    %v214 = vpack.c.b16 %v166, %v150
    %v215 = vpack.c.b16 %v167, %v151
    %v216 = vpack.c.b16 %v168, %v152
    %v217 = vpack.c.b16 %v169, %v153
    %v218 = vpack.c.b16 %v170, %v154
    %v219 = vpack.c.b16 %v171, %v155
    %v220 = vpack.c.b16 %v172, %v156
    %v221 = vpack.c.b16 %v173, %v157
    %v222 = vpack.c.b16 %v174, %v158
    %v223 = vpack.c.b16 %v175, %v159
    %v224 = vpack.c.b16 %v176, %v160
    %v225 = vpack.c.b16 %v177, %v161
    %v226 = vpack.c.b16 %v178, %v162
    %v227 = vpack.c.b16 %v179, %v163
    %v228 = vpack.c.b16 %v180, %v164
    %v229 = vpack.c.b16 %v181, %v165
    %v230 = vpack.c.b16 %v198, %v182
    %v231 = vpack.c.b16 %v199, %v183
    %v232 = vpack.c.b16 %v200, %v184
    %v233 = vpack.c.b16 %v201, %v185
    %v234 = vpack.c.b16 %v202, %v186
    %v235 = vpack.c.b16 %v203, %v187
    %v236 = vpack.c.b16 %v204, %v188
    %v237 = vpack.c.b16 %v205, %v189
    %v238 = vpack.c.b16 %v206, %v190
    %v239 = vpack.c.b16 %v207, %v191
    %v240 = vpack.c.b16 %v208, %v192
    %v241 = vpack.c.b16 %v209, %v193
    %v242 = vpack.c.b16 %v210, %v194
    %v243 = vpack.c.b16 %v211, %v195
    %v244 = vpack.c.b16 %v212, %v196
    %v245 = vpack.c.b16 %v213, %v197
    %vm278 = vcmask 261120
    %v280 = vsel %vm278, %v117, 0
    %282 = vmatpush.bf16.msra.mxu0 0
    %283 = vmatpush.bf16.msra.mxu0 0
    %284 = vmatpush.bf16.msra.mxu0 0
    %285 = vmatpush.bf16.msra.mxu0 0
    %286 = vmatpush.bf16.msra.mxu0 0
    %287 = vmatpush.bf16.msra.mxu0 0
    %288 = vmatpush.bf16.msra.mxu0 %v230
    %289 = vmatpush.bf16.msra.mxu0 %v214
    %290 = vmatmul.bf16.gmra.mxu0 %v280
    %v291 = vpop.f32.mrf.mxu0
    %v292 = vadd.f32 %v81, %v291
    %v293 = vpop.f32.mrf.mxu0
    %v294 = vadd.f32 %v81, %v293
    %295 = vdwg.mxu0
    %296 = vmatpush.bf16.msra.mxu0 0
    %297 = vmatpush.bf16.msra.mxu0 0
    %298 = vmatpush.bf16.msra.mxu0 0
    %299 = vmatpush.bf16.msra.mxu0 0
    %300 = vmatpush.bf16.msra.mxu0 0
    %301 = vmatpush.bf16.msra.mxu0 0
    %302 = vmatpush.bf16.msra.mxu0 %v231
    %303 = vmatpush.bf16.msra.mxu0 %v215
    %304 = vmatmul.bf16.gmra.mxu0 %v280
    %v305 = vpop.f32.mrf.mxu0
    %v306 = vadd.f32 %v82, %v305
    %v307 = vpop.f32.mrf.mxu0
    %v308 = vadd.f32 %v82, %v307
    %309 = vdwg.mxu0
    %310 = vmatpush.bf16.msra.mxu0 0
    %311 = vmatpush.bf16.msra.mxu0 0
    %312 = vmatpush.bf16.msra.mxu0 0
    %313 = vmatpush.bf16.msra.mxu0 0
    %314 = vmatpush.bf16.msra.mxu0 0
    %315 = vmatpush.bf16.msra.mxu0 0
    %316 = vmatpush.bf16.msra.mxu0 %v232
    %317 = vmatpush.bf16.msra.mxu0 %v216
    %318 = vmatmul.bf16.gmra.mxu0 %v280
    %v319 = vpop.f32.mrf.mxu0
    %v320 = vadd.f32 %v83, %v319
    %v321 = vpop.f32.mrf.mxu0
    %v322 = vadd.f32 %v83, %v321
    %323 = vdwg.mxu0
    %324 = vmatpush.bf16.msra.mxu0 0
    %325 = vmatpush.bf16.msra.mxu0 0
    %326 = vmatpush.bf16.msra.mxu0 0
    %327 = vmatpush.bf16.msra.mxu0 0
    %328 = vmatpush.bf16.msra.mxu0 0
    %329 = vmatpush.bf16.msra.mxu0 0
    %330 = vmatpush.bf16.msra.mxu0 %v233
    %331 = vmatpush.bf16.msra.mxu0 %v217
    %332 = vmatmul.bf16.gmra.mxu0 %v280
    %v333 = vpop.f32.mrf.mxu0
    %v334 = vadd.f32 %v84, %v333
    %v335 = vpop.f32.mrf.mxu0
    %v336 = vadd.f32 %v84, %v335
    %337 = vdwg.mxu0
    %338 = vmatpush.bf16.msra.mxu0 0
    %339 = vmatpush.bf16.msra.mxu0 0
    %340 = vmatpush.bf16.msra.mxu0 0
    %341 = vmatpush.bf16.msra.mxu0 0
    %342 = vmatpush.bf16.msra.mxu0 0
    %343 = vmatpush.bf16.msra.mxu0 0
    %344 = vmatpush.bf16.msra.mxu0 %v234
    %345 = vmatpush.bf16.msra.mxu0 %v218
    %346 = vmatmul.bf16.gmra.mxu0 %v280
    %v347 = vpop.f32.mrf.mxu0
    %v348 = vadd.f32 %v85, %v347
    %v349 = vpop.f32.mrf.mxu0
    %v350 = vadd.f32 %v85, %v349
    %351 = vdwg.mxu0
    %352 = vmatpush.bf16.msra.mxu0 0
    %353 = vmatpush.bf16.msra.mxu0 0
    %354 = vmatpush.bf16.msra.mxu0 0
    %355 = vmatpush.bf16.msra.mxu0 0
    %356 = vmatpush.bf16.msra.mxu0 0
    %357 = vmatpush.bf16.msra.mxu0 0
    %358 = vmatpush.bf16.msra.mxu0 %v235
    %359 = vmatpush.bf16.msra.mxu0 %v219
    %360 = vmatmul.bf16.gmra.mxu0 %v280
    %v361 = vpop.f32.mrf.mxu0
    %v362 = vadd.f32 %v86, %v361
    %v363 = vpop.f32.mrf.mxu0
    %v364 = vadd.f32 %v86, %v363
    %365 = vdwg.mxu0
    %366 = vmatpush.bf16.msra.mxu0 0
    %367 = vmatpush.bf16.msra.mxu0 0
    %368 = vmatpush.bf16.msra.mxu0 0
    %369 = vmatpush.bf16.msra.mxu0 0
    %370 = vmatpush.bf16.msra.mxu0 0
    %371 = vmatpush.bf16.msra.mxu0 0
    %372 = vmatpush.bf16.msra.mxu0 %v236
    %373 = vmatpush.bf16.msra.mxu0 %v220
    %374 = vmatmul.bf16.gmra.mxu0 %v280
    %v375 = vpop.f32.mrf.mxu0
    %v376 = vadd.f32 %v87, %v375
    %v377 = vpop.f32.mrf.mxu0
    %v378 = vadd.f32 %v87, %v377
    %379 = vdwg.mxu0
    %380 = vmatpush.bf16.msra.mxu0 0
    %381 = vmatpush.bf16.msra.mxu0 0
    %382 = vmatpush.bf16.msra.mxu0 0
    %383 = vmatpush.bf16.msra.mxu0 0
    %384 = vmatpush.bf16.msra.mxu0 0
    %385 = vmatpush.bf16.msra.mxu0 0
    %386 = vmatpush.bf16.msra.mxu0 %v237
    %387 = vmatpush.bf16.msra.mxu0 %v221
    %388 = vmatmul.bf16.gmra.mxu0 %v280
    %v389 = vpop.f32.mrf.mxu0
    %v390 = vadd.f32 %v88, %v389
    %v391 = vpop.f32.mrf.mxu0
    %v392 = vadd.f32 %v88, %v391
    %393 = vdwg.mxu0
    %394 = vmatpush.bf16.msra.mxu0 0
    %395 = vmatpush.bf16.msra.mxu0 0
    %396 = vmatpush.bf16.msra.mxu0 0
    %397 = vmatpush.bf16.msra.mxu0 0
    %398 = vmatpush.bf16.msra.mxu0 0
    %399 = vmatpush.bf16.msra.mxu0 0
    %400 = vmatpush.bf16.msra.mxu0 %v238
    %401 = vmatpush.bf16.msra.mxu0 %v222
    %402 = vmatmul.bf16.gmra.mxu0 %v280
    %v403 = vpop.f32.mrf.mxu0
    %v404 = vadd.f32 %v89, %v403
    %v405 = vpop.f32.mrf.mxu0
    %v406 = vadd.f32 %v89, %v405
    %407 = vdwg.mxu0
    %408 = vmatpush.bf16.msra.mxu0 0
    %409 = vmatpush.bf16.msra.mxu0 0
    %410 = vmatpush.bf16.msra.mxu0 0
    %411 = vmatpush.bf16.msra.mxu0 0
    %412 = vmatpush.bf16.msra.mxu0 0
    %413 = vmatpush.bf16.msra.mxu0 0
    %414 = vmatpush.bf16.msra.mxu0 %v239
    %415 = vmatpush.bf16.msra.mxu0 %v223
    %416 = vmatmul.bf16.gmra.mxu0 %v280
    %v417 = vpop.f32.mrf.mxu0
    %v418 = vadd.f32 %v90, %v417
    %v419 = vpop.f32.mrf.mxu0
    %v420 = vadd.f32 %v90, %v419
    %421 = vdwg.mxu0
    %422 = vmatpush.bf16.msra.mxu0 0
    %423 = vmatpush.bf16.msra.mxu0 0
    %424 = vmatpush.bf16.msra.mxu0 0
    %425 = vmatpush.bf16.msra.mxu0 0
    %426 = vmatpush.bf16.msra.mxu0 0
    %427 = vmatpush.bf16.msra.mxu0 0
    %428 = vmatpush.bf16.msra.mxu0 %v240
    %429 = vmatpush.bf16.msra.mxu0 %v224
    %430 = vmatmul.bf16.gmra.mxu0 %v280
    %v431 = vpop.f32.mrf.mxu0
    %v432 = vadd.f32 %v91, %v431
    %v433 = vpop.f32.mrf.mxu0
    %v434 = vadd.f32 %v91, %v433
    %435 = vdwg.mxu0
    %436 = vmatpush.bf16.msra.mxu0 0
    %437 = vmatpush.bf16.msra.mxu0 0
    %438 = vmatpush.bf16.msra.mxu0 0
    %439 = vmatpush.bf16.msra.mxu0 0
    %440 = vmatpush.bf16.msra.mxu0 0
    %441 = vmatpush.bf16.msra.mxu0 0
    %442 = vmatpush.bf16.msra.mxu0 %v241
    %443 = vmatpush.bf16.msra.mxu0 %v225
    %444 = vmatmul.bf16.gmra.mxu0 %v280
    %v445 = vpop.f32.mrf.mxu0
    %v446 = vadd.f32 %v92, %v445
    %v447 = vpop.f32.mrf.mxu0
    %v448 = vadd.f32 %v92, %v447
    %449 = vdwg.mxu0
    %450 = vmatpush.bf16.msra.mxu0 0
    %451 = vmatpush.bf16.msra.mxu0 0
    %452 = vmatpush.bf16.msra.mxu0 0
    %453 = vmatpush.bf16.msra.mxu0 0
    %454 = vmatpush.bf16.msra.mxu0 0
    %455 = vmatpush.bf16.msra.mxu0 0
    %456 = vmatpush.bf16.msra.mxu0 %v242
    %457 = vmatpush.bf16.msra.mxu0 %v226
    %458 = vmatmul.bf16.gmra.mxu0 %v280
    %v459 = vpop.f32.mrf.mxu0
    %v460 = vadd.f32 %v93, %v459
    %v461 = vpop.f32.mrf.mxu0
    %v462 = vadd.f32 %v93, %v461
    %463 = vdwg.mxu0
    %464 = vmatpush.bf16.msra.mxu0 0
    %465 = vmatpush.bf16.msra.mxu0 0
    %466 = vmatpush.bf16.msra.mxu0 0
    %467 = vmatpush.bf16.msra.mxu0 0
    %468 = vmatpush.bf16.msra.mxu0 0
    %469 = vmatpush.bf16.msra.mxu0 0
    %470 = vmatpush.bf16.msra.mxu0 %v243
    %471 = vmatpush.bf16.msra.mxu0 %v227
    %472 = vmatmul.bf16.gmra.mxu0 %v280
    %v473 = vpop.f32.mrf.mxu0
    %v474 = vadd.f32 %v94, %v473
    %v475 = vpop.f32.mrf.mxu0
    %v476 = vadd.f32 %v94, %v475
    %477 = vdwg.mxu0
    %478 = vmatpush.bf16.msra.mxu0 0
    %479 = vmatpush.bf16.msra.mxu0 0
    %480 = vmatpush.bf16.msra.mxu0 0
    %481 = vmatpush.bf16.msra.mxu0 0
    %482 = vmatpush.bf16.msra.mxu0 0
    %483 = vmatpush.bf16.msra.mxu0 0
    %484 = vmatpush.bf16.msra.mxu0 %v244
    %485 = vmatpush.bf16.msra.mxu0 %v228
    %486 = vmatmul.bf16.gmra.mxu0 %v280
    %v487 = vpop.f32.mrf.mxu0
    %v488 = vadd.f32 %v95, %v487
    %v489 = vpop.f32.mrf.mxu0
    %v490 = vadd.f32 %v95, %v489
    %491 = vdwg.mxu0
    %492 = vmatpush.bf16.msra.mxu0 0
    %493 = vmatpush.bf16.msra.mxu0 0
    %494 = vmatpush.bf16.msra.mxu0 0
    %495 = vmatpush.bf16.msra.mxu0 0
    %496 = vmatpush.bf16.msra.mxu0 0
    %497 = vmatpush.bf16.msra.mxu0 0
    %498 = vmatpush.bf16.msra.mxu0 %v245
    %499 = vmatpush.bf16.msra.mxu0 %v229
    %500 = vmatmul.bf16.gmra.mxu0 %v280
    %v501 = vpop.f32.mrf.mxu0
    %v502 = vadd.f32 %v96, %v501
    %v503 = vpop.f32.mrf.mxu0
    %v504 = vadd.f32 %v96, %v503
    %505 = vdwg.mxu0
    %v506 = vmax.f32 %v292, 0.0
    %v507 = vmax.f32 %v306, 0.0
    %v508 = vmax.f32 %v320, 0.0
    %v509 = vmax.f32 %v334, 0.0
    %v510 = vmax.f32 %v348, 0.0
    %v511 = vmax.f32 %v362, 0.0
    %v512 = vmax.f32 %v376, 0.0
    %v513 = vmax.f32 %v390, 0.0
    %v514 = vmax.f32 %v404, 0.0
    %v515 = vmax.f32 %v418, 0.0
    %v516 = vmax.f32 %v432, 0.0
    %v517 = vmax.f32 %v446, 0.0
    %v518 = vmax.f32 %v460, 0.0
    %v519 = vmax.f32 %v474, 0.0
    %v520 = vmax.f32 %v488, 0.0
    %v521 = vmax.f32 %v502, 0.0
    %v522 = vmax.f32 %v294, 0.0
    %v523 = vmax.f32 %v308, 0.0
    %v524 = vmax.f32 %v322, 0.0
    %v525 = vmax.f32 %v336, 0.0
    %v526 = vmax.f32 %v350, 0.0
    %v527 = vmax.f32 %v364, 0.0
    %v528 = vmax.f32 %v378, 0.0
    %v529 = vmax.f32 %v392, 0.0
    %v530 = vmax.f32 %v406, 0.0
    %v531 = vmax.f32 %v420, 0.0
    %v532 = vmax.f32 %v434, 0.0
    %v533 = vmax.f32 %v448, 0.0
    %v534 = vmax.f32 %v462, 0.0
    %v535 = vmax.f32 %v476, 0.0
    %v536 = vmax.f32 %v490, 0.0
    %v537 = vmax.f32 %v504, 0.0
    %v538 = vpack.c.bf16 %v522, %v506
    %v539 = vpack.c.bf16 %v523, %v507
    %v540 = vpack.c.bf16 %v524, %v508
    %v541 = vpack.c.bf16 %v525, %v509
    %v542 = vpack.c.bf16 %v526, %v510
    %v543 = vpack.c.bf16 %v527, %v511
    %v544 = vpack.c.bf16 %v528, %v512
    %v545 = vpack.c.bf16 %v529, %v513
    %v546 = vpack.c.bf16 %v530, %v514
    %v547 = vpack.c.bf16 %v531, %v515
    %v548 = vpack.c.bf16 %v532, %v516
    %v549 = vpack.c.bf16 %v533, %v517
    %v550 = vpack.c.bf16 %v534, %v518
    %v551 = vpack.c.bf16 %v535, %v519
    %v552 = vpack.c.bf16 %v536, %v520
    %v553 = vpack.c.bf16 %v537, %v521
    %v554 = vld [vmem:[%s3] sm:$0xf]
    %v555 = vld [vmem:[%s3 + $0x4] sm:$0xf]
    %v556 = vld [vmem:[%s3 + $0x8] sm:$0xf]
    %v557 = vld [vmem:[%s3 + $0xc] sm:$0xf]
    %v558 = vld [vmem:[%s3 + $0x10] sm:$0xf]
    %v559 = vld [vmem:[%s3 + $0x14] sm:$0xf]
    %v560 = vld [vmem:[%s3 + $0x18] sm:$0xf]
    %v561 = vld [vmem:[%s3 + $0x1c] sm:$0xf]
    %v562 = vld [vmem:[%s3 + $0x20] sm:$0xf]
    %v563 = vld [vmem:[%s3 + $0x24] sm:$0xf]
    %v564 = vld [vmem:[%s3 + $0x28] sm:$0xf]
    %v565 = vld [vmem:[%s3 + $0x2c] sm:$0xf]
    %v566 = vld [vmem:[%s3 + $0x30] sm:$0xf]
    %v567 = vld [vmem:[%s3 + $0x34] sm:$0xf]
    %v568 = vld [vmem:[%s3 + $0x38] sm:$0xf]
    %v569 = vld [vmem:[%s3 + $0x3c] sm:$0xf]
    %v570 = vld [vmem:[%s3 + $0x40] sm:$0xf]
    %v571 = vld [vmem:[%s3 + $0x44] sm:$0xf]
    %v572 = vld [vmem:[%s3 + $0x48] sm:$0xf]
    %v573 = vld [vmem:[%s3 + $0x4c] sm:$0xf]
    %v574 = vld [vmem:[%s3 + $0x50] sm:$0xf]
    %v575 = vld [vmem:[%s3 + $0x54] sm:$0xf]
    %v576 = vld [vmem:[%s3 + $0x58] sm:$0xf]
    %v577 = vld [vmem:[%s3 + $0x5c] sm:$0xf]
    %v578 = vld [vmem:[%s3 + $0x60] sm:$0xf]
    %v579 = vld [vmem:[%s3 + $0x64] sm:$0xf]
    %v580 = vld [vmem:[%s3 + $0x68] sm:$0xf]
    %v581 = vld [vmem:[%s3 + $0x6c] sm:$0xf]
    %v582 = vld [vmem:[%s3 + $0x70] sm:$0xf]
    %v583 = vld [vmem:[%s3 + $0x74] sm:$0xf]
    %v584 = vld [vmem:[%s3 + $0x78] sm:$0xf]
    %v585 = vld [vmem:[%s3 + $0x7c] sm:$0xf]
    %v586 = vld [vmem:[%s3 + $0x80] sm:$0xf]
    %v587 = vld [vmem:[%s3 + $0x84] sm:$0xf]
    %v588 = vld [vmem:[%s3 + $0x88] sm:$0xf]
    %v589 = vld [vmem:[%s3 + $0x8c] sm:$0xf]
    %v590 = vld [vmem:[%s3 + $0x90] sm:$0xf]
    %v591 = vld [vmem:[%s3 + $0x94] sm:$0xf]
    %v592 = vld [vmem:[%s3 + $0x98] sm:$0xf]
    %v593 = vld [vmem:[%s3 + $0x9c] sm:$0xf]
    %v594 = vld [vmem:[%s3 + $0xa0] sm:$0xf]
    %v595 = vld [vmem:[%s3 + $0xa4] sm:$0xf]
    %v596 = vld [vmem:[%s3 + $0xa8] sm:$0xf]
    %v597 = vld [vmem:[%s3 + $0xac] sm:$0xf]
    %v598 = vld [vmem:[%s3 + $0xb0] sm:$0xf]
    %v599 = vld [vmem:[%s3 + $0xb4] sm:$0xf]
    %v600 = vld [vmem:[%s3 + $0xb8] sm:$0xf]
    %v601 = vld [vmem:[%s3 + $0xbc] sm:$0xf]
    %v602 = vld [vmem:[%s3 + $0xc0] sm:$0xf]
    %v603 = vld [vmem:[%s3 + $0xc4] sm:$0xf]
    %v604 = vld [vmem:[%s3 + $0xc8] sm:$0xf]
    %v605 = vld [vmem:[%s3 + $0xcc] sm:$0xf]
    %v606 = vld [vmem:[%s3 + $0xd0] sm:$0xf]
    %v607 = vld [vmem:[%s3 + $0xd4] sm:$0xf]
    %v608 = vld [vmem:[%s3 + $0xd8] sm:$0xf]
    %v609 = vld [vmem:[%s3 + $0xdc] sm:$0xf]
    %v610 = vld [vmem:[%s3 + $0xe0] sm:$0xf]
    %v611 = vld [vmem:[%s3 + $0xe4] sm:$0xf]
    %v612 = vld [vmem:[%s3 + $0xe8] sm:$0xf]
    %v613 = vld [vmem:[%s3 + $0xec] sm:$0xf]
    %v614 = vld [vmem:[%s3 + $0xf0] sm:$0xf]
    %v615 = vld [vmem:[%s3 + $0xf4] sm:$0xf]
    %v616 = vld [vmem:[%s3 + $0xf8] sm:$0xf]
    %v617 = vld [vmem:[%s3 + $0xfc] sm:$0xf]
    %v618 = vld [vmem:[%s3 + $0x100] sm:$0xf]
    %v619 = vld [vmem:[%s3 + $0x104] sm:$0xf]
    %v620 = vld [vmem:[%s3 + $0x108] sm:$0xf]
    %v621 = vld [vmem:[%s3 + $0x10c] sm:$0xf]
    %v622 = vld [vmem:[%s3 + $0x110] sm:$0xf]
    %v623 = vld [vmem:[%s3 + $0x114] sm:$0xf]
    %v624 = vld [vmem:[%s3 + $0x118] sm:$0xf]
    %v625 = vld [vmem:[%s3 + $0x11c] sm:$0xf]
    %v626 = vld [vmem:[%s3 + $0x120] sm:$0xf]
    %v627 = vld [vmem:[%s3 + $0x124] sm:$0xf]
    %v628 = vld [vmem:[%s3 + $0x128] sm:$0xf]
    %v629 = vld [vmem:[%s3 + $0x12c] sm:$0xf]
    %v630 = vld [vmem:[%s3 + $0x130] sm:$0xf]
    %v631 = vld [vmem:[%s3 + $0x134] sm:$0xf]
    %v632 = vld [vmem:[%s3 + $0x138] sm:$0xf]
    %v633 = vld [vmem:[%s3 + $0x13c] sm:$0xf]
    %v634 = vld [vmem:[%s3 + $0x140] sm:$0xf]
    %v635 = vld [vmem:[%s3 + $0x144] sm:$0xf]
    %v636 = vld [vmem:[%s3 + $0x148] sm:$0xf]
    %v637 = vld [vmem:[%s3 + $0x14c] sm:$0xf]
    %v638 = vld [vmem:[%s3 + $0x150] sm:$0xf]
    %v639 = vld [vmem:[%s3 + $0x154] sm:$0xf]
    %v640 = vld [vmem:[%s3 + $0x158] sm:$0xf]
    %v641 = vld [vmem:[%s3 + $0x15c] sm:$0xf]
    %v642 = vld [vmem:[%s3 + $0x160] sm:$0xf]
    %v643 = vld [vmem:[%s3 + $0x164] sm:$0xf]
    %v644 = vld [vmem:[%s3 + $0x168] sm:$0xf]
    %v645 = vld [vmem:[%s3 + $0x16c] sm:$0xf]
    %v646 = vld [vmem:[%s3 + $0x170] sm:$0xf]
    %v647 = vld [vmem:[%s3 + $0x174] sm:$0xf]
    %v648 = vld [vmem:[%s3 + $0x178] sm:$0xf]
    %v649 = vld [vmem:[%s3 + $0x17c] sm:$0xf]
    %v650 = vld [vmem:[%s3 + $0x180] sm:$0xf]
    %v651 = vld [vmem:[%s3 + $0x184] sm:$0xf]
    %v652 = vld [vmem:[%s3 + $0x188] sm:$0xf]
    %v653 = vld [vmem:[%s3 + $0x18c] sm:$0xf]
    %v654 = vld [vmem:[%s3 + $0x190] sm:$0xf]
    %v655 = vld [vmem:[%s3 + $0x194] sm:$0xf]
    %v656 = vld [vmem:[%s3 + $0x198] sm:$0xf]
    %v657 = vld [vmem:[%s3 + $0x19c] sm:$0xf]
    %v658 = vld [vmem:[%s3 + $0x1a0] sm:$0xf]
    %v659 = vld [vmem:[%s3 + $0x1a4] sm:$0xf]
    %v660 = vld [vmem:[%s3 + $0x1a8] sm:$0xf]
    %v661 = vld [vmem:[%s3 + $0x1ac] sm:$0xf]
    %v662 = vld [vmem:[%s3 + $0x1b0] sm:$0xf]
    %v663 = vld [vmem:[%s3 + $0x1b4] sm:$0xf]
    %v664 = vld [vmem:[%s3 + $0x1b8] sm:$0xf]
    %v665 = vld [vmem:[%s3 + $0x1bc] sm:$0xf]
    %v666 = vld [vmem:[%s3 + $0x1c0] sm:$0xf]
    %v667 = vld [vmem:[%s3 + $0x1c4] sm:$0xf]
    %v668 = vld [vmem:[%s3 + $0x1c8] sm:$0xf]
    %v669 = vld [vmem:[%s3 + $0x1cc] sm:$0xf]
    %v670 = vld [vmem:[%s3 + $0x1d0] sm:$0xf]
    %v671 = vld [vmem:[%s3 + $0x1d4] sm:$0xf]
    %v672 = vld [vmem:[%s3 + $0x1d8] sm:$0xf]
    %v673 = vld [vmem:[%s3 + $0x1dc] sm:$0xf]
    %v674 = vld [vmem:[%s3 + $0x1e0] sm:$0xf]
    %v675 = vld [vmem:[%s3 + $0x1e4] sm:$0xf]
    %v676 = vld [vmem:[%s3 + $0x1e8] sm:$0xf]
    %v677 = vld [vmem:[%s3 + $0x1ec] sm:$0xf]
    %v678 = vld [vmem:[%s3 + $0x1f0] sm:$0xf]
    %v679 = vld [vmem:[%s3 + $0x1f4] sm:$0xf]
    %v680 = vld [vmem:[%s3 + $0x1f8] sm:$0xf]
    %v681 = vld [vmem:[%s3 + $0x1fc] sm:$0xf]
    %v682 = vld [vmem:[%s3 + $0x200] sm:$0xf]
    %v683 = vld [vmem:[%s3 + $0x204] sm:$0xf]
    %v684 = vld [vmem:[%s3 + $0x208] sm:$0xf]
    %v685 = vld [vmem:[%s3 + $0x20c] sm:$0xf]
    %v686 = vld [vmem:[%s3 + $0x210] sm:$0xf]
    %v687 = vld [vmem:[%s3 + $0x214] sm:$0xf]
    %v688 = vld [vmem:[%s3 + $0x218] sm:$0xf]
    %v689 = vld [vmem:[%s3 + $0x21c] sm:$0xf]
    %v690 = vld [vmem:[%s3 + $0x220] sm:$0xf]
    %v691 = vld [vmem:[%s3 + $0x224] sm:$0xf]
    %v692 = vld [vmem:[%s3 + $0x228] sm:$0xf]
    %v693 = vld [vmem:[%s3 + $0x22c] sm:$0xf]
    %v694 = vld [vmem:[%s3 + $0x230] sm:$0xf]
    %v695 = vld [vmem:[%s3 + $0x234] sm:$0xf]
    %v696 = vld [vmem:[%s3 + $0x238] sm:$0xf]
    %v697 = vld [vmem:[%s3 + $0x23c] sm:$0xf]
    %v698 = vld [vmem:[%s3 + $0x240] sm:$0xf]
    %v699 = vld [vmem:[%s3 + $0x244] sm:$0xf]
    %v700 = vld [vmem:[%s3 + $0x248] sm:$0xf]
    %v701 = vld [vmem:[%s3 + $0x24c] sm:$0xf]
    %v702 = vld [vmem:[%s3 + $0x250] sm:$0xf]
    %v703 = vld [vmem:[%s3 + $0x254] sm:$0xf]
    %v704 = vld [vmem:[%s3 + $0x258] sm:$0xf]
    %v705 = vld [vmem:[%s3 + $0x25c] sm:$0xf]
    %v706 = vld [vmem:[%s3 + $0x260] sm:$0xf]
    %v707 = vld [vmem:[%s3 + $0x264] sm:$0xf]
    %v708 = vld [vmem:[%s3 + $0x268] sm:$0xf]
    %v709 = vld [vmem:[%s3 + $0x26c] sm:$0xf]
    %v710 = vld [vmem:[%s3 + $0x270] sm:$0xf]
    %v711 = vld [vmem:[%s3 + $0x274] sm:$0xf]
    %v712 = vld [vmem:[%s3 + $0x278] sm:$0xf]
    %v713 = vld [vmem:[%s3 + $0x27c] sm:$0xf]
    %v714 = vld [vmem:[%s3 + $0x280] sm:$0xf]
    %v715 = vld [vmem:[%s3 + $0x284] sm:$0xf]
    %v716 = vld [vmem:[%s3 + $0x288] sm:$0xf]
    %v717 = vld [vmem:[%s3 + $0x28c] sm:$0xf]
    %v718 = vld [vmem:[%s3 + $0x290] sm:$0xf]
    %v719 = vld [vmem:[%s3 + $0x294] sm:$0xf]
    %v720 = vld [vmem:[%s3 + $0x298] sm:$0xf]
    %v721 = vld [vmem:[%s3 + $0x29c] sm:$0xf]
    %v722 = vld [vmem:[%s3 + $0x2a0] sm:$0xf]
    %v723 = vld [vmem:[%s3 + $0x2a4] sm:$0xf]
    %v724 = vld [vmem:[%s3 + $0x2a8] sm:$0xf]
    %v725 = vld [vmem:[%s3 + $0x2ac] sm:$0xf]
    %v726 = vld [vmem:[%s3 + $0x2b0] sm:$0xf]
    %v727 = vld [vmem:[%s3 + $0x2b4] sm:$0xf]
    %v728 = vld [vmem:[%s3 + $0x2b8] sm:$0xf]
    %v729 = vld [vmem:[%s3 + $0x2bc] sm:$0xf]
    %v730 = vld [vmem:[%s3 + $0x2c0] sm:$0xf]
    %v731 = vld [vmem:[%s3 + $0x2c4] sm:$0xf]
    %v732 = vld [vmem:[%s3 + $0x2c8] sm:$0xf]
    %v733 = vld [vmem:[%s3 + $0x2cc] sm:$0xf]
    %v734 = vld [vmem:[%s3 + $0x2d0] sm:$0xf]
    %v735 = vld [vmem:[%s3 + $0x2d4] sm:$0xf]
    %v736 = vld [vmem:[%s3 + $0x2d8] sm:$0xf]
    %v737 = vld [vmem:[%s3 + $0x2dc] sm:$0xf]
    %v738 = vld [vmem:[%s3 + $0x2e0] sm:$0xf]
    %v739 = vld [vmem:[%s3 + $0x2e4] sm:$0xf]
    %v740 = vld [vmem:[%s3 + $0x2e8] sm:$0xf]
    %v741 = vld [vmem:[%s3 + $0x2ec] sm:$0xf]
    %v742 = vld [vmem:[%s3 + $0x2f0] sm:$0xf]
    %v743 = vld [vmem:[%s3 + $0x2f4] sm:$0xf]
    %v744 = vld [vmem:[%s3 + $0x2f8] sm:$0xf]
    %v745 = vld [vmem:[%s3 + $0x2fc] sm:$0xf]
    %v746 = vld [vmem:[%s3 + $0x300] sm:$0xf]
    %v747 = vld [vmem:[%s3 + $0x304] sm:$0xf]
    %v748 = vld [vmem:[%s3 + $0x308] sm:$0xf]
    %v749 = vld [vmem:[%s3 + $0x30c] sm:$0xf]
    %v750 = vld [vmem:[%s3 + $0x310] sm:$0xf]
    %v751 = vld [vmem:[%s3 + $0x314] sm:$0xf]
    %v752 = vld [vmem:[%s3 + $0x318] sm:$0xf]
    %v753 = vld [vmem:[%s3 + $0x31c] sm:$0xf]
    %v754 = vld [vmem:[%s3 + $0x320] sm:$0xf]
    %v755 = vld [vmem:[%s3 + $0x324] sm:$0xf]
    %v756 = vld [vmem:[%s3 + $0x328] sm:$0xf]
    %v757 = vld [vmem:[%s3 + $0x32c] sm:$0xf]
    %v758 = vld [vmem:[%s3 + $0x330] sm:$0xf]
    %v759 = vld [vmem:[%s3 + $0x334] sm:$0xf]
    %v760 = vld [vmem:[%s3 + $0x338] sm:$0xf]
    %v761 = vld [vmem:[%s3 + $0x33c] sm:$0xf]
    %v762 = vld [vmem:[%s3 + $0x340] sm:$0xf]
    %v763 = vld [vmem:[%s3 + $0x344] sm:$0xf]
    %v764 = vld [vmem:[%s3 + $0x348] sm:$0xf]
    %v765 = vld [vmem:[%s3 + $0x34c] sm:$0xf]
    %v766 = vld [vmem:[%s3 + $0x350] sm:$0xf]
    %v767 = vld [vmem:[%s3 + $0x354] sm:$0xf]
    %v768 = vld [vmem:[%s3 + $0x358] sm:$0xf]
    %v769 = vld [vmem:[%s3 + $0x35c] sm:$0xf]
    %v770 = vld [vmem:[%s3 + $0x360] sm:$0xf]
    %v771 = vld [vmem:[%s3 + $0x364] sm:$0xf]
    %v772 = vld [vmem:[%s3 + $0x368] sm:$0xf]
    %v773 = vld [vmem:[%s3 + $0x36c] sm:$0xf]
    %v774 = vld [vmem:[%s3 + $0x370] sm:$0xf]
    %v775 = vld [vmem:[%s3 + $0x374] sm:$0xf]
    %v776 = vld [vmem:[%s3 + $0x378] sm:$0xf]
    %v777 = vld [vmem:[%s3 + $0x37c] sm:$0xf]
    %v778 = vld [vmem:[%s3 + $0x380] sm:$0xf]
    %v779 = vld [vmem:[%s3 + $0x384] sm:$0xf]
    %v780 = vld [vmem:[%s3 + $0x388] sm:$0xf]
    %v781 = vld [vmem:[%s3 + $0x38c] sm:$0xf]
    %v782 = vld [vmem:[%s3 + $0x390] sm:$0xf]
    %v783 = vld [vmem:[%s3 + $0x394] sm:$0xf]
    %v784 = vld [vmem:[%s3 + $0x398] sm:$0xf]
    %v785 = vld [vmem:[%s3 + $0x39c] sm:$0xf]
    %v786 = vld [vmem:[%s3 + $0x3a0] sm:$0xf]
    %v787 = vld [vmem:[%s3 + $0x3a4] sm:$0xf]
    %v788 = vld [vmem:[%s3 + $0x3a8] sm:$0xf]
    %v789 = vld [vmem:[%s3 + $0x3ac] sm:$0xf]
    %v790 = vld [vmem:[%s3 + $0x3b0] sm:$0xf]
    %v791 = vld [vmem:[%s3 + $0x3b4] sm:$0xf]
    %v792 = vld [vmem:[%s3 + $0x3b8] sm:$0xf]
    %v793 = vld [vmem:[%s3 + $0x3bc] sm:$0xf]
    %v794 = vld [vmem:[%s3 + $0x3c0] sm:$0xf]
    %v795 = vld [vmem:[%s3 + $0x3c4] sm:$0xf]
    %v796 = vld [vmem:[%s3 + $0x3c8] sm:$0xf]
    %v797 = vld [vmem:[%s3 + $0x3cc] sm:$0xf]
    %v798 = vld [vmem:[%s3 + $0x3d0] sm:$0xf]
    %v799 = vld [vmem:[%s3 + $0x3d4] sm:$0xf]
    %v800 = vld [vmem:[%s3 + $0x3d8] sm:$0xf]
    %v801 = vld [vmem:[%s3 + $0x3dc] sm:$0xf]
    %v802 = vld [vmem:[%s3 + $0x3e0] sm:$0xf]
    %v803 = vld [vmem:[%s3 + $0x3e4] sm:$0xf]
    %v804 = vld [vmem:[%s3 + $0x3e8] sm:$0xf]
    %v805 = vld [vmem:[%s3 + $0x3ec] sm:$0xf]
    %v806 = vld [vmem:[%s3 + $0x3f0] sm:$0xf]
    %v807 = vld [vmem:[%s3 + $0x3f4] sm:$0xf]
    %v808 = vld [vmem:[%s3 + $0x3f8] sm:$0xf]
    %v809 = vld [vmem:[%s3 + $0x3fc] sm:$0xf]
    %v810 = vld [vmem:[%s4] sm:$0x1]
    %v812 = vperm.slane %v810, 0
    %v1070 = vunpack.c.l.b16 %v554
    %v1071 = vunpack.c.l.b16 %v555
    %v1072 = vunpack.c.l.b16 %v556
    %v1073 = vunpack.c.l.b16 %v557
    %v1074 = vunpack.c.l.b16 %v558
    %v1075 = vunpack.c.l.b16 %v559
    %v1076 = vunpack.c.l.b16 %v560
    %v1077 = vunpack.c.l.b16 %v561
    %v1078 = vunpack.c.l.b16 %v562
    %v1079 = vunpack.c.l.b16 %v563
    %v1080 = vunpack.c.l.b16 %v564
    %v1081 = vunpack.c.l.b16 %v565
    %v1082 = vunpack.c.l.b16 %v566
    %v1083 = vunpack.c.l.b16 %v567
    %v1084 = vunpack.c.l.b16 %v568
    %v1085 = vunpack.c.l.b16 %v569
    %v1086 = vunpack.c.l.b16 %v570
    %v1087 = vunpack.c.l.b16 %v571
    %v1088 = vunpack.c.l.b16 %v572
    %v1089 = vunpack.c.l.b16 %v573
    %v1090 = vunpack.c.l.b16 %v574
    %v1091 = vunpack.c.l.b16 %v575
    %v1092 = vunpack.c.l.b16 %v576
    %v1093 = vunpack.c.l.b16 %v577
    %v1094 = vunpack.c.l.b16 %v578
    %v1095 = vunpack.c.l.b16 %v579
    %v1096 = vunpack.c.l.b16 %v580
    %v1097 = vunpack.c.l.b16 %v581
    %v1098 = vunpack.c.l.b16 %v582
    %v1099 = vunpack.c.l.b16 %v583
    %v1100 = vunpack.c.l.b16 %v584
    %v1101 = vunpack.c.l.b16 %v585
    %v1102 = vunpack.c.l.b16 %v586
    %v1103 = vunpack.c.l.b16 %v587
    %v1104 = vunpack.c.l.b16 %v588
    %v1105 = vunpack.c.l.b16 %v589
    %v1106 = vunpack.c.l.b16 %v590
    %v1107 = vunpack.c.l.b16 %v591
    %v1108 = vunpack.c.l.b16 %v592
    %v1109 = vunpack.c.l.b16 %v593
    %v1110 = vunpack.c.l.b16 %v594
    %v1111 = vunpack.c.l.b16 %v595
    %v1112 = vunpack.c.l.b16 %v596
    %v1113 = vunpack.c.l.b16 %v597
    %v1114 = vunpack.c.l.b16 %v598
    %v1115 = vunpack.c.l.b16 %v599
    %v1116 = vunpack.c.l.b16 %v600
    %v1117 = vunpack.c.l.b16 %v601
    %v1118 = vunpack.c.l.b16 %v602
    %v1119 = vunpack.c.l.b16 %v603
    %v1120 = vunpack.c.l.b16 %v604
    %v1121 = vunpack.c.l.b16 %v605
    %v1122 = vunpack.c.l.b16 %v606
    %v1123 = vunpack.c.l.b16 %v607
    %v1124 = vunpack.c.l.b16 %v608
    %v1125 = vunpack.c.l.b16 %v609
    %v1126 = vunpack.c.l.b16 %v610
    %v1127 = vunpack.c.l.b16 %v611
    %v1128 = vunpack.c.l.b16 %v612
    %v1129 = vunpack.c.l.b16 %v613
    %v1130 = vunpack.c.l.b16 %v614
    %v1131 = vunpack.c.l.b16 %v615
    %v1132 = vunpack.c.l.b16 %v616
    %v1133 = vunpack.c.l.b16 %v617
    %v1134 = vunpack.c.l.b16 %v618
    %v1135 = vunpack.c.l.b16 %v619
    %v1136 = vunpack.c.l.b16 %v620
    %v1137 = vunpack.c.l.b16 %v621
    %v1138 = vunpack.c.l.b16 %v622
    %v1139 = vunpack.c.l.b16 %v623
    %v1140 = vunpack.c.l.b16 %v624
    %v1141 = vunpack.c.l.b16 %v625
    %v1142 = vunpack.c.l.b16 %v626
    %v1143 = vunpack.c.l.b16 %v627
    %v1144 = vunpack.c.l.b16 %v628
    %v1145 = vunpack.c.l.b16 %v629
    %v1146 = vunpack.c.l.b16 %v630
    %v1147 = vunpack.c.l.b16 %v631
    %v1148 = vunpack.c.l.b16 %v632
    %v1149 = vunpack.c.l.b16 %v633
    %v1150 = vunpack.c.l.b16 %v634
    %v1151 = vunpack.c.l.b16 %v635
    %v1152 = vunpack.c.l.b16 %v636
    %v1153 = vunpack.c.l.b16 %v637
    %v1154 = vunpack.c.l.b16 %v638
    %v1155 = vunpack.c.l.b16 %v639
    %v1156 = vunpack.c.l.b16 %v640
    %v1157 = vunpack.c.l.b16 %v641
    %v1158 = vunpack.c.l.b16 %v642
    %v1159 = vunpack.c.l.b16 %v643
    %v1160 = vunpack.c.l.b16 %v644
    %v1161 = vunpack.c.l.b16 %v645
    %v1162 = vunpack.c.l.b16 %v646
    %v1163 = vunpack.c.l.b16 %v647
    %v1164 = vunpack.c.l.b16 %v648
    %v1165 = vunpack.c.l.b16 %v649
    %v1166 = vunpack.c.l.b16 %v650
    %v1167 = vunpack.c.l.b16 %v651
    %v1168 = vunpack.c.l.b16 %v652
    %v1169 = vunpack.c.l.b16 %v653
    %v1170 = vunpack.c.l.b16 %v654
    %v1171 = vunpack.c.l.b16 %v655
    %v1172 = vunpack.c.l.b16 %v656
    %v1173 = vunpack.c.l.b16 %v657
    %v1174 = vunpack.c.l.b16 %v658
    %v1175 = vunpack.c.l.b16 %v659
    %v1176 = vunpack.c.l.b16 %v660
    %v1177 = vunpack.c.l.b16 %v661
    %v1178 = vunpack.c.l.b16 %v662
    %v1179 = vunpack.c.l.b16 %v663
    %v1180 = vunpack.c.l.b16 %v664
    %v1181 = vunpack.c.l.b16 %v665
    %v1182 = vunpack.c.l.b16 %v666
    %v1183 = vunpack.c.l.b16 %v667
    %v1184 = vunpack.c.l.b16 %v668
    %v1185 = vunpack.c.l.b16 %v669
    %v1186 = vunpack.c.l.b16 %v670
    %v1187 = vunpack.c.l.b16 %v671
    %v1188 = vunpack.c.l.b16 %v672
    %v1189 = vunpack.c.l.b16 %v673
    %v1190 = vunpack.c.l.b16 %v674
    %v1191 = vunpack.c.l.b16 %v675
    %v1192 = vunpack.c.l.b16 %v676
    %v1193 = vunpack.c.l.b16 %v677
    %v1194 = vunpack.c.l.b16 %v678
    %v1195 = vunpack.c.l.b16 %v679
    %v1196 = vunpack.c.l.b16 %v680
    %v1197 = vunpack.c.l.b16 %v681
    %v1198 = vunpack.c.l.b16 %v682
    %v1199 = vunpack.c.l.b16 %v683
    %v1200 = vunpack.c.l.b16 %v684
    %v1201 = vunpack.c.l.b16 %v685
    %v1202 = vunpack.c.l.b16 %v686
    %v1203 = vunpack.c.l.b16 %v687
    %v1204 = vunpack.c.l.b16 %v688
    %v1205 = vunpack.c.l.b16 %v689
    %v1206 = vunpack.c.l.b16 %v690
    %v1207 = vunpack.c.l.b16 %v691
    %v1208 = vunpack.c.l.b16 %v692
    %v1209 = vunpack.c.l.b16 %v693
    %v1210 = vunpack.c.l.b16 %v694
    %v1211 = vunpack.c.l.b16 %v695
    %v1212 = vunpack.c.l.b16 %v696
    %v1213 = vunpack.c.l.b16 %v697
    %v1214 = vunpack.c.l.b16 %v698
    %v1215 = vunpack.c.l.b16 %v699
    %v1216 = vunpack.c.l.b16 %v700
    %v1217 = vunpack.c.l.b16 %v701
    %v1218 = vunpack.c.l.b16 %v702
    %v1219 = vunpack.c.l.b16 %v703
    %v1220 = vunpack.c.l.b16 %v704
    %v1221 = vunpack.c.l.b16 %v705
    %v1222 = vunpack.c.l.b16 %v706
    %v1223 = vunpack.c.l.b16 %v707
    %v1224 = vunpack.c.l.b16 %v708
    %v1225 = vunpack.c.l.b16 %v709
    %v1226 = vunpack.c.l.b16 %v710
    %v1227 = vunpack.c.l.b16 %v711
    %v1228 = vunpack.c.l.b16 %v712
    %v1229 = vunpack.c.l.b16 %v713
    %v1230 = vunpack.c.l.b16 %v714
    %v1231 = vunpack.c.l.b16 %v715
    %v1232 = vunpack.c.l.b16 %v716
    %v1233 = vunpack.c.l.b16 %v717
    %v1234 = vunpack.c.l.b16 %v718
    %v1235 = vunpack.c.l.b16 %v719
    %v1236 = vunpack.c.l.b16 %v720
    %v1237 = vunpack.c.l.b16 %v721
    %v1238 = vunpack.c.l.b16 %v722
    %v1239 = vunpack.c.l.b16 %v723
    %v1240 = vunpack.c.l.b16 %v724
    %v1241 = vunpack.c.l.b16 %v725
    %v1242 = vunpack.c.l.b16 %v726
    %v1243 = vunpack.c.l.b16 %v727
    %v1244 = vunpack.c.l.b16 %v728
    %v1245 = vunpack.c.l.b16 %v729
    %v1246 = vunpack.c.l.b16 %v730
    %v1247 = vunpack.c.l.b16 %v731
    %v1248 = vunpack.c.l.b16 %v732
    %v1249 = vunpack.c.l.b16 %v733
    %v1250 = vunpack.c.l.b16 %v734
    %v1251 = vunpack.c.l.b16 %v735
    %v1252 = vunpack.c.l.b16 %v736
    %v1253 = vunpack.c.l.b16 %v737
    %v1254 = vunpack.c.l.b16 %v738
    %v1255 = vunpack.c.l.b16 %v739
    %v1256 = vunpack.c.l.b16 %v740
    %v1257 = vunpack.c.l.b16 %v741
    %v1258 = vunpack.c.l.b16 %v742
    %v1259 = vunpack.c.l.b16 %v743
    %v1260 = vunpack.c.l.b16 %v744
    %v1261 = vunpack.c.l.b16 %v745
    %v1262 = vunpack.c.l.b16 %v746
    %v1263 = vunpack.c.l.b16 %v747
    %v1264 = vunpack.c.l.b16 %v748
    %v1265 = vunpack.c.l.b16 %v749
    %v1266 = vunpack.c.l.b16 %v750
    %v1267 = vunpack.c.l.b16 %v751
    %v1268 = vunpack.c.l.b16 %v752
    %v1269 = vunpack.c.l.b16 %v753
    %v1270 = vunpack.c.l.b16 %v754
    %v1271 = vunpack.c.l.b16 %v755
    %v1272 = vunpack.c.l.b16 %v756
    %v1273 = vunpack.c.l.b16 %v757
    %v1274 = vunpack.c.l.b16 %v758
    %v1275 = vunpack.c.l.b16 %v759
    %v1276 = vunpack.c.l.b16 %v760
    %v1277 = vunpack.c.l.b16 %v761
    %v1278 = vunpack.c.l.b16 %v762
    %v1279 = vunpack.c.l.b16 %v763
    %v1280 = vunpack.c.l.b16 %v764
    %v1281 = vunpack.c.l.b16 %v765
    %v1282 = vunpack.c.l.b16 %v766
    %v1283 = vunpack.c.l.b16 %v767
    %v1284 = vunpack.c.l.b16 %v768
    %v1285 = vunpack.c.l.b16 %v769
    %v1286 = vunpack.c.l.b16 %v770
    %v1287 = vunpack.c.l.b16 %v771
    %v1288 = vunpack.c.l.b16 %v772
    %v1289 = vunpack.c.l.b16 %v773
    %v1290 = vunpack.c.l.b16 %v774
    %v1291 = vunpack.c.l.b16 %v775
    %v1292 = vunpack.c.l.b16 %v776
    %v1293 = vunpack.c.l.b16 %v777
    %v1294 = vunpack.c.l.b16 %v778
    %v1295 = vunpack.c.l.b16 %v779
    %v1296 = vunpack.c.l.b16 %v780
    %v1297 = vunpack.c.l.b16 %v781
    %v1298 = vunpack.c.l.b16 %v782
    %v1299 = vunpack.c.l.b16 %v783
    %v1300 = vunpack.c.l.b16 %v784
    %v1301 = vunpack.c.l.b16 %v785
    %v1302 = vunpack.c.l.b16 %v786
    %v1303 = vunpack.c.l.b16 %v787
    %v1304 = vunpack.c.l.b16 %v788
    %v1305 = vunpack.c.l.b16 %v789
    %v1306 = vunpack.c.l.b16 %v790
    %v1307 = vunpack.c.l.b16 %v791
    %v1308 = vunpack.c.l.b16 %v792
    %v1309 = vunpack.c.l.b16 %v793
    %v1310 = vunpack.c.l.b16 %v794
    %v1311 = vunpack.c.l.b16 %v795
    %v1312 = vunpack.c.l.b16 %v796
    %v1313 = vunpack.c.l.b16 %v797
    %v1314 = vunpack.c.l.b16 %v798
    %v1315 = vunpack.c.l.b16 %v799
    %v1316 = vunpack.c.l.b16 %v800
    %v1317 = vunpack.c.l.b16 %v801
    %v1318 = vunpack.c.l.b16 %v802
    %v1319 = vunpack.c.l.b16 %v803
    %v1320 = vunpack.c.l.b16 %v804
    %v1321 = vunpack.c.l.b16 %v805
    %v1322 = vunpack.c.l.b16 %v806
    %v1323 = vunpack.c.l.b16 %v807
    %v1324 = vunpack.c.l.b16 %v808
    %v1325 = vunpack.c.l.b16 %v809
    %v1326 = vpack.c.b16 %v1071, %v1070
    %v1327 = vpack.c.b16 %v1073, %v1072
    %v1328 = vpack.c.b16 %v1075, %v1074
    %v1329 = vpack.c.b16 %v1077, %v1076
    %v1330 = vpack.c.b16 %v1079, %v1078
    %v1331 = vpack.c.b16 %v1081, %v1080
    %v1332 = vpack.c.b16 %v1083, %v1082
    %v1333 = vpack.c.b16 %v1085, %v1084
    %v1334 = vpack.c.b16 %v1087, %v1086
    %v1335 = vpack.c.b16 %v1089, %v1088
    %v1336 = vpack.c.b16 %v1091, %v1090
    %v1337 = vpack.c.b16 %v1093, %v1092
    %v1338 = vpack.c.b16 %v1095, %v1094
    %v1339 = vpack.c.b16 %v1097, %v1096
    %v1340 = vpack.c.b16 %v1099, %v1098
    %v1341 = vpack.c.b16 %v1101, %v1100
    %v1342 = vpack.c.b16 %v1103, %v1102
    %v1343 = vpack.c.b16 %v1105, %v1104
    %v1344 = vpack.c.b16 %v1107, %v1106
    %v1345 = vpack.c.b16 %v1109, %v1108
    %v1346 = vpack.c.b16 %v1111, %v1110
    %v1347 = vpack.c.b16 %v1113, %v1112
    %v1348 = vpack.c.b16 %v1115, %v1114
    %v1349 = vpack.c.b16 %v1117, %v1116
    %v1350 = vpack.c.b16 %v1119, %v1118
    %v1351 = vpack.c.b16 %v1121, %v1120
    %v1352 = vpack.c.b16 %v1123, %v1122
    %v1353 = vpack.c.b16 %v1125, %v1124
    %v1354 = vpack.c.b16 %v1127, %v1126
    %v1355 = vpack.c.b16 %v1129, %v1128
    %v1356 = vpack.c.b16 %v1131, %v1130
    %v1357 = vpack.c.b16 %v1133, %v1132
    %v1358 = vpack.c.b16 %v1135, %v1134
    %v1359 = vpack.c.b16 %v1137, %v1136
    %v1360 = vpack.c.b16 %v1139, %v1138
    %v1361 = vpack.c.b16 %v1141, %v1140
    %v1362 = vpack.c.b16 %v1143, %v1142
    %v1363 = vpack.c.b16 %v1145, %v1144
    %v1364 = vpack.c.b16 %v1147, %v1146
    %v1365 = vpack.c.b16 %v1149, %v1148
    %v1366 = vpack.c.b16 %v1151, %v1150
    %v1367 = vpack.c.b16 %v1153, %v1152
    %v1368 = vpack.c.b16 %v1155, %v1154
    %v1369 = vpack.c.b16 %v1157, %v1156
    %v1370 = vpack.c.b16 %v1159, %v1158
    %v1371 = vpack.c.b16 %v1161, %v1160
    %v1372 = vpack.c.b16 %v1163, %v1162
    %v1373 = vpack.c.b16 %v1165, %v1164
    %v1374 = vpack.c.b16 %v1167, %v1166
    %v1375 = vpack.c.b16 %v1169, %v1168
    %v1376 = vpack.c.b16 %v1171, %v1170
    %v1377 = vpack.c.b16 %v1173, %v1172
    %v1378 = vpack.c.b16 %v1175, %v1174
    %v1379 = vpack.c.b16 %v1177, %v1176
    %v1380 = vpack.c.b16 %v1179, %v1178
    %v1381 = vpack.c.b16 %v1181, %v1180
    %v1382 = vpack.c.b16 %v1183, %v1182
    %v1383 = vpack.c.b16 %v1185, %v1184
    %v1384 = vpack.c.b16 %v1187, %v1186
    %v1385 = vpack.c.b16 %v1189, %v1188
    %v1386 = vpack.c.b16 %v1191, %v1190
    %v1387 = vpack.c.b16 %v1193, %v1192
    %v1388 = vpack.c.b16 %v1195, %v1194
    %v1389 = vpack.c.b16 %v1197, %v1196
    %v1390 = vpack.c.b16 %v1199, %v1198
    %v1391 = vpack.c.b16 %v1201, %v1200
    %v1392 = vpack.c.b16 %v1203, %v1202
    %v1393 = vpack.c.b16 %v1205, %v1204
    %v1394 = vpack.c.b16 %v1207, %v1206
    %v1395 = vpack.c.b16 %v1209, %v1208
    %v1396 = vpack.c.b16 %v1211, %v1210
    %v1397 = vpack.c.b16 %v1213, %v1212
    %v1398 = vpack.c.b16 %v1215, %v1214
    %v1399 = vpack.c.b16 %v1217, %v1216
    %v1400 = vpack.c.b16 %v1219, %v1218
    %v1401 = vpack.c.b16 %v1221, %v1220
    %v1402 = vpack.c.b16 %v1223, %v1222
    %v1403 = vpack.c.b16 %v1225, %v1224
    %v1404 = vpack.c.b16 %v1227, %v1226
    %v1405 = vpack.c.b16 %v1229, %v1228
    %v1406 = vpack.c.b16 %v1231, %v1230
    %v1407 = vpack.c.b16 %v1233, %v1232
    %v1408 = vpack.c.b16 %v1235, %v1234
    %v1409 = vpack.c.b16 %v1237, %v1236
    %v1410 = vpack.c.b16 %v1239, %v1238
    %v1411 = vpack.c.b16 %v1241, %v1240
    %v1412 = vpack.c.b16 %v1243, %v1242
    %v1413 = vpack.c.b16 %v1245, %v1244
    %v1414 = vpack.c.b16 %v1247, %v1246
    %v1415 = vpack.c.b16 %v1249, %v1248
    %v1416 = vpack.c.b16 %v1251, %v1250
    %v1417 = vpack.c.b16 %v1253, %v1252
    %v1418 = vpack.c.b16 %v1255, %v1254
    %v1419 = vpack.c.b16 %v1257, %v1256
    %v1420 = vpack.c.b16 %v1259, %v1258
    %v1421 = vpack.c.b16 %v1261, %v1260
    %v1422 = vpack.c.b16 %v1263, %v1262
    %v1423 = vpack.c.b16 %v1265, %v1264
    %v1424 = vpack.c.b16 %v1267, %v1266
    %v1425 = vpack.c.b16 %v1269, %v1268
    %v1426 = vpack.c.b16 %v1271, %v1270
    %v1427 = vpack.c.b16 %v1273, %v1272
    %v1428 = vpack.c.b16 %v1275, %v1274
    %v1429 = vpack.c.b16 %v1277, %v1276
    %v1430 = vpack.c.b16 %v1279, %v1278
    %v1431 = vpack.c.b16 %v1281, %v1280
    %v1432 = vpack.c.b16 %v1283, %v1282
    %v1433 = vpack.c.b16 %v1285, %v1284
    %v1434 = vpack.c.b16 %v1287, %v1286
    %v1435 = vpack.c.b16 %v1289, %v1288
    %v1436 = vpack.c.b16 %v1291, %v1290
    %v1437 = vpack.c.b16 %v1293, %v1292
    %v1438 = vpack.c.b16 %v1295, %v1294
    %v1439 = vpack.c.b16 %v1297, %v1296
    %v1440 = vpack.c.b16 %v1299, %v1298
    %v1441 = vpack.c.b16 %v1301, %v1300
    %v1442 = vpack.c.b16 %v1303, %v1302
    %v1443 = vpack.c.b16 %v1305, %v1304
    %v1444 = vpack.c.b16 %v1307, %v1306
    %v1445 = vpack.c.b16 %v1309, %v1308
    %v1446 = vpack.c.b16 %v1311, %v1310
    %v1447 = vpack.c.b16 %v1313, %v1312
    %v1448 = vpack.c.b16 %v1315, %v1314
    %v1449 = vpack.c.b16 %v1317, %v1316
    %v1450 = vpack.c.b16 %v1319, %v1318
    %v1451 = vpack.c.b16 %v1321, %v1320
    %v1452 = vpack.c.b16 %v1323, %v1322
    %v1453 = vpack.c.b16 %v1325, %v1324
    %1582 = vmatpush.bf16.msra.mxu0 %v1333
    %1583 = vmatpush.bf16.msra.mxu0 %v1332
    %1584 = vmatpush.bf16.msra.mxu0 %v1331
    %1585 = vmatpush.bf16.msra.mxu0 %v1330
    %1586 = vmatpush.bf16.msra.mxu0 %v1329
    %1587 = vmatpush.bf16.msra.mxu0 %v1328
    %1588 = vmatpush.bf16.msra.mxu0 %v1327
    %1589 = vmatpush.bf16.msra.mxu0 %v1326
    %1590 = vmatmul.bf16.gmra.mxu0 %v538
    %v1591 = vpop.f32.mrf.mxu0
    %v1592 = vadd.f32 %v812, %v1591
    %v1593 = vpop.f32.mrf.mxu0
    %v1594 = vadd.f32 %v812, %v1593
    %1595 = vdwg.mxu0
    %1596 = vmatpush.bf16.msra.mxu0 %v1341
    %1597 = vmatpush.bf16.msra.mxu0 %v1340
    %1598 = vmatpush.bf16.msra.mxu0 %v1339
    %1599 = vmatpush.bf16.msra.mxu0 %v1338
    %1600 = vmatpush.bf16.msra.mxu0 %v1337
    %1601 = vmatpush.bf16.msra.mxu0 %v1336
    %1602 = vmatpush.bf16.msra.mxu0 %v1335
    %1603 = vmatpush.bf16.msra.mxu0 %v1334
    %1604 = vmatmul.bf16.gmra.mxu0 %v539
    %v1605 = vpop.f32.mrf.mxu0
    %v1606 = vadd.f32 %v1592, %v1605
    %v1607 = vpop.f32.mrf.mxu0
    %v1608 = vadd.f32 %v1594, %v1607
    %1609 = vdwg.mxu0
    %1610 = vmatpush.bf16.msra.mxu0 %v1349
    %1611 = vmatpush.bf16.msra.mxu0 %v1348
    %1612 = vmatpush.bf16.msra.mxu0 %v1347
    %1613 = vmatpush.bf16.msra.mxu0 %v1346
    %1614 = vmatpush.bf16.msra.mxu0 %v1345
    %1615 = vmatpush.bf16.msra.mxu0 %v1344
    %1616 = vmatpush.bf16.msra.mxu0 %v1343
    %1617 = vmatpush.bf16.msra.mxu0 %v1342
    %1618 = vmatmul.bf16.gmra.mxu0 %v540
    %v1619 = vpop.f32.mrf.mxu0
    %v1620 = vadd.f32 %v1606, %v1619
    %v1621 = vpop.f32.mrf.mxu0
    %v1622 = vadd.f32 %v1608, %v1621
    %1623 = vdwg.mxu0
    %1624 = vmatpush.bf16.msra.mxu0 %v1357
    %1625 = vmatpush.bf16.msra.mxu0 %v1356
    %1626 = vmatpush.bf16.msra.mxu0 %v1355
    %1627 = vmatpush.bf16.msra.mxu0 %v1354
    %1628 = vmatpush.bf16.msra.mxu0 %v1353
    %1629 = vmatpush.bf16.msra.mxu0 %v1352
    %1630 = vmatpush.bf16.msra.mxu0 %v1351
    %1631 = vmatpush.bf16.msra.mxu0 %v1350
    %1632 = vmatmul.bf16.gmra.mxu0 %v541
    %v1633 = vpop.f32.mrf.mxu0
    %v1634 = vadd.f32 %v1620, %v1633
    %v1635 = vpop.f32.mrf.mxu0
    %v1636 = vadd.f32 %v1622, %v1635
    %1637 = vdwg.mxu0
    %1638 = vmatpush.bf16.msra.mxu0 %v1365
    %1639 = vmatpush.bf16.msra.mxu0 %v1364
    %1640 = vmatpush.bf16.msra.mxu0 %v1363
    %1641 = vmatpush.bf16.msra.mxu0 %v1362
    %1642 = vmatpush.bf16.msra.mxu0 %v1361
    %1643 = vmatpush.bf16.msra.mxu0 %v1360
    %1644 = vmatpush.bf16.msra.mxu0 %v1359
    %1645 = vmatpush.bf16.msra.mxu0 %v1358
    %1646 = vmatmul.bf16.gmra.mxu0 %v542
    %v1647 = vpop.f32.mrf.mxu0
    %v1648 = vadd.f32 %v1634, %v1647
    %v1649 = vpop.f32.mrf.mxu0
    %v1650 = vadd.f32 %v1636, %v1649
    %1651 = vdwg.mxu0
    %1652 = vmatpush.bf16.msra.mxu0 %v1373
    %1653 = vmatpush.bf16.msra.mxu0 %v1372
    %1654 = vmatpush.bf16.msra.mxu0 %v1371
    %1655 = vmatpush.bf16.msra.mxu0 %v1370
    %1656 = vmatpush.bf16.msra.mxu0 %v1369
    %1657 = vmatpush.bf16.msra.mxu0 %v1368
    %1658 = vmatpush.bf16.msra.mxu0 %v1367
    %1659 = vmatpush.bf16.msra.mxu0 %v1366
    %1660 = vmatmul.bf16.gmra.mxu0 %v543
    %v1661 = vpop.f32.mrf.mxu0
    %v1662 = vadd.f32 %v1648, %v1661
    %v1663 = vpop.f32.mrf.mxu0
    %v1664 = vadd.f32 %v1650, %v1663
    %1665 = vdwg.mxu0
    %1666 = vmatpush.bf16.msra.mxu0 %v1381
    %1667 = vmatpush.bf16.msra.mxu0 %v1380
    %1668 = vmatpush.bf16.msra.mxu0 %v1379
    %1669 = vmatpush.bf16.msra.mxu0 %v1378
    %1670 = vmatpush.bf16.msra.mxu0 %v1377
    %1671 = vmatpush.bf16.msra.mxu0 %v1376
    %1672 = vmatpush.bf16.msra.mxu0 %v1375
    %1673 = vmatpush.bf16.msra.mxu0 %v1374
    %1674 = vmatmul.bf16.gmra.mxu0 %v544
    %v1675 = vpop.f32.mrf.mxu0
    %v1676 = vadd.f32 %v1662, %v1675
    %v1677 = vpop.f32.mrf.mxu0
    %v1678 = vadd.f32 %v1664, %v1677
    %1679 = vdwg.mxu0
    %1680 = vmatpush.bf16.msra.mxu0 %v1389
    %1681 = vmatpush.bf16.msra.mxu0 %v1388
    %1682 = vmatpush.bf16.msra.mxu0 %v1387
    %1683 = vmatpush.bf16.msra.mxu0 %v1386
    %1684 = vmatpush.bf16.msra.mxu0 %v1385
    %1685 = vmatpush.bf16.msra.mxu0 %v1384
    %1686 = vmatpush.bf16.msra.mxu0 %v1383
    %1687 = vmatpush.bf16.msra.mxu0 %v1382
    %1688 = vmatmul.bf16.gmra.mxu0 %v545
    %v1689 = vpop.f32.mrf.mxu0
    %v1690 = vadd.f32 %v1676, %v1689
    %v1691 = vpop.f32.mrf.mxu0
    %v1692 = vadd.f32 %v1678, %v1691
    %1693 = vdwg.mxu0
    %1694 = vmatpush.bf16.msra.mxu0 %v1397
    %1695 = vmatpush.bf16.msra.mxu0 %v1396
    %1696 = vmatpush.bf16.msra.mxu0 %v1395
    %1697 = vmatpush.bf16.msra.mxu0 %v1394
    %1698 = vmatpush.bf16.msra.mxu0 %v1393
    %1699 = vmatpush.bf16.msra.mxu0 %v1392
    %1700 = vmatpush.bf16.msra.mxu0 %v1391
    %1701 = vmatpush.bf16.msra.mxu0 %v1390
    %1702 = vmatmul.bf16.gmra.mxu0 %v546
    %v1703 = vpop.f32.mrf.mxu0
    %v1704 = vadd.f32 %v1690, %v1703
    %v1705 = vpop.f32.mrf.mxu0
    %v1706 = vadd.f32 %v1692, %v1705
    %1707 = vdwg.mxu0
    %1708 = vmatpush.bf16.msra.mxu0 %v1405
    %1709 = vmatpush.bf16.msra.mxu0 %v1404
    %1710 = vmatpush.bf16.msra.mxu0 %v1403
    %1711 = vmatpush.bf16.msra.mxu0 %v1402
    %1712 = vmatpush.bf16.msra.mxu0 %v1401
    %1713 = vmatpush.bf16.msra.mxu0 %v1400
    %1714 = vmatpush.bf16.msra.mxu0 %v1399
    %1715 = vmatpush.bf16.msra.mxu0 %v1398
    %1716 = vmatmul.bf16.gmra.mxu0 %v547
    %v1717 = vpop.f32.mrf.mxu0
    %v1718 = vadd.f32 %v1704, %v1717
    %v1719 = vpop.f32.mrf.mxu0
    %v1720 = vadd.f32 %v1706, %v1719
    %1721 = vdwg.mxu0
    %1722 = vmatpush.bf16.msra.mxu0 %v1413
    %1723 = vmatpush.bf16.msra.mxu0 %v1412
    %1724 = vmatpush.bf16.msra.mxu0 %v1411
    %1725 = vmatpush.bf16.msra.mxu0 %v1410
    %1726 = vmatpush.bf16.msra.mxu0 %v1409
    %1727 = vmatpush.bf16.msra.mxu0 %v1408
    %1728 = vmatpush.bf16.msra.mxu0 %v1407
    %1729 = vmatpush.bf16.msra.mxu0 %v1406
    %1730 = vmatmul.bf16.gmra.mxu0 %v548
    %v1731 = vpop.f32.mrf.mxu0
    %v1732 = vadd.f32 %v1718, %v1731
    %v1733 = vpop.f32.mrf.mxu0
    %v1734 = vadd.f32 %v1720, %v1733
    %1735 = vdwg.mxu0
    %1736 = vmatpush.bf16.msra.mxu0 %v1421
    %1737 = vmatpush.bf16.msra.mxu0 %v1420
    %1738 = vmatpush.bf16.msra.mxu0 %v1419
    %1739 = vmatpush.bf16.msra.mxu0 %v1418
    %1740 = vmatpush.bf16.msra.mxu0 %v1417
    %1741 = vmatpush.bf16.msra.mxu0 %v1416
    %1742 = vmatpush.bf16.msra.mxu0 %v1415
    %1743 = vmatpush.bf16.msra.mxu0 %v1414
    %1744 = vmatmul.bf16.gmra.mxu0 %v549
    %v1745 = vpop.f32.mrf.mxu0
    %v1746 = vadd.f32 %v1732, %v1745
    %v1747 = vpop.f32.mrf.mxu0
    %v1748 = vadd.f32 %v1734, %v1747
    %1749 = vdwg.mxu0
    %1750 = vmatpush.bf16.msra.mxu0 %v1429
    %1751 = vmatpush.bf16.msra.mxu0 %v1428
    %1752 = vmatpush.bf16.msra.mxu0 %v1427
    %1753 = vmatpush.bf16.msra.mxu0 %v1426
    %1754 = vmatpush.bf16.msra.mxu0 %v1425
    %1755 = vmatpush.bf16.msra.mxu0 %v1424
    %1756 = vmatpush.bf16.msra.mxu0 %v1423
    %1757 = vmatpush.bf16.msra.mxu0 %v1422
    %1758 = vmatmul.bf16.gmra.mxu0 %v550
    %v1759 = vpop.f32.mrf.mxu0
    %v1760 = vadd.f32 %v1746, %v1759
    %v1761 = vpop.f32.mrf.mxu0
    %v1762 = vadd.f32 %v1748, %v1761
    %1763 = vdwg.mxu0
    %1764 = vmatpush.bf16.msra.mxu0 %v1437
    %1765 = vmatpush.bf16.msra.mxu0 %v1436
    %1766 = vmatpush.bf16.msra.mxu0 %v1435
    %1767 = vmatpush.bf16.msra.mxu0 %v1434
    %1768 = vmatpush.bf16.msra.mxu0 %v1433
    %1769 = vmatpush.bf16.msra.mxu0 %v1432
    %1770 = vmatpush.bf16.msra.mxu0 %v1431
    %1771 = vmatpush.bf16.msra.mxu0 %v1430
    %1772 = vmatmul.bf16.gmra.mxu0 %v551
    %v1773 = vpop.f32.mrf.mxu0
    %v1774 = vadd.f32 %v1760, %v1773
    %v1775 = vpop.f32.mrf.mxu0
    %v1776 = vadd.f32 %v1762, %v1775
    %1777 = vdwg.mxu0
    %1778 = vmatpush.bf16.msra.mxu0 %v1445
    %1779 = vmatpush.bf16.msra.mxu0 %v1444
    %1780 = vmatpush.bf16.msra.mxu0 %v1443
    %1781 = vmatpush.bf16.msra.mxu0 %v1442
    %1782 = vmatpush.bf16.msra.mxu0 %v1441
    %1783 = vmatpush.bf16.msra.mxu0 %v1440
    %1784 = vmatpush.bf16.msra.mxu0 %v1439
    %1785 = vmatpush.bf16.msra.mxu0 %v1438
    %1786 = vmatmul.bf16.gmra.mxu0 %v552
    %v1787 = vpop.f32.mrf.mxu0
    %v1788 = vadd.f32 %v1774, %v1787
    %v1789 = vpop.f32.mrf.mxu0
    %v1790 = vadd.f32 %v1776, %v1789
    %1791 = vdwg.mxu0
    %1792 = vmatpush.bf16.msra.mxu0 %v1453
    %1793 = vmatpush.bf16.msra.mxu0 %v1452
    %1794 = vmatpush.bf16.msra.mxu0 %v1451
    %1795 = vmatpush.bf16.msra.mxu0 %v1450
    %1796 = vmatpush.bf16.msra.mxu0 %v1449
    %1797 = vmatpush.bf16.msra.mxu0 %v1448
    %1798 = vmatpush.bf16.msra.mxu0 %v1447
    %1799 = vmatpush.bf16.msra.mxu0 %v1446
    %1800 = vmatmul.bf16.gmra.mxu0 %v553
    %v1801 = vpop.f32.mrf.mxu0
    %v1802 = vadd.f32 %v1788, %v1801
    %v1803 = vpop.f32.mrf.mxu0
    %v1804 = vadd.f32 %v1790, %v1803
    %1805 = vdwg.mxu0
    %v1806 = vunpack.c.l.bf16 %v43
    %v1807 = vunpack.c.l.bf16 %v44
    %v1808 = vadd.f32 %v1806, %v1802
    %v1809 = vadd.f32 %v1807, %v1804
    %v1810 = vsel %vm278, %v1808, 0.0
    %1811 = vadd.xlane.f32.xlu0 %v1810
    %v1812 = vpop.xlane.xlu0 %1811
    %v1813 = vsel %vm278, %v1809, 0.0
    %1814 = vadd.xlane.f32.xlu0 %v1813
    %v1815 = vpop.xlane.xlu0 %1814
    %v1816 = vrcp.pop 32.0
    %v1817 = vmul.f32 32.0, %v1816
    %v1818 = vsub.f32 1.0, %v1817
    %v1819 = vmul.f32 %v1816, %v1818
    %v1820 = vadd.f32 %v1816, %v1819
    %vm1821 = vweird.f32 %v1816
    %v1822 = vsel %vm1821, %v1816, %v1820
    %v1823 = vmul.f32 %v1812, %v1822
    %v1824 = vmul.f32 %v1815, %v1822
    %v1825 = vsub.f32 %v1808, %v1823
    %v1826 = vsub.f32 %v1809, %v1824
    %v1827 = vmul.f32 %v1825, %v1825
    %v1828 = vmul.f32 %v1826, %v1826
    %v1829 = vsel %vm278, %v1827, 0.0
    %1830 = vadd.xlane.f32.xlu0 %v1829
    %v1831 = vpop.xlane.xlu0 %1830
    %v1832 = vsel %vm278, %v1828, 0.0
    %1833 = vadd.xlane.f32.xlu0 %v1832
    %v1834 = vpop.xlane.xlu0 %1833
    %v1835 = vmul.f32 %v1831, %v1822
    %v1836 = vmul.f32 %v1834, %v1822
    %v1837 = vadd.f32 %v1835, 1e-05
    %v1838 = vadd.f32 %v1836, 1e-05
    %v1839 = vrsqrt.pop %v1837
    %v1840 = vmul.f32 %v1839, %v1837
    %v1841 = vmul.f32 %v1840, %v1839
    %v1842 = vmul.f32 0.5, %v1841
    %v1843 = vsub.f32 1.5, %v1842
    %v1844 = vmul.f32 %v1839, %v1843
    %vm1845 = vweird.f32 %v1837
    %vm1846 = vweird.f32 %v1839
    %vm1847 = vmor %vm1845, %vm1846
    %v1848 = vsel %vm1847, %v1839, %v1844
    %v1849 = vrsqrt.pop %v1838
    %v1850 = vmul.f32 %v1849, %v1838
    %v1851 = vmul.f32 %v1850, %v1849
    %v1852 = vmul.f32 0.5, %v1851
    %v1853 = vsub.f32 1.5, %v1852
    %v1854 = vmul.f32 %v1849, %v1853
    %vm1855 = vweird.f32 %v1838
    %vm1856 = vweird.f32 %v1849
    %vm1857 = vmor %vm1855, %vm1856
    %v1858 = vsel %vm1857, %v1849, %v1854
    %v1859 = vmul.f32 %v1825, %v1848
    %v1860 = vmul.f32 %v1826, %v1858
    %v1861 = vld [vmem:[%s5] sm:$0x1]
    %v1863 = vperm.slane %v1861, 0
    %v1865 = vmul.f32 %v1859, %v1863
    %v1866 = vmul.f32 %v1860, %v1863
    %v1867 = vld [vmem:[%s6] sm:$0x1]
    %v1869 = vperm.slane %v1867, 0
    %v1871 = vadd.f32 %v1865, %v1869
    %v1872 = vadd.f32 %v1866, %v1869
    %v1873 = vpack.c.bf16 %v1871, %v1871
    %v1874 = vpack.c.bf16 %v1872, %v1872
    %vm1875 = vcmask 257024
    %1876 = vst.msk [vmem:[%s7] sm:$0xf] %vm1875, %v1873
    %1877 = vst.msk [vmem:[%s7 + $0x4] sm:$0xf] %vm1875, %v1874
    // Predicated region
    $region34: #{_lambda_.18} parent=1 // pred_check
      _
    $region35: #{_lambda_.18} parent=1 // pred_check_branch
      %1879 = sbr.rel (0) target = $region37
    $region36: #{_lambda_.18} parent=1 // pred_region
      _
    $region37: #{_lambda_.18} parent=1 // pred_fallthru
      _
    // Predicated region
    $region38: #{_lambda_.18} parent=1 // pred_check
      _
    $region39: #{_lambda_.18} parent=1 // pred_check_branch
      %1881 = sbr.rel (0) target = $region41
    $region40: #{_lambda_.18} parent=1 // pred_region
      _
    $region41: #{_lambda_.18} parent=1 // pred_fallthru
      _
    %1882 = vsyncpa [#allocation3], 1

// kernel: _lambda_.14
$region0: #{_lambda_.14}
  #allocation0 [shape = 'u32[]', space=smem, size = 0x4, offset = 0x4, fixed_abs, tag = 'smem constant byte address 0x4 - core index']
  #allocation1 [shape = 'u32[72,128]{1,0:T(1,128)}', space=vmem, size = 0x9000, scoped, tag = 'internal scratch']
  %s0 = inlined_call_operand.vmem [shape: bf16[16,32], index: 0, kind: input, shape index: {}]
  %s1 = inlined_call_operand.hbm [shape: bf16[32,2048], index: 1, kind: input, shape index: {}]
  %s2 = inlined_call_operand.vmem [shape: f32[1,2048], index: 2, kind: input, shape index: {}]
  %s3 = inlined_call_operand.hbm [shape: bf16[2048,32], index: 3, kind: input, shape index: {}]
  %s4 = inlined_call_operand.vmem [shape: f32[1,32], index: 4, kind: input, shape index: {}]
  %s5 = inlined_call_operand.vmem [shape: f32[1,32], index: 5, kind: input, shape index: {}]
  %s6 = inlined_call_operand.vmem [shape: f32[1,32], index: 6, kind: input, shape index: {}]
  %s7 = inlined_call_operand.vmem [shape: bf16[16,32], index: 7, kind: output, shape index: {}]
  %s8 = sld [smem:[#allocation0]]
  $region46: #{_lambda_.14} parent=0
    _
  %s10 = ssub.s32 1, %s8
  %s11 = scalar_select 0, %s10, %s8
  $region1: #{_lambda_.14} parent=0
    #allocation2 [shape = 'u8[131072]{0}', space=vmem, size = 0x20000, scoped, tag = 'input window, operand 1, single buffered']
    #allocation3 [shape = 's32[1]{0}', space=sflag, size = 0x4, scoped, tag = 'scoped memory for _lambda_.14']
    #allocation4 [shape = 'u8[524288]{0}', space=vmem, size = 0x80000, scoped, tag = 'input window, operand 3, single buffered']
    #allocation5 [shape = 's32[1]{0}', space=sflag, size = 0x4, scoped, tag = 'scoped memory for _lambda_.14']
    %12 = vsyncpa [#allocation3], 0
    %13 = vsyncpa [#allocation5], 0
    // Predicated region
    $region2: #{_lambda_.14} parent=1 // pred_check
      _
    $region3: #{_lambda_.14} parent=1 // pred_check_branch
      %15 = sbr.rel (0) target = $region5
    $region4: #{_lambda_.14} parent=1 // pred_region
      _
    $region5: #{_lambda_.14} parent=1 // pred_fallthru
      _
    // Predicated region
    $region6: #{_lambda_.14} parent=1 // pred_check
      _
    $region7: #{_lambda_.14} parent=1 // pred_check_branch
      %17 = sbr.rel (0) target = $region9
    $region8: #{_lambda_.14} parent=1 // pred_region
      %19 = vsyncadd [#allocation3], 0
      %s20 = sshll.u32 %s1, 4
      %s21 = int_to_ptr.hbm [resolvable:$true] %s20
      %s22 = sshll.u32 [#allocation2], 4
      %s23 = int_to_ptr.vmem [resolvable:$true] %s22
      %28 = dma.hbm_to_vmem [thread:$0]  %s21, 4096, %s23, [#allocation3], 1024, 1024, 64
    $region9: #{_lambda_.14} parent=1 // pred_fallthru
      _
    // Predicated region
    $region10: #{_lambda_.14} parent=1 // pred_check
      _
    $region11: #{_lambda_.14} parent=1 // pred_check_branch
      %30 = sbr.rel (0) target = $region13
    $region12: #{_lambda_.14} parent=1 // pred_region
      _
    $region13: #{_lambda_.14} parent=1 // pred_fallthru
      _
    // Predicated region
    $region14: #{_lambda_.14} parent=1 // pred_check
      _
    $region15: #{_lambda_.14} parent=1 // pred_check_branch
      %32 = sbr.rel (0) target = $region17
    $region16: #{_lambda_.14} parent=1 // pred_region
      %34 = vsyncadd [#allocation5], 0
      %s35 = sshll.u32 %s3, 4
      %s36 = int_to_ptr.hbm [resolvable:$true] %s35
      %s37 = sshll.u32 [#allocation4], 4
      %s38 = int_to_ptr.vmem [resolvable:$true] %s37
      %43 = dma.hbm_to_vmem [thread:$0]  %s36, 16384, %s38, [#allocation5], 64, 64, 4
    $region17: #{_lambda_.14} parent=1 // pred_fallthru
      _
    // Predicated region
    $region18: #{_lambda_.14} parent=1 // pred_check
      _
    $region19: #{_lambda_.14} parent=1 // pred_check_branch
      %45 = sbr.rel (0) target = $region21
    $region20: #{_lambda_.14} parent=1 // pred_region
      _
    $region21: #{_lambda_.14} parent=1 // pred_fallthru
      _
    // Predicated region
    $region22: #{_lambda_.14} parent=1 // pred_check
      _
    $region23: #{_lambda_.14} parent=1 // pred_check_branch
      %47 = sbr.rel (0) target = $region25
    $region24: #{_lambda_.14} parent=1 // pred_region
      _
    $region25: #{_lambda_.14} parent=1 // pred_fallthru
      _
    // Predicated region
    $region26: #{_lambda_.14} parent=1 // pred_check
      _
    $region27: #{_lambda_.14} parent=1 // pred_check_branch
      %49 = sbr.rel (0) target = $region29
    $region28: #{_lambda_.14} parent=1 // pred_region
      _
    $region29: #{_lambda_.14} parent=1 // pred_fallthru
      _
    // Predicated region
    $region30: #{_lambda_.14} parent=1 // pred_check
      _
    $region31: #{_lambda_.14} parent=1 // pred_check_branch
      %51 = sbr.rel (0) target = $region33
    $region32: #{_lambda_.14} parent=1 // pred_region
      %53 = dma.done [#allocation3], 4096
    $region33: #{_lambda_.14} parent=1 // pred_fallthru
      _
    // Predicated region
    $region34: #{_lambda_.14} parent=1 // pred_check
      _
    $region35: #{_lambda_.14} parent=1 // pred_check_branch
      %55 = sbr.rel (0) target = $region37
    $region36: #{_lambda_.14} parent=1 // pred_region
      %57 = dma.done [#allocation5], 16384
    $region37: #{_lambda_.14} parent=1 // pred_fallthru
      _
    %v59 = vld [vmem:[%s0] sm:$0xf]
    %v60 = vld [vmem:[%s0 + $0x4] sm:$0xf]
    %v61 = vld [vmem:[#allocation2] sm:$0xff]
    %v62 = vld [vmem:[#allocation2 + $0x8] sm:$0xff]
    %v63 = vld [vmem:[#allocation2 + $0x10] sm:$0xff]
    %v64 = vld [vmem:[#allocation2 + $0x18] sm:$0xff]
    %v65 = vld [vmem:[#allocation2 + $0x20] sm:$0xff]
    %v66 = vld [vmem:[#allocation2 + $0x28] sm:$0xff]
    %v67 = vld [vmem:[#allocation2 + $0x30] sm:$0xff]
    %v68 = vld [vmem:[#allocation2 + $0x38] sm:$0xff]
    %v69 = vld [vmem:[#allocation2 + $0x40] sm:$0xff]
    %v70 = vld [vmem:[#allocation2 + $0x48] sm:$0xff]
    %v71 = vld [vmem:[#allocation2 + $0x50] sm:$0xff]
    %v72 = vld [vmem:[#allocation2 + $0x58] sm:$0xff]
    %v73 = vld [vmem:[#allocation2 + $0x60] sm:$0xff]
    %v74 = vld [vmem:[#allocation2 + $0x68] sm:$0xff]
    %v75 = vld [vmem:[#allocation2 + $0x70] sm:$0xff]
    %v76 = vld [vmem:[#allocation2 + $0x78] sm:$0xff]
    %v77 = vld [vmem:[#allocation2 + $0x80] sm:$0xff]
    %v78 = vld [vmem:[#allocation2 + $0x88] sm:$0xff]
    %v79 = vld [vmem:[#allocation2 + $0x90] sm:$0xff]
    %v80 = vld [vmem:[#allocation2 + $0x98] sm:$0xff]
    %v81 = vld [vmem:[#allocation2 + $0xa0] sm:$0xff]
    %v82 = vld [vmem:[#allocation2 + $0xa8] sm:$0xff]
    %v83 = vld [vmem:[#allocation2 + $0xb0] sm:$0xff]
    %v84 = vld [vmem:[#allocation2 + $0xb8] sm:$0xff]
    %v85 = vld [vmem:[#allocation2 + $0xc0] sm:$0xff]
    %v86 = vld [vmem:[#allocation2 + $0xc8] sm:$0xff]
    %v87 = vld [vmem:[#allocation2 + $0xd0] sm:$0xff]
    %v88 = vld [vmem:[#allocation2 + $0xd8] sm:$0xff]
    %v89 = vld [vmem:[#allocation2 + $0xe0] sm:$0xff]
    %v90 = vld [vmem:[#allocation2 + $0xe8] sm:$0xff]
    %v91 = vld [vmem:[#allocation2 + $0xf0] sm:$0xff]
    %v92 = vld [vmem:[#allocation2 + $0xf8] sm:$0xff]
    %v93 = vld [vmem:[%s2] sm:$0xff]
    %v94 = vld [vmem:[%s2 + $0x8] sm:$0xff]
    %v97 = vperm.slane %v93, 0
    %v98 = vperm.slane %v93, 1
    %v99 = vperm.slane %v93, 2
    %v100 = vperm.slane %v93, 3
    %v101 = vperm.slane %v93, 4
    %v102 = vperm.slane %v93, 5
    %v103 = vperm.slane %v93, 6
    %v104 = vperm.slane %v93, 7
    %v105 = vperm.slane %v94, 0
    %v106 = vperm.slane %v94, 1
    %v107 = vperm.slane %v94, 2
    %v108 = vperm.slane %v94, 3
    %v109 = vperm.slane %v94, 4
    %v110 = vperm.slane %v94, 5
    %v111 = vperm.slane %v94, 6
    %v112 = vperm.slane %v94, 7
    %v131 = vunpack.c.l.b16 %v59
    %v132 = vunpack.c.l.b16 %v60
    %v133 = vpack.c.b16 %v132, %v131
    %v166 = vunpack.c.l.b16 %v61
    %v167 = vunpack.c.h.b16 %v61
    %v168 = vunpack.c.l.b16 %v62
    %v169 = vunpack.c.h.b16 %v62
    %v170 = vunpack.c.l.b16 %v63
    %v171 = vunpack.c.h.b16 %v63
    %v172 = vunpack.c.l.b16 %v64
    %v173 = vunpack.c.h.b16 %v64
    %v174 = vunpack.c.l.b16 %v65
    %v175 = vunpack.c.h.b16 %v65
    %v176 = vunpack.c.l.b16 %v66
    %v177 = vunpack.c.h.b16 %v66
    %v178 = vunpack.c.l.b16 %v67
    %v179 = vunpack.c.h.b16 %v67
    %v180 = vunpack.c.l.b16 %v68
    %v181 = vunpack.c.h.b16 %v68
    %v182 = vunpack.c.l.b16 %v69
    %v183 = vunpack.c.h.b16 %v69
    %v184 = vunpack.c.l.b16 %v70
    %v185 = vunpack.c.h.b16 %v70
    %v186 = vunpack.c.l.b16 %v71
    %v187 = vunpack.c.h.b16 %v71
    %v188 = vunpack.c.l.b16 %v72
    %v189 = vunpack.c.h.b16 %v72
    %v190 = vunpack.c.l.b16 %v73
    %v191 = vunpack.c.h.b16 %v73
    %v192 = vunpack.c.l.b16 %v74
    %v193 = vunpack.c.h.b16 %v74
    %v194 = vunpack.c.l.b16 %v75
    %v195 = vunpack.c.h.b16 %v75
    %v196 = vunpack.c.l.b16 %v76
    %v197 = vunpack.c.h.b16 %v76
    %v198 = vunpack.c.l.b16 %v77
    %v199 = vunpack.c.h.b16 %v77
    %v200 = vunpack.c.l.b16 %v78
    %v201 = vunpack.c.h.b16 %v78
    %v202 = vunpack.c.l.b16 %v79
    %v203 = vunpack.c.h.b16 %v79
    %v204 = vunpack.c.l.b16 %v80
    %v205 = vunpack.c.h.b16 %v80
    %v206 = vunpack.c.l.b16 %v81
    %v207 = vunpack.c.h.b16 %v81
    %v208 = vunpack.c.l.b16 %v82
    %v209 = vunpack.c.h.b16 %v82
    %v210 = vunpack.c.l.b16 %v83
    %v211 = vunpack.c.h.b16 %v83
    %v212 = vunpack.c.l.b16 %v84
    %v213 = vunpack.c.h.b16 %v84
    %v214 = vunpack.c.l.b16 %v85
    %v215 = vunpack.c.h.b16 %v85
    %v216 = vunpack.c.l.b16 %v86
    %v217 = vunpack.c.h.b16 %v86
    %v218 = vunpack.c.l.b16 %v87
    %v219 = vunpack.c.h.b16 %v87
    %v220 = vunpack.c.l.b16 %v88
    %v221 = vunpack.c.h.b16 %v88
    %v222 = vunpack.c.l.b16 %v89
    %v223 = vunpack.c.h.b16 %v89
    %v224 = vunpack.c.l.b16 %v90
    %v225 = vunpack.c.h.b16 %v90
    %v226 = vunpack.c.l.b16 %v91
    %v227 = vunpack.c.h.b16 %v91
    %v228 = vunpack.c.l.b16 %v92
    %v229 = vunpack.c.h.b16 %v92
    %v230 = vpack.c.b16 %v182, %v166
    %v231 = vpack.c.b16 %v183, %v167
    %v232 = vpack.c.b16 %v184, %v168
    %v233 = vpack.c.b16 %v185, %v169
    %v234 = vpack.c.b16 %v186, %v170
    %v235 = vpack.c.b16 %v187, %v171
    %v236 = vpack.c.b16 %v188, %v172
    %v237 = vpack.c.b16 %v189, %v173
    %v238 = vpack.c.b16 %v190, %v174
    %v239 = vpack.c.b16 %v191, %v175
    %v240 = vpack.c.b16 %v192, %v176
    %v241 = vpack.c.b16 %v193, %v177
    %v242 = vpack.c.b16 %v194, %v178
    %v243 = vpack.c.b16 %v195, %v179
    %v244 = vpack.c.b16 %v196, %v180
    %v245 = vpack.c.b16 %v197, %v181
    %v246 = vpack.c.b16 %v214, %v198
    %v247 = vpack.c.b16 %v215, %v199
    %v248 = vpack.c.b16 %v216, %v200
    %v249 = vpack.c.b16 %v217, %v201
    %v250 = vpack.c.b16 %v218, %v202
    %v251 = vpack.c.b16 %v219, %v203
    %v252 = vpack.c.b16 %v220, %v204
    %v253 = vpack.c.b16 %v221, %v205
    %v254 = vpack.c.b16 %v222, %v206
    %v255 = vpack.c.b16 %v223, %v207
    %v256 = vpack.c.b16 %v224, %v208
    %v257 = vpack.c.b16 %v225, %v209
    %v258 = vpack.c.b16 %v226, %v210
    %v259 = vpack.c.b16 %v227, %v211
    %v260 = vpack.c.b16 %v228, %v212
    %v261 = vpack.c.b16 %v229, %v213
    %vm294 = vcmask 261120
    %v296 = vsel %vm294, %v133, 0
    %298 = vmatpush.bf16.msra.mxu0 0
    %299 = vmatpush.bf16.msra.mxu0 0
    %300 = vmatpush.bf16.msra.mxu0 0
    %301 = vmatpush.bf16.msra.mxu0 0
    %302 = vmatpush.bf16.msra.mxu0 0
    %303 = vmatpush.bf16.msra.mxu0 0
    %304 = vmatpush.bf16.msra.mxu0 %v246
    %305 = vmatpush.bf16.msra.mxu0 %v230
    %306 = vmatmul.bf16.gmra.mxu0 %v296
    %v307 = vpop.f32.mrf.mxu0
    %v308 = vadd.f32 %v97, %v307
    %v309 = vpop.f32.mrf.mxu0
    %v310 = vadd.f32 %v97, %v309
    %311 = vdwg.mxu0
    %312 = vmatpush.bf16.msra.mxu0 0
    %313 = vmatpush.bf16.msra.mxu0 0
    %314 = vmatpush.bf16.msra.mxu0 0
    %315 = vmatpush.bf16.msra.mxu0 0
    %316 = vmatpush.bf16.msra.mxu0 0
    %317 = vmatpush.bf16.msra.mxu0 0
    %318 = vmatpush.bf16.msra.mxu0 %v247
    %319 = vmatpush.bf16.msra.mxu0 %v231
    %320 = vmatmul.bf16.gmra.mxu0 %v296
    %v321 = vpop.f32.mrf.mxu0
    %v322 = vadd.f32 %v98, %v321
    %v323 = vpop.f32.mrf.mxu0
    %v324 = vadd.f32 %v98, %v323
    %325 = vdwg.mxu0
    %326 = vmatpush.bf16.msra.mxu0 0
    %327 = vmatpush.bf16.msra.mxu0 0
    %328 = vmatpush.bf16.msra.mxu0 0
    %329 = vmatpush.bf16.msra.mxu0 0
    %330 = vmatpush.bf16.msra.mxu0 0
    %331 = vmatpush.bf16.msra.mxu0 0
    %332 = vmatpush.bf16.msra.mxu0 %v248
    %333 = vmatpush.bf16.msra.mxu0 %v232
    %334 = vmatmul.bf16.gmra.mxu0 %v296
    %v335 = vpop.f32.mrf.mxu0
    %v336 = vadd.f32 %v99, %v335
    %v337 = vpop.f32.mrf.mxu0
    %v338 = vadd.f32 %v99, %v337
    %339 = vdwg.mxu0
    %340 = vmatpush.bf16.msra.mxu0 0
    %341 = vmatpush.bf16.msra.mxu0 0
    %342 = vmatpush.bf16.msra.mxu0 0
    %343 = vmatpush.bf16.msra.mxu0 0
    %344 = vmatpush.bf16.msra.mxu0 0
    %345 = vmatpush.bf16.msra.mxu0 0
    %346 = vmatpush.bf16.msra.mxu0 %v249
    %347 = vmatpush.bf16.msra.mxu0 %v233
    %348 = vmatmul.bf16.gmra.mxu0 %v296
    %v349 = vpop.f32.mrf.mxu0
    %v350 = vadd.f32 %v100, %v349
    %v351 = vpop.f32.mrf.mxu0
    %v352 = vadd.f32 %v100, %v351
    %353 = vdwg.mxu0
    %354 = vmatpush.bf16.msra.mxu0 0
    %355 = vmatpush.bf16.msra.mxu0 0
    %356 = vmatpush.bf16.msra.mxu0 0
    %357 = vmatpush.bf16.msra.mxu0 0
    %358 = vmatpush.bf16.msra.mxu0 0
    %359 = vmatpush.bf16.msra.mxu0 0
    %360 = vmatpush.bf16.msra.mxu0 %v250
    %361 = vmatpush.bf16.msra.mxu0 %v234
    %362 = vmatmul.bf16.gmra.mxu0 %v296
    %v363 = vpop.f32.mrf.mxu0
    %v364 = vadd.f32 %v101, %v363
    %v365 = vpop.f32.mrf.mxu0
    %v366 = vadd.f32 %v101, %v365
    %367 = vdwg.mxu0
    %368 = vmatpush.bf16.msra.mxu0 0
    %369 = vmatpush.bf16.msra.mxu0 0
    %370 = vmatpush.bf16.msra.mxu0 0
    %371 = vmatpush.bf16.msra.mxu0 0
    %372 = vmatpush.bf16.msra.mxu0 0
    %373 = vmatpush.bf16.msra.mxu0 0
    %374 = vmatpush.bf16.msra.mxu0 %v251
    %375 = vmatpush.bf16.msra.mxu0 %v235
    %376 = vmatmul.bf16.gmra.mxu0 %v296
    %v377 = vpop.f32.mrf.mxu0
    %v378 = vadd.f32 %v102, %v377
    %v379 = vpop.f32.mrf.mxu0
    %v380 = vadd.f32 %v102, %v379
    %381 = vdwg.mxu0
    %382 = vmatpush.bf16.msra.mxu0 0
    %383 = vmatpush.bf16.msra.mxu0 0
    %384 = vmatpush.bf16.msra.mxu0 0
    %385 = vmatpush.bf16.msra.mxu0 0
    %386 = vmatpush.bf16.msra.mxu0 0
    %387 = vmatpush.bf16.msra.mxu0 0
    %388 = vmatpush.bf16.msra.mxu0 %v252
    %389 = vmatpush.bf16.msra.mxu0 %v236
    %390 = vmatmul.bf16.gmra.mxu0 %v296
    %v391 = vpop.f32.mrf.mxu0
    %v392 = vadd.f32 %v103, %v391
    %v393 = vpop.f32.mrf.mxu0
    %v394 = vadd.f32 %v103, %v393
    %395 = vdwg.mxu0
    %396 = vmatpush.bf16.msra.mxu0 0
    %397 = vmatpush.bf16.msra.mxu0 0
    %398 = vmatpush.bf16.msra.mxu0 0
    %399 = vmatpush.bf16.msra.mxu0 0
    %400 = vmatpush.bf16.msra.mxu0 0
    %401 = vmatpush.bf16.msra.mxu0 0
    %402 = vmatpush.bf16.msra.mxu0 %v253
    %403 = vmatpush.bf16.msra.mxu0 %v237
    %404 = vmatmul.bf16.gmra.mxu0 %v296
    %v405 = vpop.f32.mrf.mxu0
    %v406 = vadd.f32 %v104, %v405
    %v407 = vpop.f32.mrf.mxu0
    %v408 = vadd.f32 %v104, %v407
    %409 = vdwg.mxu0
    %410 = vmatpush.bf16.msra.mxu0 0
    %411 = vmatpush.bf16.msra.mxu0 0
    %412 = vmatpush.bf16.msra.mxu0 0
    %413 = vmatpush.bf16.msra.mxu0 0
    %414 = vmatpush.bf16.msra.mxu0 0
    %415 = vmatpush.bf16.msra.mxu0 0
    %416 = vmatpush.bf16.msra.mxu0 %v254
    %417 = vmatpush.bf16.msra.mxu0 %v238
    %418 = vmatmul.bf16.gmra.mxu0 %v296
    %v419 = vpop.f32.mrf.mxu0
    %v420 = vadd.f32 %v105, %v419
    %v421 = vpop.f32.mrf.mxu0
    %v422 = vadd.f32 %v105, %v421
    %423 = vdwg.mxu0
    %424 = vmatpush.bf16.msra.mxu0 0
    %425 = vmatpush.bf16.msra.mxu0 0
    %426 = vmatpush.bf16.msra.mxu0 0
    %427 = vmatpush.bf16.msra.mxu0 0
    %428 = vmatpush.bf16.msra.mxu0 0
    %429 = vmatpush.bf16.msra.mxu0 0
    %430 = vmatpush.bf16.msra.mxu0 %v255
    %431 = vmatpush.bf16.msra.mxu0 %v239
    %432 = vmatmul.bf16.gmra.mxu0 %v296
    %v433 = vpop.f32.mrf.mxu0
    %v434 = vadd.f32 %v106, %v433
    %v435 = vpop.f32.mrf.mxu0
    %v436 = vadd.f32 %v106, %v435
    %437 = vdwg.mxu0
    %438 = vmatpush.bf16.msra.mxu0 0
    %439 = vmatpush.bf16.msra.mxu0 0
    %440 = vmatpush.bf16.msra.mxu0 0
    %441 = vmatpush.bf16.msra.mxu0 0
    %442 = vmatpush.bf16.msra.mxu0 0
    %443 = vmatpush.bf16.msra.mxu0 0
    %444 = vmatpush.bf16.msra.mxu0 %v256
    %445 = vmatpush.bf16.msra.mxu0 %v240
    %446 = vmatmul.bf16.gmra.mxu0 %v296
    %v447 = vpop.f32.mrf.mxu0
    %v448 = vadd.f32 %v107, %v447
    %v449 = vpop.f32.mrf.mxu0
    %v450 = vadd.f32 %v107, %v449
    %451 = vdwg.mxu0
    %452 = vmatpush.bf16.msra.mxu0 0
    %453 = vmatpush.bf16.msra.mxu0 0
    %454 = vmatpush.bf16.msra.mxu0 0
    %455 = vmatpush.bf16.msra.mxu0 0
    %456 = vmatpush.bf16.msra.mxu0 0
    %457 = vmatpush.bf16.msra.mxu0 0
    %458 = vmatpush.bf16.msra.mxu0 %v257
    %459 = vmatpush.bf16.msra.mxu0 %v241
    %460 = vmatmul.bf16.gmra.mxu0 %v296
    %v461 = vpop.f32.mrf.mxu0
    %v462 = vadd.f32 %v108, %v461
    %v463 = vpop.f32.mrf.mxu0
    %v464 = vadd.f32 %v108, %v463
    %465 = vdwg.mxu0
    %466 = vmatpush.bf16.msra.mxu0 0
    %467 = vmatpush.bf16.msra.mxu0 0
    %468 = vmatpush.bf16.msra.mxu0 0
    %469 = vmatpush.bf16.msra.mxu0 0
    %470 = vmatpush.bf16.msra.mxu0 0
    %471 = vmatpush.bf16.msra.mxu0 0
    %472 = vmatpush.bf16.msra.mxu0 %v258
    %473 = vmatpush.bf16.msra.mxu0 %v242
    %474 = vmatmul.bf16.gmra.mxu0 %v296
    %v475 = vpop.f32.mrf.mxu0
    %v476 = vadd.f32 %v109, %v475
    %v477 = vpop.f32.mrf.mxu0
    %v478 = vadd.f32 %v109, %v477
    %479 = vdwg.mxu0
    %480 = vmatpush.bf16.msra.mxu0 0
    %481 = vmatpush.bf16.msra.mxu0 0
    %482 = vmatpush.bf16.msra.mxu0 0
    %483 = vmatpush.bf16.msra.mxu0 0
    %484 = vmatpush.bf16.msra.mxu0 0
    %485 = vmatpush.bf16.msra.mxu0 0
    %486 = vmatpush.bf16.msra.mxu0 %v259
    %487 = vmatpush.bf16.msra.mxu0 %v243
    %488 = vmatmul.bf16.gmra.mxu0 %v296
    %v489 = vpop.f32.mrf.mxu0
    %v490 = vadd.f32 %v110, %v489
    %v491 = vpop.f32.mrf.mxu0
    %v492 = vadd.f32 %v110, %v491
    %493 = vdwg.mxu0
    %494 = vmatpush.bf16.msra.mxu0 0
    %495 = vmatpush.bf16.msra.mxu0 0
    %496 = vmatpush.bf16.msra.mxu0 0
    %497 = vmatpush.bf16.msra.mxu0 0
    %498 = vmatpush.bf16.msra.mxu0 0
    %499 = vmatpush.bf16.msra.mxu0 0
    %500 = vmatpush.bf16.msra.mxu0 %v260
    %501 = vmatpush.bf16.msra.mxu0 %v244
    %502 = vmatmul.bf16.gmra.mxu0 %v296
    %v503 = vpop.f32.mrf.mxu0
    %v504 = vadd.f32 %v111, %v503
    %v505 = vpop.f32.mrf.mxu0
    %v506 = vadd.f32 %v111, %v505
    %507 = vdwg.mxu0
    %508 = vmatpush.bf16.msra.mxu0 0
    %509 = vmatpush.bf16.msra.mxu0 0
    %510 = vmatpush.bf16.msra.mxu0 0
    %511 = vmatpush.bf16.msra.mxu0 0
    %512 = vmatpush.bf16.msra.mxu0 0
    %513 = vmatpush.bf16.msra.mxu0 0
    %514 = vmatpush.bf16.msra.mxu0 %v261
    %515 = vmatpush.bf16.msra.mxu0 %v245
    %516 = vmatmul.bf16.gmra.mxu0 %v296
    %v517 = vpop.f32.mrf.mxu0
    %v518 = vadd.f32 %v112, %v517
    %v519 = vpop.f32.mrf.mxu0
    %v520 = vadd.f32 %v112, %v519
    %521 = vdwg.mxu0
    %v522 = vmax.f32 %v308, 0.0
    %v523 = vmax.f32 %v322, 0.0
    %v524 = vmax.f32 %v336, 0.0
    %v525 = vmax.f32 %v350, 0.0
    %v526 = vmax.f32 %v364, 0.0
    %v527 = vmax.f32 %v378, 0.0
    %v528 = vmax.f32 %v392, 0.0
    %v529 = vmax.f32 %v406, 0.0
    %v530 = vmax.f32 %v420, 0.0
    %v531 = vmax.f32 %v434, 0.0
    %v532 = vmax.f32 %v448, 0.0
    %v533 = vmax.f32 %v462, 0.0
    %v534 = vmax.f32 %v476, 0.0
    %v535 = vmax.f32 %v490, 0.0
    %v536 = vmax.f32 %v504, 0.0
    %v537 = vmax.f32 %v518, 0.0
    %v538 = vmax.f32 %v310, 0.0
    %v539 = vmax.f32 %v324, 0.0
    %v540 = vmax.f32 %v338, 0.0
    %v541 = vmax.f32 %v352, 0.0
    %v542 = vmax.f32 %v366, 0.0
    %v543 = vmax.f32 %v380, 0.0
    %v544 = vmax.f32 %v394, 0.0
    %v545 = vmax.f32 %v408, 0.0
    %v546 = vmax.f32 %v422, 0.0
    %v547 = vmax.f32 %v436, 0.0
    %v548 = vmax.f32 %v450, 0.0
    %v549 = vmax.f32 %v464, 0.0
    %v550 = vmax.f32 %v478, 0.0
    %v551 = vmax.f32 %v492, 0.0
    %v552 = vmax.f32 %v506, 0.0
    %v553 = vmax.f32 %v520, 0.0
    %v554 = vpack.c.bf16 %v538, %v522
    %v555 = vpack.c.bf16 %v539, %v523
    %v556 = vpack.c.bf16 %v540, %v524
    %v557 = vpack.c.bf16 %v541, %v525
    %v558 = vpack.c.bf16 %v542, %v526
    %v559 = vpack.c.bf16 %v543, %v527
    %v560 = vpack.c.bf16 %v544, %v528
    %v561 = vpack.c.bf16 %v545, %v529
    %v562 = vpack.c.bf16 %v546, %v530
    %v563 = vpack.c.bf16 %v547, %v531
    %v564 = vpack.c.bf16 %v548, %v532
    %v565 = vpack.c.bf16 %v549, %v533
    %v566 = vpack.c.bf16 %v550, %v534
    %v567 = vpack.c.bf16 %v551, %v535
    %v568 = vpack.c.bf16 %v552, %v536
    %v569 = vpack.c.bf16 %v553, %v537
    %v570 = vld [vmem:[#allocation4] sm:$0xf]
    %v571 = vld [vmem:[#allocation4 + $0x4] sm:$0xf]
    %v572 = vld [vmem:[#allocation4 + $0x8] sm:$0xf]
    %v573 = vld [vmem:[#allocation4 + $0xc] sm:$0xf]
    %v574 = vld [vmem:[#allocation4 + $0x10] sm:$0xf]
    %v575 = vld [vmem:[#allocation4 + $0x14] sm:$0xf]
    %v576 = vld [vmem:[#allocation4 + $0x18] sm:$0xf]
    %v577 = vld [vmem:[#allocation4 + $0x1c] sm:$0xf]
    %v578 = vld [vmem:[#allocation4 + $0x20] sm:$0xf]
    %v579 = vld [vmem:[#allocation4 + $0x24] sm:$0xf]
    %v580 = vld [vmem:[#allocation4 + $0x28] sm:$0xf]
    %v581 = vld [vmem:[#allocation4 + $0x2c] sm:$0xf]
    %v582 = vld [vmem:[#allocation4 + $0x30] sm:$0xf]
    %v583 = vld [vmem:[#allocation4 + $0x34] sm:$0xf]
    %v584 = vld [vmem:[#allocation4 + $0x38] sm:$0xf]
    %v585 = vld [vmem:[#allocation4 + $0x3c] sm:$0xf]
    %v586 = vld [vmem:[#allocation4 + $0x40] sm:$0xf]
    %v587 = vld [vmem:[#allocation4 + $0x44] sm:$0xf]
    %v588 = vld [vmem:[#allocation4 + $0x48] sm:$0xf]
    %v589 = vld [vmem:[#allocation4 + $0x4c] sm:$0xf]
    %v590 = vld [vmem:[#allocation4 + $0x50] sm:$0xf]
    %v591 = vld [vmem:[#allocation4 + $0x54] sm:$0xf]
    %v592 = vld [vmem:[#allocation4 + $0x58] sm:$0xf]
    %v593 = vld [vmem:[#allocation4 + $0x5c] sm:$0xf]
    %v594 = vld [vmem:[#allocation4 + $0x60] sm:$0xf]
    %v595 = vld [vmem:[#allocation4 + $0x64] sm:$0xf]
    %v596 = vld [vmem:[#allocation4 + $0x68] sm:$0xf]
    %v597 = vld [vmem:[#allocation4 + $0x6c] sm:$0xf]
    %v598 = vld [vmem:[#allocation4 + $0x70] sm:$0xf]
    %v599 = vld [vmem:[#allocation4 + $0x74] sm:$0xf]
    %v600 = vld [vmem:[#allocation4 + $0x78] sm:$0xf]
    %v601 = vld [vmem:[#allocation4 + $0x7c] sm:$0xf]
    %v602 = vld [vmem:[#allocation4 + $0x80] sm:$0xf]
    %v603 = vld [vmem:[#allocation4 + $0x84] sm:$0xf]
    %v604 = vld [vmem:[#allocation4 + $0x88] sm:$0xf]
    %v605 = vld [vmem:[#allocation4 + $0x8c] sm:$0xf]
    %v606 = vld [vmem:[#allocation4 + $0x90] sm:$0xf]
    %v607 = vld [vmem:[#allocation4 + $0x94] sm:$0xf]
    %v608 = vld [vmem:[#allocation4 + $0x98] sm:$0xf]
    %v609 = vld [vmem:[#allocation4 + $0x9c] sm:$0xf]
    %v610 = vld [vmem:[#allocation4 + $0xa0] sm:$0xf]
    %v611 = vld [vmem:[#allocation4 + $0xa4] sm:$0xf]
    %v612 = vld [vmem:[#allocation4 + $0xa8] sm:$0xf]
    %v613 = vld [vmem:[#allocation4 + $0xac] sm:$0xf]
    %v614 = vld [vmem:[#allocation4 + $0xb0] sm:$0xf]
    %v615 = vld [vmem:[#allocation4 + $0xb4] sm:$0xf]
    %v616 = vld [vmem:[#allocation4 + $0xb8] sm:$0xf]
    %v617 = vld [vmem:[#allocation4 + $0xbc] sm:$0xf]
    %v618 = vld [vmem:[#allocation4 + $0xc0] sm:$0xf]
    %v619 = vld [vmem:[#allocation4 + $0xc4] sm:$0xf]
    %v620 = vld [vmem:[#allocation4 + $0xc8] sm:$0xf]
    %v621 = vld [vmem:[#allocation4 + $0xcc] sm:$0xf]
    %v622 = vld [vmem:[#allocation4 + $0xd0] sm:$0xf]
    %v623 = vld [vmem:[#allocation4 + $0xd4] sm:$0xf]
    %v624 = vld [vmem:[#allocation4 + $0xd8] sm:$0xf]
    %v625 = vld [vmem:[#allocation4 + $0xdc] sm:$0xf]
    %v626 = vld [vmem:[#allocation4 + $0xe0] sm:$0xf]
    %v627 = vld [vmem:[#allocation4 + $0xe4] sm:$0xf]
    %v628 = vld [vmem:[#allocation4 + $0xe8] sm:$0xf]
    %v629 = vld [vmem:[#allocation4 + $0xec] sm:$0xf]
    %v630 = vld [vmem:[#allocation4 + $0xf0] sm:$0xf]
    %v631 = vld [vmem:[#allocation4 + $0xf4] sm:$0xf]
    %v632 = vld [vmem:[#allocation4 + $0xf8] sm:$0xf]
    %v633 = vld [vmem:[#allocation4 + $0xfc] sm:$0xf]
    %v634 = vld [vmem:[#allocation4 + $0x100] sm:$0xf]
    %v635 = vld [vmem:[#allocation4 + $0x104] sm:$0xf]
    %v636 = vld [vmem:[#allocation4 + $0x108] sm:$0xf]
    %v637 = vld [vmem:[#allocation4 + $0x10c] sm:$0xf]
    %v638 = vld [vmem:[#allocation4 + $0x110] sm:$0xf]
    %v639 = vld [vmem:[#allocation4 + $0x114] sm:$0xf]
    %v640 = vld [vmem:[#allocation4 + $0x118] sm:$0xf]
    %v641 = vld [vmem:[#allocation4 + $0x11c] sm:$0xf]
    %v642 = vld [vmem:[#allocation4 + $0x120] sm:$0xf]
    %v643 = vld [vmem:[#allocation4 + $0x124] sm:$0xf]
    %v644 = vld [vmem:[#allocation4 + $0x128] sm:$0xf]
    %v645 = vld [vmem:[#allocation4 + $0x12c] sm:$0xf]
    %v646 = vld [vmem:[#allocation4 + $0x130] sm:$0xf]
    %v647 = vld [vmem:[#allocation4 + $0x134] sm:$0xf]
    %v648 = vld [vmem:[#allocation4 + $0x138] sm:$0xf]
    %v649 = vld [vmem:[#allocation4 + $0x13c] sm:$0xf]
    %v650 = vld [vmem:[#allocation4 + $0x140] sm:$0xf]
    %v651 = vld [vmem:[#allocation4 + $0x144] sm:$0xf]
    %v652 = vld [vmem:[#allocation4 + $0x148] sm:$0xf]
    %v653 = vld [vmem:[#allocation4 + $0x14c] sm:$0xf]
    %v654 = vld [vmem:[#allocation4 + $0x150] sm:$0xf]
    %v655 = vld [vmem:[#allocation4 + $0x154] sm:$0xf]
    %v656 = vld [vmem:[#allocation4 + $0x158] sm:$0xf]
    %v657 = vld [vmem:[#allocation4 + $0x15c] sm:$0xf]
    %v658 = vld [vmem:[#allocation4 + $0x160] sm:$0xf]
    %v659 = vld [vmem:[#allocation4 + $0x164] sm:$0xf]
    %v660 = vld [vmem:[#allocation4 + $0x168] sm:$0xf]
    %v661 = vld [vmem:[#allocation4 + $0x16c] sm:$0xf]
    %v662 = vld [vmem:[#allocation4 + $0x170] sm:$0xf]
    %v663 = vld [vmem:[#allocation4 + $0x174] sm:$0xf]
    %v664 = vld [vmem:[#allocation4 + $0x178] sm:$0xf]
    %v665 = vld [vmem:[#allocation4 + $0x17c] sm:$0xf]
    %v666 = vld [vmem:[#allocation4 + $0x180] sm:$0xf]
    %v667 = vld [vmem:[#allocation4 + $0x184] sm:$0xf]
    %v668 = vld [vmem:[#allocation4 + $0x188] sm:$0xf]
    %v669 = vld [vmem:[#allocation4 + $0x18c] sm:$0xf]
    %v670 = vld [vmem:[#allocation4 + $0x190] sm:$0xf]
    %v671 = vld [vmem:[#allocation4 + $0x194] sm:$0xf]
    %v672 = vld [vmem:[#allocation4 + $0x198] sm:$0xf]
    %v673 = vld [vmem:[#allocation4 + $0x19c] sm:$0xf]
    %v674 = vld [vmem:[#allocation4 + $0x1a0] sm:$0xf]
    %v675 = vld [vmem:[#allocation4 + $0x1a4] sm:$0xf]
    %v676 = vld [vmem:[#allocation4 + $0x1a8] sm:$0xf]
    %v677 = vld [vmem:[#allocation4 + $0x1ac] sm:$0xf]
    %v678 = vld [vmem:[#allocation4 + $0x1b0] sm:$0xf]
    %v679 = vld [vmem:[#allocation4 + $0x1b4] sm:$0xf]
    %v680 = vld [vmem:[#allocation4 + $0x1b8] sm:$0xf]
    %v681 = vld [vmem:[#allocation4 + $0x1bc] sm:$0xf]
    %v682 = vld [vmem:[#allocation4 + $0x1c0] sm:$0xf]
    %v683 = vld [vmem:[#allocation4 + $0x1c4] sm:$0xf]
    %v684 = vld [vmem:[#allocation4 + $0x1c8] sm:$0xf]
    %v685 = vld [vmem:[#allocation4 + $0x1cc] sm:$0xf]
    %v686 = vld [vmem:[#allocation4 + $0x1d0] sm:$0xf]
    %v687 = vld [vmem:[#allocation4 + $0x1d4] sm:$0xf]
    %v688 = vld [vmem:[#allocation4 + $0x1d8] sm:$0xf]
    %v689 = vld [vmem:[#allocation4 + $0x1dc] sm:$0xf]
    %v690 = vld [vmem:[#allocation4 + $0x1e0] sm:$0xf]
    %v691 = vld [vmem:[#allocation4 + $0x1e4] sm:$0xf]
    %v692 = vld [vmem:[#allocation4 + $0x1e8] sm:$0xf]
    %v693 = vld [vmem:[#allocation4 + $0x1ec] sm:$0xf]
    %v694 = vld [vmem:[#allocation4 + $0x1f0] sm:$0xf]
    %v695 = vld [vmem:[#allocation4 + $0x1f4] sm:$0xf]
    %v696 = vld [vmem:[#allocation4 + $0x1f8] sm:$0xf]
    %v697 = vld [vmem:[#allocation4 + $0x1fc] sm:$0xf]
    %v698 = vld [vmem:[#allocation4 + $0x200] sm:$0xf]
    %v699 = vld [vmem:[#allocation4 + $0x204] sm:$0xf]
    %v700 = vld [vmem:[#allocation4 + $0x208] sm:$0xf]
    %v701 = vld [vmem:[#allocation4 + $0x20c] sm:$0xf]
    %v702 = vld [vmem:[#allocation4 + $0x210] sm:$0xf]
    %v703 = vld [vmem:[#allocation4 + $0x214] sm:$0xf]
    %v704 = vld [vmem:[#allocation4 + $0x218] sm:$0xf]
    %v705 = vld [vmem:[#allocation4 + $0x21c] sm:$0xf]
    %v706 = vld [vmem:[#allocation4 + $0x220] sm:$0xf]
    %v707 = vld [vmem:[#allocation4 + $0x224] sm:$0xf]
    %v708 = vld [vmem:[#allocation4 + $0x228] sm:$0xf]
    %v709 = vld [vmem:[#allocation4 + $0x22c] sm:$0xf]
    %v710 = vld [vmem:[#allocation4 + $0x230] sm:$0xf]
    %v711 = vld [vmem:[#allocation4 + $0x234] sm:$0xf]
    %v712 = vld [vmem:[#allocation4 + $0x238] sm:$0xf]
    %v713 = vld [vmem:[#allocation4 + $0x23c] sm:$0xf]
    %v714 = vld [vmem:[#allocation4 + $0x240] sm:$0xf]
    %v715 = vld [vmem:[#allocation4 + $0x244] sm:$0xf]
    %v716 = vld [vmem:[#allocation4 + $0x248] sm:$0xf]
    %v717 = vld [vmem:[#allocation4 + $0x24c] sm:$0xf]
    %v718 = vld [vmem:[#allocation4 + $0x250] sm:$0xf]
    %v719 = vld [vmem:[#allocation4 + $0x254] sm:$0xf]
    %v720 = vld [vmem:[#allocation4 + $0x258] sm:$0xf]
    %v721 = vld [vmem:[#allocation4 + $0x25c] sm:$0xf]
    %v722 = vld [vmem:[#allocation4 + $0x260] sm:$0xf]
    %v723 = vld [vmem:[#allocation4 + $0x264] sm:$0xf]
    %v724 = vld [vmem:[#allocation4 + $0x268] sm:$0xf]
    %v725 = vld [vmem:[#allocation4 + $0x26c] sm:$0xf]
    %v726 = vld [vmem:[#allocation4 + $0x270] sm:$0xf]
    %v727 = vld [vmem:[#allocation4 + $0x274] sm:$0xf]
    %v728 = vld [vmem:[#allocation4 + $0x278] sm:$0xf]
    %v729 = vld [vmem:[#allocation4 + $0x27c] sm:$0xf]
    %v730 = vld [vmem:[#allocation4 + $0x280] sm:$0xf]
    %v731 = vld [vmem:[#allocation4 + $0x284] sm:$0xf]
    %v732 = vld [vmem:[#allocation4 + $0x288] sm:$0xf]
    %v733 = vld [vmem:[#allocation4 + $0x28c] sm:$0xf]
    %v734 = vld [vmem:[#allocation4 + $0x290] sm:$0xf]
    %v735 = vld [vmem:[#allocation4 + $0x294] sm:$0xf]
    %v736 = vld [vmem:[#allocation4 + $0x298] sm:$0xf]
    %v737 = vld [vmem:[#allocation4 + $0x29c] sm:$0xf]
    %v738 = vld [vmem:[#allocation4 + $0x2a0] sm:$0xf]
    %v739 = vld [vmem:[#allocation4 + $0x2a4] sm:$0xf]
    %v740 = vld [vmem:[#allocation4 + $0x2a8] sm:$0xf]
    %v741 = vld [vmem:[#allocation4 + $0x2ac] sm:$0xf]
    %v742 = vld [vmem:[#allocation4 + $0x2b0] sm:$0xf]
    %v743 = vld [vmem:[#allocation4 + $0x2b4] sm:$0xf]
    %v744 = vld [vmem:[#allocation4 + $0x2b8] sm:$0xf]
    %v745 = vld [vmem:[#allocation4 + $0x2bc] sm:$0xf]
    %v746 = vld [vmem:[#allocation4 + $0x2c0] sm:$0xf]
    %v747 = vld [vmem:[#allocation4 + $0x2c4] sm:$0xf]
    %v748 = vld [vmem:[#allocation4 + $0x2c8] sm:$0xf]
    %v749 = vld [vmem:[#allocation4 + $0x2cc] sm:$0xf]
    %v750 = vld [vmem:[#allocation4 + $0x2d0] sm:$0xf]
    %v751 = vld [vmem:[#allocation4 + $0x2d4] sm:$0xf]
    %v752 = vld [vmem:[#allocation4 + $0x2d8] sm:$0xf]
    %v753 = vld [vmem:[#allocation4 + $0x2dc] sm:$0xf]
    %v754 = vld [vmem:[#allocation4 + $0x2e0] sm:$0xf]
    %v755 = vld [vmem:[#allocation4 + $0x2e4] sm:$0xf]
    %v756 = vld [vmem:[#allocation4 + $0x2e8] sm:$0xf]
    %v757 = vld [vmem:[#allocation4 + $0x2ec] sm:$0xf]
    %v758 = vld [vmem:[#allocation4 + $0x2f0] sm:$0xf]
    %v759 = vld [vmem:[#allocation4 + $0x2f4] sm:$0xf]
    %v760 = vld [vmem:[#allocation4 + $0x2f8] sm:$0xf]
    %v761 = vld [vmem:[#allocation4 + $0x2fc] sm:$0xf]
    %v762 = vld [vmem:[#allocation4 + $0x300] sm:$0xf]
    %v763 = vld [vmem:[#allocation4 + $0x304] sm:$0xf]
    %v764 = vld [vmem:[#allocation4 + $0x308] sm:$0xf]
    %v765 = vld [vmem:[#allocation4 + $0x30c] sm:$0xf]
    %v766 = vld [vmem:[#allocation4 + $0x310] sm:$0xf]
    %v767 = vld [vmem:[#allocation4 + $0x314] sm:$0xf]
    %v768 = vld [vmem:[#allocation4 + $0x318] sm:$0xf]
    %v769 = vld [vmem:[#allocation4 + $0x31c] sm:$0xf]
    %v770 = vld [vmem:[#allocation4 + $0x320] sm:$0xf]
    %v771 = vld [vmem:[#allocation4 + $0x324] sm:$0xf]
    %v772 = vld [vmem:[#allocation4 + $0x328] sm:$0xf]
    %v773 = vld [vmem:[#allocation4 + $0x32c] sm:$0xf]
    %v774 = vld [vmem:[#allocation4 + $0x330] sm:$0xf]
    %v775 = vld [vmem:[#allocation4 + $0x334] sm:$0xf]
    %v776 = vld [vmem:[#allocation4 + $0x338] sm:$0xf]
    %v777 = vld [vmem:[#allocation4 + $0x33c] sm:$0xf]
    %v778 = vld [vmem:[#allocation4 + $0x340] sm:$0xf]
    %v779 = vld [vmem:[#allocation4 + $0x344] sm:$0xf]
    %v780 = vld [vmem:[#allocation4 + $0x348] sm:$0xf]
    %v781 = vld [vmem:[#allocation4 + $0x34c] sm:$0xf]
    %v782 = vld [vmem:[#allocation4 + $0x350] sm:$0xf]
    %v783 = vld [vmem:[#allocation4 + $0x354] sm:$0xf]
    %v784 = vld [vmem:[#allocation4 + $0x358] sm:$0xf]
    %v785 = vld [vmem:[#allocation4 + $0x35c] sm:$0xf]
    %v786 = vld [vmem:[#allocation4 + $0x360] sm:$0xf]
    %v787 = vld [vmem:[#allocation4 + $0x364] sm:$0xf]
    %v788 = vld [vmem:[#allocation4 + $0x368] sm:$0xf]
    %v789 = vld [vmem:[#allocation4 + $0x36c] sm:$0xf]
    %v790 = vld [vmem:[#allocation4 + $0x370] sm:$0xf]
    %v791 = vld [vmem:[#allocation4 + $0x374] sm:$0xf]
    %v792 = vld [vmem:[#allocation4 + $0x378] sm:$0xf]
    %v793 = vld [vmem:[#allocation4 + $0x37c] sm:$0xf]
    %v794 = vld [vmem:[#allocation4 + $0x380] sm:$0xf]
    %v795 = vld [vmem:[#allocation4 + $0x384] sm:$0xf]
    %v796 = vld [vmem:[#allocation4 + $0x388] sm:$0xf]
    %v797 = vld [vmem:[#allocation4 + $0x38c] sm:$0xf]
    %v798 = vld [vmem:[#allocation4 + $0x390] sm:$0xf]
    %v799 = vld [vmem:[#allocation4 + $0x394] sm:$0xf]
    %v800 = vld [vmem:[#allocation4 + $0x398] sm:$0xf]
    %v801 = vld [vmem:[#allocation4 + $0x39c] sm:$0xf]
    %v802 = vld [vmem:[#allocation4 + $0x3a0] sm:$0xf]
    %v803 = vld [vmem:[#allocation4 + $0x3a4] sm:$0xf]
    %v804 = vld [vmem:[#allocation4 + $0x3a8] sm:$0xf]
    %v805 = vld [vmem:[#allocation4 + $0x3ac] sm:$0xf]
    %v806 = vld [vmem:[#allocation4 + $0x3b0] sm:$0xf]
    %v807 = vld [vmem:[#allocation4 + $0x3b4] sm:$0xf]
    %v808 = vld [vmem:[#allocation4 + $0x3b8] sm:$0xf]
    %v809 = vld [vmem:[#allocation4 + $0x3bc] sm:$0xf]
    %v810 = vld [vmem:[#allocation4 + $0x3c0] sm:$0xf]
    %v811 = vld [vmem:[#allocation4 + $0x3c4] sm:$0xf]
    %v812 = vld [vmem:[#allocation4 + $0x3c8] sm:$0xf]
    %v813 = vld [vmem:[#allocation4 + $0x3cc] sm:$0xf]
    %v814 = vld [vmem:[#allocation4 + $0x3d0] sm:$0xf]
    %v815 = vld [vmem:[#allocation4 + $0x3d4] sm:$0xf]
    %v816 = vld [vmem:[#allocation4 + $0x3d8] sm:$0xf]
    %v817 = vld [vmem:[#allocation4 + $0x3dc] sm:$0xf]
    %v818 = vld [vmem:[#allocation4 + $0x3e0] sm:$0xf]
    %v819 = vld [vmem:[#allocation4 + $0x3e4] sm:$0xf]
    %v820 = vld [vmem:[#allocation4 + $0x3e8] sm:$0xf]
    %v821 = vld [vmem:[#allocation4 + $0x3ec] sm:$0xf]
    %v822 = vld [vmem:[#allocation4 + $0x3f0] sm:$0xf]
    %v823 = vld [vmem:[#allocation4 + $0x3f4] sm:$0xf]
    %v824 = vld [vmem:[#allocation4 + $0x3f8] sm:$0xf]
    %v825 = vld [vmem:[#allocation4 + $0x3fc] sm:$0xf]
    %v826 = vld [vmem:[%s4] sm:$0x1]
    %v828 = vperm.slane %v826, 0
    %v1086 = vunpack.c.l.b16 %v570
    %v1087 = vunpack.c.l.b16 %v571
    %v1088 = vunpack.c.l.b16 %v572
    %v1089 = vunpack.c.l.b16 %v573
    %v1090 = vunpack.c.l.b16 %v574
    %v1091 = vunpack.c.l.b16 %v575
    %v1092 = vunpack.c.l.b16 %v576
    %v1093 = vunpack.c.l.b16 %v577
    %v1094 = vunpack.c.l.b16 %v578
    %v1095 = vunpack.c.l.b16 %v579
    %v1096 = vunpack.c.l.b16 %v580
    %v1097 = vunpack.c.l.b16 %v581
    %v1098 = vunpack.c.l.b16 %v582
    %v1099 = vunpack.c.l.b16 %v583
    %v1100 = vunpack.c.l.b16 %v584
    %v1101 = vunpack.c.l.b16 %v585
    %v1102 = vunpack.c.l.b16 %v586
    %v1103 = vunpack.c.l.b16 %v587
    %v1104 = vunpack.c.l.b16 %v588
    %v1105 = vunpack.c.l.b16 %v589
    %v1106 = vunpack.c.l.b16 %v590
    %v1107 = vunpack.c.l.b16 %v591
    %v1108 = vunpack.c.l.b16 %v592
    %v1109 = vunpack.c.l.b16 %v593
    %v1110 = vunpack.c.l.b16 %v594
    %v1111 = vunpack.c.l.b16 %v595
    %v1112 = vunpack.c.l.b16 %v596
    %v1113 = vunpack.c.l.b16 %v597
    %v1114 = vunpack.c.l.b16 %v598
    %v1115 = vunpack.c.l.b16 %v599
    %v1116 = vunpack.c.l.b16 %v600
    %v1117 = vunpack.c.l.b16 %v601
    %v1118 = vunpack.c.l.b16 %v602
    %v1119 = vunpack.c.l.b16 %v603
    %v1120 = vunpack.c.l.b16 %v604
    %v1121 = vunpack.c.l.b16 %v605
    %v1122 = vunpack.c.l.b16 %v606
    %v1123 = vunpack.c.l.b16 %v607
    %v1124 = vunpack.c.l.b16 %v608
    %v1125 = vunpack.c.l.b16 %v609
    %v1126 = vunpack.c.l.b16 %v610
    %v1127 = vunpack.c.l.b16 %v611
    %v1128 = vunpack.c.l.b16 %v612
    %v1129 = vunpack.c.l.b16 %v613
    %v1130 = vunpack.c.l.b16 %v614
    %v1131 = vunpack.c.l.b16 %v615
    %v1132 = vunpack.c.l.b16 %v616
    %v1133 = vunpack.c.l.b16 %v617
    %v1134 = vunpack.c.l.b16 %v618
    %v1135 = vunpack.c.l.b16 %v619
    %v1136 = vunpack.c.l.b16 %v620
    %v1137 = vunpack.c.l.b16 %v621
    %v1138 = vunpack.c.l.b16 %v622
    %v1139 = vunpack.c.l.b16 %v623
    %v1140 = vunpack.c.l.b16 %v624
    %v1141 = vunpack.c.l.b16 %v625
    %v1142 = vunpack.c.l.b16 %v626
    %v1143 = vunpack.c.l.b16 %v627
    %v1144 = vunpack.c.l.b16 %v628
    %v1145 = vunpack.c.l.b16 %v629
    %v1146 = vunpack.c.l.b16 %v630
    %v1147 = vunpack.c.l.b16 %v631
    %v1148 = vunpack.c.l.b16 %v632
    %v1149 = vunpack.c.l.b16 %v633
    %v1150 = vunpack.c.l.b16 %v634
    %v1151 = vunpack.c.l.b16 %v635
    %v1152 = vunpack.c.l.b16 %v636
    %v1153 = vunpack.c.l.b16 %v637
    %v1154 = vunpack.c.l.b16 %v638
    %v1155 = vunpack.c.l.b16 %v639
    %v1156 = vunpack.c.l.b16 %v640
    %v1157 = vunpack.c.l.b16 %v641
    %v1158 = vunpack.c.l.b16 %v642
    %v1159 = vunpack.c.l.b16 %v643
    %v1160 = vunpack.c.l.b16 %v644
    %v1161 = vunpack.c.l.b16 %v645
    %v1162 = vunpack.c.l.b16 %v646
    %v1163 = vunpack.c.l.b16 %v647
    %v1164 = vunpack.c.l.b16 %v648
    %v1165 = vunpack.c.l.b16 %v649
    %v1166 = vunpack.c.l.b16 %v650
    %v1167 = vunpack.c.l.b16 %v651
    %v1168 = vunpack.c.l.b16 %v652
    %v1169 = vunpack.c.l.b16 %v653
    %v1170 = vunpack.c.l.b16 %v654
    %v1171 = vunpack.c.l.b16 %v655
    %v1172 = vunpack.c.l.b16 %v656
    %v1173 = vunpack.c.l.b16 %v657
    %v1174 = vunpack.c.l.b16 %v658
    %v1175 = vunpack.c.l.b16 %v659
    %v1176 = vunpack.c.l.b16 %v660
    %v1177 = vunpack.c.l.b16 %v661
    %v1178 = vunpack.c.l.b16 %v662
    %v1179 = vunpack.c.l.b16 %v663
    %v1180 = vunpack.c.l.b16 %v664
    %v1181 = vunpack.c.l.b16 %v665
    %v1182 = vunpack.c.l.b16 %v666
    %v1183 = vunpack.c.l.b16 %v667
    %v1184 = vunpack.c.l.b16 %v668
    %v1185 = vunpack.c.l.b16 %v669
    %v1186 = vunpack.c.l.b16 %v670
    %v1187 = vunpack.c.l.b16 %v671
    %v1188 = vunpack.c.l.b16 %v672
    %v1189 = vunpack.c.l.b16 %v673
    %v1190 = vunpack.c.l.b16 %v674
    %v1191 = vunpack.c.l.b16 %v675
    %v1192 = vunpack.c.l.b16 %v676
    %v1193 = vunpack.c.l.b16 %v677
    %v1194 = vunpack.c.l.b16 %v678
    %v1195 = vunpack.c.l.b16 %v679
    %v1196 = vunpack.c.l.b16 %v680
    %v1197 = vunpack.c.l.b16 %v681
    %v1198 = vunpack.c.l.b16 %v682
    %v1199 = vunpack.c.l.b16 %v683
    %v1200 = vunpack.c.l.b16 %v684
    %v1201 = vunpack.c.l.b16 %v685
    %v1202 = vunpack.c.l.b16 %v686
    %v1203 = vunpack.c.l.b16 %v687
    %v1204 = vunpack.c.l.b16 %v688
    %v1205 = vunpack.c.l.b16 %v689
    %v1206 = vunpack.c.l.b16 %v690
    %v1207 = vunpack.c.l.b16 %v691
    %v1208 = vunpack.c.l.b16 %v692
    %v1209 = vunpack.c.l.b16 %v693
    %v1210 = vunpack.c.l.b16 %v694
    %v1211 = vunpack.c.l.b16 %v695
    %v1212 = vunpack.c.l.b16 %v696
    %v1213 = vunpack.c.l.b16 %v697
    %v1214 = vunpack.c.l.b16 %v698
    %v1215 = vunpack.c.l.b16 %v699
    %v1216 = vunpack.c.l.b16 %v700
    %v1217 = vunpack.c.l.b16 %v701
    %v1218 = vunpack.c.l.b16 %v702
    %v1219 = vunpack.c.l.b16 %v703
    %v1220 = vunpack.c.l.b16 %v704
    %v1221 = vunpack.c.l.b16 %v705
    %v1222 = vunpack.c.l.b16 %v706
    %v1223 = vunpack.c.l.b16 %v707
    %v1224 = vunpack.c.l.b16 %v708
    %v1225 = vunpack.c.l.b16 %v709
    %v1226 = vunpack.c.l.b16 %v710
    %v1227 = vunpack.c.l.b16 %v711
    %v1228 = vunpack.c.l.b16 %v712
    %v1229 = vunpack.c.l.b16 %v713
    %v1230 = vunpack.c.l.b16 %v714
    %v1231 = vunpack.c.l.b16 %v715
    %v1232 = vunpack.c.l.b16 %v716
    %v1233 = vunpack.c.l.b16 %v717
    %v1234 = vunpack.c.l.b16 %v718
    %v1235 = vunpack.c.l.b16 %v719
    %v1236 = vunpack.c.l.b16 %v720
    %v1237 = vunpack.c.l.b16 %v721
    %v1238 = vunpack.c.l.b16 %v722
    %v1239 = vunpack.c.l.b16 %v723
    %v1240 = vunpack.c.l.b16 %v724
    %v1241 = vunpack.c.l.b16 %v725
    %v1242 = vunpack.c.l.b16 %v726
    %v1243 = vunpack.c.l.b16 %v727
    %v1244 = vunpack.c.l.b16 %v728
    %v1245 = vunpack.c.l.b16 %v729
    %v1246 = vunpack.c.l.b16 %v730
    %v1247 = vunpack.c.l.b16 %v731
    %v1248 = vunpack.c.l.b16 %v732
    %v1249 = vunpack.c.l.b16 %v733
    %v1250 = vunpack.c.l.b16 %v734
    %v1251 = vunpack.c.l.b16 %v735
    %v1252 = vunpack.c.l.b16 %v736
    %v1253 = vunpack.c.l.b16 %v737
    %v1254 = vunpack.c.l.b16 %v738
    %v1255 = vunpack.c.l.b16 %v739
    %v1256 = vunpack.c.l.b16 %v740
    %v1257 = vunpack.c.l.b16 %v741
    %v1258 = vunpack.c.l.b16 %v742
    %v1259 = vunpack.c.l.b16 %v743
    %v1260 = vunpack.c.l.b16 %v744
    %v1261 = vunpack.c.l.b16 %v745
    %v1262 = vunpack.c.l.b16 %v746
    %v1263 = vunpack.c.l.b16 %v747
    %v1264 = vunpack.c.l.b16 %v748
    %v1265 = vunpack.c.l.b16 %v749
    %v1266 = vunpack.c.l.b16 %v750
    %v1267 = vunpack.c.l.b16 %v751
    %v1268 = vunpack.c.l.b16 %v752
    %v1269 = vunpack.c.l.b16 %v753
    %v1270 = vunpack.c.l.b16 %v754
    %v1271 = vunpack.c.l.b16 %v755
    %v1272 = vunpack.c.l.b16 %v756
    %v1273 = vunpack.c.l.b16 %v757
    %v1274 = vunpack.c.l.b16 %v758
    %v1275 = vunpack.c.l.b16 %v759
    %v1276 = vunpack.c.l.b16 %v760
    %v1277 = vunpack.c.l.b16 %v761
    %v1278 = vunpack.c.l.b16 %v762
    %v1279 = vunpack.c.l.b16 %v763
    %v1280 = vunpack.c.l.b16 %v764
    %v1281 = vunpack.c.l.b16 %v765
    %v1282 = vunpack.c.l.b16 %v766
    %v1283 = vunpack.c.l.b16 %v767
    %v1284 = vunpack.c.l.b16 %v768
    %v1285 = vunpack.c.l.b16 %v769
    %v1286 = vunpack.c.l.b16 %v770
    %v1287 = vunpack.c.l.b16 %v771
    %v1288 = vunpack.c.l.b16 %v772
    %v1289 = vunpack.c.l.b16 %v773
    %v1290 = vunpack.c.l.b16 %v774
    %v1291 = vunpack.c.l.b16 %v775
    %v1292 = vunpack.c.l.b16 %v776
    %v1293 = vunpack.c.l.b16 %v777
    %v1294 = vunpack.c.l.b16 %v778
    %v1295 = vunpack.c.l.b16 %v779
    %v1296 = vunpack.c.l.b16 %v780
    %v1297 = vunpack.c.l.b16 %v781
    %v1298 = vunpack.c.l.b16 %v782
    %v1299 = vunpack.c.l.b16 %v783
    %v1300 = vunpack.c.l.b16 %v784
    %v1301 = vunpack.c.l.b16 %v785
    %v1302 = vunpack.c.l.b16 %v786
    %v1303 = vunpack.c.l.b16 %v787
    %v1304 = vunpack.c.l.b16 %v788
    %v1305 = vunpack.c.l.b16 %v789
    %v1306 = vunpack.c.l.b16 %v790
    %v1307 = vunpack.c.l.b16 %v791
    %v1308 = vunpack.c.l.b16 %v792
    %v1309 = vunpack.c.l.b16 %v793
    %v1310 = vunpack.c.l.b16 %v794
    %v1311 = vunpack.c.l.b16 %v795
    %v1312 = vunpack.c.l.b16 %v796
    %v1313 = vunpack.c.l.b16 %v797
    %v1314 = vunpack.c.l.b16 %v798
    %v1315 = vunpack.c.l.b16 %v799
    %v1316 = vunpack.c.l.b16 %v800
    %v1317 = vunpack.c.l.b16 %v801
    %v1318 = vunpack.c.l.b16 %v802
    %v1319 = vunpack.c.l.b16 %v803
    %v1320 = vunpack.c.l.b16 %v804
    %v1321 = vunpack.c.l.b16 %v805
    %v1322 = vunpack.c.l.b16 %v806
    %v1323 = vunpack.c.l.b16 %v807
    %v1324 = vunpack.c.l.b16 %v808
    %v1325 = vunpack.c.l.b16 %v809
    %v1326 = vunpack.c.l.b16 %v810
    %v1327 = vunpack.c.l.b16 %v811
    %v1328 = vunpack.c.l.b16 %v812
    %v1329 = vunpack.c.l.b16 %v813
    %v1330 = vunpack.c.l.b16 %v814
    %v1331 = vunpack.c.l.b16 %v815
    %v1332 = vunpack.c.l.b16 %v816
    %v1333 = vunpack.c.l.b16 %v817
    %v1334 = vunpack.c.l.b16 %v818
    %v1335 = vunpack.c.l.b16 %v819
    %v1336 = vunpack.c.l.b16 %v820
    %v1337 = vunpack.c.l.b16 %v821
    %v1338 = vunpack.c.l.b16 %v822
    %v1339 = vunpack.c.l.b16 %v823
    %v1340 = vunpack.c.l.b16 %v824
    %v1341 = vunpack.c.l.b16 %v825
    %v1342 = vpack.c.b16 %v1087, %v1086
    %v1343 = vpack.c.b16 %v1089, %v1088
    %v1344 = vpack.c.b16 %v1091, %v1090
    %v1345 = vpack.c.b16 %v1093, %v1092
    %v1346 = vpack.c.b16 %v1095, %v1094
    %v1347 = vpack.c.b16 %v1097, %v1096
    %v1348 = vpack.c.b16 %v1099, %v1098
    %v1349 = vpack.c.b16 %v1101, %v1100
    %v1350 = vpack.c.b16 %v1103, %v1102
    %v1351 = vpack.c.b16 %v1105, %v1104
    %v1352 = vpack.c.b16 %v1107, %v1106
    %v1353 = vpack.c.b16 %v1109, %v1108
    %v1354 = vpack.c.b16 %v1111, %v1110
    %v1355 = vpack.c.b16 %v1113, %v1112
    %v1356 = vpack.c.b16 %v1115, %v1114
    %v1357 = vpack.c.b16 %v1117, %v1116
    %v1358 = vpack.c.b16 %v1119, %v1118
    %v1359 = vpack.c.b16 %v1121, %v1120
    %v1360 = vpack.c.b16 %v1123, %v1122
    %v1361 = vpack.c.b16 %v1125, %v1124
    %v1362 = vpack.c.b16 %v1127, %v1126
    %v1363 = vpack.c.b16 %v1129, %v1128
    %v1364 = vpack.c.b16 %v1131, %v1130
    %v1365 = vpack.c.b16 %v1133, %v1132
    %v1366 = vpack.c.b16 %v1135, %v1134
    %v1367 = vpack.c.b16 %v1137, %v1136
    %v1368 = vpack.c.b16 %v1139, %v1138
    %v1369 = vpack.c.b16 %v1141, %v1140
    %v1370 = vpack.c.b16 %v1143, %v1142
    %v1371 = vpack.c.b16 %v1145, %v1144
    %v1372 = vpack.c.b16 %v1147, %v1146
    %v1373 = vpack.c.b16 %v1149, %v1148
    %v1374 = vpack.c.b16 %v1151, %v1150
    %v1375 = vpack.c.b16 %v1153, %v1152
    %v1376 = vpack.c.b16 %v1155, %v1154
    %v1377 = vpack.c.b16 %v1157, %v1156
    %v1378 = vpack.c.b16 %v1159, %v1158
    %v1379 = vpack.c.b16 %v1161, %v1160
    %v1380 = vpack.c.b16 %v1163, %v1162
    %v1381 = vpack.c.b16 %v1165, %v1164
    %v1382 = vpack.c.b16 %v1167, %v1166
    %v1383 = vpack.c.b16 %v1169, %v1168
    %v1384 = vpack.c.b16 %v1171, %v1170
    %v1385 = vpack.c.b16 %v1173, %v1172
    %v1386 = vpack.c.b16 %v1175, %v1174
    %v1387 = vpack.c.b16 %v1177, %v1176
    %v1388 = vpack.c.b16 %v1179, %v1178
    %v1389 = vpack.c.b16 %v1181, %v1180
    %v1390 = vpack.c.b16 %v1183, %v1182
    %v1391 = vpack.c.b16 %v1185, %v1184
    %v1392 = vpack.c.b16 %v1187, %v1186
    %v1393 = vpack.c.b16 %v1189, %v1188
    %v1394 = vpack.c.b16 %v1191, %v1190
    %v1395 = vpack.c.b16 %v1193, %v1192
    %v1396 = vpack.c.b16 %v1195, %v1194
    %v1397 = vpack.c.b16 %v1197, %v1196
    %v1398 = vpack.c.b16 %v1199, %v1198
    %v1399 = vpack.c.b16 %v1201, %v1200
    %v1400 = vpack.c.b16 %v1203, %v1202
    %v1401 = vpack.c.b16 %v1205, %v1204
    %v1402 = vpack.c.b16 %v1207, %v1206
    %v1403 = vpack.c.b16 %v1209, %v1208
    %v1404 = vpack.c.b16 %v1211, %v1210
    %v1405 = vpack.c.b16 %v1213, %v1212
    %v1406 = vpack.c.b16 %v1215, %v1214
    %v1407 = vpack.c.b16 %v1217, %v1216
    %v1408 = vpack.c.b16 %v1219, %v1218
    %v1409 = vpack.c.b16 %v1221, %v1220
    %v1410 = vpack.c.b16 %v1223, %v1222
    %v1411 = vpack.c.b16 %v1225, %v1224
    %v1412 = vpack.c.b16 %v1227, %v1226
    %v1413 = vpack.c.b16 %v1229, %v1228
    %v1414 = vpack.c.b16 %v1231, %v1230
    %v1415 = vpack.c.b16 %v1233, %v1232
    %v1416 = vpack.c.b16 %v1235, %v1234
    %v1417 = vpack.c.b16 %v1237, %v1236
    %v1418 = vpack.c.b16 %v1239, %v1238
    %v1419 = vpack.c.b16 %v1241, %v1240
    %v1420 = vpack.c.b16 %v1243, %v1242
    %v1421 = vpack.c.b16 %v1245, %v1244
    %v1422 = vpack.c.b16 %v1247, %v1246
    %v1423 = vpack.c.b16 %v1249, %v1248
    %v1424 = vpack.c.b16 %v1251, %v1250
    %v1425 = vpack.c.b16 %v1253, %v1252
    %v1426 = vpack.c.b16 %v1255, %v1254
    %v1427 = vpack.c.b16 %v1257, %v1256
    %v1428 = vpack.c.b16 %v1259, %v1258
    %v1429 = vpack.c.b16 %v1261, %v1260
    %v1430 = vpack.c.b16 %v1263, %v1262
    %v1431 = vpack.c.b16 %v1265, %v1264
    %v1432 = vpack.c.b16 %v1267, %v1266
    %v1433 = vpack.c.b16 %v1269, %v1268
    %v1434 = vpack.c.b16 %v1271, %v1270
    %v1435 = vpack.c.b16 %v1273, %v1272
    %v1436 = vpack.c.b16 %v1275, %v1274
    %v1437 = vpack.c.b16 %v1277, %v1276
    %v1438 = vpack.c.b16 %v1279, %v1278
    %v1439 = vpack.c.b16 %v1281, %v1280
    %v1440 = vpack.c.b16 %v1283, %v1282
    %v1441 = vpack.c.b16 %v1285, %v1284
    %v1442 = vpack.c.b16 %v1287, %v1286
    %v1443 = vpack.c.b16 %v1289, %v1288
    %v1444 = vpack.c.b16 %v1291, %v1290
    %v1445 = vpack.c.b16 %v1293, %v1292
    %v1446 = vpack.c.b16 %v1295, %v1294
    %v1447 = vpack.c.b16 %v1297, %v1296
    %v1448 = vpack.c.b16 %v1299, %v1298
    %v1449 = vpack.c.b16 %v1301, %v1300
    %v1450 = vpack.c.b16 %v1303, %v1302
    %v1451 = vpack.c.b16 %v1305, %v1304
    %v1452 = vpack.c.b16 %v1307, %v1306
    %v1453 = vpack.c.b16 %v1309, %v1308
    %v1454 = vpack.c.b16 %v1311, %v1310
    %v1455 = vpack.c.b16 %v1313, %v1312
    %v1456 = vpack.c.b16 %v1315, %v1314
    %v1457 = vpack.c.b16 %v1317, %v1316
    %v1458 = vpack.c.b16 %v1319, %v1318
    %v1459 = vpack.c.b16 %v1321, %v1320
    %v1460 = vpack.c.b16 %v1323, %v1322
    %v1461 = vpack.c.b16 %v1325, %v1324
    %v1462 = vpack.c.b16 %v1327, %v1326
    %v1463 = vpack.c.b16 %v1329, %v1328
    %v1464 = vpack.c.b16 %v1331, %v1330
    %v1465 = vpack.c.b16 %v1333, %v1332
    %v1466 = vpack.c.b16 %v1335, %v1334
    %v1467 = vpack.c.b16 %v1337, %v1336
    %v1468 = vpack.c.b16 %v1339, %v1338
    %v1469 = vpack.c.b16 %v1341, %v1340
    %1598 = vmatpush.bf16.msra.mxu0 %v1349
    %1599 = vmatpush.bf16.msra.mxu0 %v1348
    %1600 = vmatpush.bf16.msra.mxu0 %v1347
    %1601 = vmatpush.bf16.msra.mxu0 %v1346
    %1602 = vmatpush.bf16.msra.mxu0 %v1345
    %1603 = vmatpush.bf16.msra.mxu0 %v1344
    %1604 = vmatpush.bf16.msra.mxu0 %v1343
    %1605 = vmatpush.bf16.msra.mxu0 %v1342
    %1606 = vmatmul.bf16.gmra.mxu0 %v554
    %v1607 = vpop.f32.mrf.mxu0
    %v1608 = vadd.f32 %v828, %v1607
    %v1609 = vpop.f32.mrf.mxu0
    %v1610 = vadd.f32 %v828, %v1609
    %1611 = vdwg.mxu0
    %1612 = vmatpush.bf16.msra.mxu0 %v1357
    %1613 = vmatpush.bf16.msra.mxu0 %v1356
    %1614 = vmatpush.bf16.msra.mxu0 %v1355
    %1615 = vmatpush.bf16.msra.mxu0 %v1354
    %1616 = vmatpush.bf16.msra.mxu0 %v1353
    %1617 = vmatpush.bf16.msra.mxu0 %v1352
    %1618 = vmatpush.bf16.msra.mxu0 %v1351
    %1619 = vmatpush.bf16.msra.mxu0 %v1350
    %1620 = vmatmul.bf16.gmra.mxu0 %v555
    %v1621 = vpop.f32.mrf.mxu0
    %v1622 = vadd.f32 %v1608, %v1621
    %v1623 = vpop.f32.mrf.mxu0
    %v1624 = vadd.f32 %v1610, %v1623
    %1625 = vdwg.mxu0
    %1626 = vmatpush.bf16.msra.mxu0 %v1365
    %1627 = vmatpush.bf16.msra.mxu0 %v1364
    %1628 = vmatpush.bf16.msra.mxu0 %v1363
    %1629 = vmatpush.bf16.msra.mxu0 %v1362
    %1630 = vmatpush.bf16.msra.mxu0 %v1361
    %1631 = vmatpush.bf16.msra.mxu0 %v1360
    %1632 = vmatpush.bf16.msra.mxu0 %v1359
    %1633 = vmatpush.bf16.msra.mxu0 %v1358
    %1634 = vmatmul.bf16.gmra.mxu0 %v556
    %v1635 = vpop.f32.mrf.mxu0
    %v1636 = vadd.f32 %v1622, %v1635
    %v1637 = vpop.f32.mrf.mxu0
    %v1638 = vadd.f32 %v1624, %v1637
    %1639 = vdwg.mxu0
    %1640 = vmatpush.bf16.msra.mxu0 %v1373
    %1641 = vmatpush.bf16.msra.mxu0 %v1372
    %1642 = vmatpush.bf16.msra.mxu0 %v1371
    %1643 = vmatpush.bf16.msra.mxu0 %v1370
    %1644 = vmatpush.bf16.msra.mxu0 %v1369
    %1645 = vmatpush.bf16.msra.mxu0 %v1368
    %1646 = vmatpush.bf16.msra.mxu0 %v1367
    %1647 = vmatpush.bf16.msra.mxu0 %v1366
    %1648 = vmatmul.bf16.gmra.mxu0 %v557
    %v1649 = vpop.f32.mrf.mxu0
    %v1650 = vadd.f32 %v1636, %v1649
    %v1651 = vpop.f32.mrf.mxu0
    %v1652 = vadd.f32 %v1638, %v1651
    %1653 = vdwg.mxu0
    %1654 = vmatpush.bf16.msra.mxu0 %v1381
    %1655 = vmatpush.bf16.msra.mxu0 %v1380
    %1656 = vmatpush.bf16.msra.mxu0 %v1379
    %1657 = vmatpush.bf16.msra.mxu0 %v1378
    %1658 = vmatpush.bf16.msra.mxu0 %v1377
    %1659 = vmatpush.bf16.msra.mxu0 %v1376
    %1660 = vmatpush.bf16.msra.mxu0 %v1375
    %1661 = vmatpush.bf16.msra.mxu0 %v1374
    %1662 = vmatmul.bf16.gmra.mxu0 %v558
    %v1663 = vpop.f32.mrf.mxu0
    %v1664 = vadd.f32 %v1650, %v1663
    %v1665 = vpop.f32.mrf.mxu0
    %v1666 = vadd.f32 %v1652, %v1665
    %1667 = vdwg.mxu0
    %1668 = vmatpush.bf16.msra.mxu0 %v1389
    %1669 = vmatpush.bf16.msra.mxu0 %v1388
    %1670 = vmatpush.bf16.msra.mxu0 %v1387
    %1671 = vmatpush.bf16.msra.mxu0 %v1386
    %1672 = vmatpush.bf16.msra.mxu0 %v1385
    %1673 = vmatpush.bf16.msra.mxu0 %v1384
    %1674 = vmatpush.bf16.msra.mxu0 %v1383
    %1675 = vmatpush.bf16.msra.mxu0 %v1382
    %1676 = vmatmul.bf16.gmra.mxu0 %v559
    %v1677 = vpop.f32.mrf.mxu0
    %v1678 = vadd.f32 %v1664, %v1677
    %v1679 = vpop.f32.mrf.mxu0
    %v1680 = vadd.f32 %v1666, %v1679
    %1681 = vdwg.mxu0
    %1682 = vmatpush.bf16.msra.mxu0 %v1397
    %1683 = vmatpush.bf16.msra.mxu0 %v1396
    %1684 = vmatpush.bf16.msra.mxu0 %v1395
    %1685 = vmatpush.bf16.msra.mxu0 %v1394
    %1686 = vmatpush.bf16.msra.mxu0 %v1393
    %1687 = vmatpush.bf16.msra.mxu0 %v1392
    %1688 = vmatpush.bf16.msra.mxu0 %v1391
    %1689 = vmatpush.bf16.msra.mxu0 %v1390
    %1690 = vmatmul.bf16.gmra.mxu0 %v560
    %v1691 = vpop.f32.mrf.mxu0
    %v1692 = vadd.f32 %v1678, %v1691
    %v1693 = vpop.f32.mrf.mxu0
    %v1694 = vadd.f32 %v1680, %v1693
    %1695 = vdwg.mxu0
    %1696 = vmatpush.bf16.msra.mxu0 %v1405
    %1697 = vmatpush.bf16.msra.mxu0 %v1404
    %1698 = vmatpush.bf16.msra.mxu0 %v1403
    %1699 = vmatpush.bf16.msra.mxu0 %v1402
    %1700 = vmatpush.bf16.msra.mxu0 %v1401
    %1701 = vmatpush.bf16.msra.mxu0 %v1400
    %1702 = vmatpush.bf16.msra.mxu0 %v1399
    %1703 = vmatpush.bf16.msra.mxu0 %v1398
    %1704 = vmatmul.bf16.gmra.mxu0 %v561
    %v1705 = vpop.f32.mrf.mxu0
    %v1706 = vadd.f32 %v1692, %v1705
    %v1707 = vpop.f32.mrf.mxu0
    %v1708 = vadd.f32 %v1694, %v1707
    %1709 = vdwg.mxu0
    %1710 = vmatpush.bf16.msra.mxu0 %v1413
    %1711 = vmatpush.bf16.msra.mxu0 %v1412
    %1712 = vmatpush.bf16.msra.mxu0 %v1411
    %1713 = vmatpush.bf16.msra.mxu0 %v1410
    %1714 = vmatpush.bf16.msra.mxu0 %v1409
    %1715 = vmatpush.bf16.msra.mxu0 %v1408
    %1716 = vmatpush.bf16.msra.mxu0 %v1407
    %1717 = vmatpush.bf16.msra.mxu0 %v1406
    %1718 = vmatmul.bf16.gmra.mxu0 %v562
    %v1719 = vpop.f32.mrf.mxu0
    %v1720 = vadd.f32 %v1706, %v1719
    %v1721 = vpop.f32.mrf.mxu0
    %v1722 = vadd.f32 %v1708, %v1721
    %1723 = vdwg.mxu0
    %1724 = vmatpush.bf16.msra.mxu0 %v1421
    %1725 = vmatpush.bf16.msra.mxu0 %v1420
    %1726 = vmatpush.bf16.msra.mxu0 %v1419
    %1727 = vmatpush.bf16.msra.mxu0 %v1418
    %1728 = vmatpush.bf16.msra.mxu0 %v1417
    %1729 = vmatpush.bf16.msra.mxu0 %v1416
    %1730 = vmatpush.bf16.msra.mxu0 %v1415
    %1731 = vmatpush.bf16.msra.mxu0 %v1414
    %1732 = vmatmul.bf16.gmra.mxu0 %v563
    %v1733 = vpop.f32.mrf.mxu0
    %v1734 = vadd.f32 %v1720, %v1733
    %v1735 = vpop.f32.mrf.mxu0
    %v1736 = vadd.f32 %v1722, %v1735
    %1737 = vdwg.mxu0
    %1738 = vmatpush.bf16.msra.mxu0 %v1429
    %1739 = vmatpush.bf16.msra.mxu0 %v1428
    %1740 = vmatpush.bf16.msra.mxu0 %v1427
    %1741 = vmatpush.bf16.msra.mxu0 %v1426
    %1742 = vmatpush.bf16.msra.mxu0 %v1425
    %1743 = vmatpush.bf16.msra.mxu0 %v1424
    %1744 = vmatpush.bf16.msra.mxu0 %v1423
    %1745 = vmatpush.bf16.msra.mxu0 %v1422
    %1746 = vmatmul.bf16.gmra.mxu0 %v564
    %v1747 = vpop.f32.mrf.mxu0
    %v1748 = vadd.f32 %v1734, %v1747
    %v1749 = vpop.f32.mrf.mxu0
    %v1750 = vadd.f32 %v1736, %v1749
    %1751 = vdwg.mxu0
    %1752 = vmatpush.bf16.msra.mxu0 %v1437
    %1753 = vmatpush.bf16.msra.mxu0 %v1436
    %1754 = vmatpush.bf16.msra.mxu0 %v1435
    %1755 = vmatpush.bf16.msra.mxu0 %v1434
    %1756 = vmatpush.bf16.msra.mxu0 %v1433
    %1757 = vmatpush.bf16.msra.mxu0 %v1432
    %1758 = vmatpush.bf16.msra.mxu0 %v1431
    %1759 = vmatpush.bf16.msra.mxu0 %v1430
    %1760 = vmatmul.bf16.gmra.mxu0 %v565
    %v1761 = vpop.f32.mrf.mxu0
    %v1762 = vadd.f32 %v1748, %v1761
    %v1763 = vpop.f32.mrf.mxu0
    %v1764 = vadd.f32 %v1750, %v1763
    %1765 = vdwg.mxu0
    %1766 = vmatpush.bf16.msra.mxu0 %v1445
    %1767 = vmatpush.bf16.msra.mxu0 %v1444
    %1768 = vmatpush.bf16.msra.mxu0 %v1443
    %1769 = vmatpush.bf16.msra.mxu0 %v1442
    %1770 = vmatpush.bf16.msra.mxu0 %v1441
    %1771 = vmatpush.bf16.msra.mxu0 %v1440
    %1772 = vmatpush.bf16.msra.mxu0 %v1439
    %1773 = vmatpush.bf16.msra.mxu0 %v1438
    %1774 = vmatmul.bf16.gmra.mxu0 %v566
    %v1775 = vpop.f32.mrf.mxu0
    %v1776 = vadd.f32 %v1762, %v1775
    %v1777 = vpop.f32.mrf.mxu0
    %v1778 = vadd.f32 %v1764, %v1777
    %1779 = vdwg.mxu0
    %1780 = vmatpush.bf16.msra.mxu0 %v1453
    %1781 = vmatpush.bf16.msra.mxu0 %v1452
    %1782 = vmatpush.bf16.msra.mxu0 %v1451
    %1783 = vmatpush.bf16.msra.mxu0 %v1450
    %1784 = vmatpush.bf16.msra.mxu0 %v1449
    %1785 = vmatpush.bf16.msra.mxu0 %v1448
    %1786 = vmatpush.bf16.msra.mxu0 %v1447
    %1787 = vmatpush.bf16.msra.mxu0 %v1446
    %1788 = vmatmul.bf16.gmra.mxu0 %v567
    %v1789 = vpop.f32.mrf.mxu0
    %v1790 = vadd.f32 %v1776, %v1789
    %v1791 = vpop.f32.mrf.mxu0
    %v1792 = vadd.f32 %v1778, %v1791
    %1793 = vdwg.mxu0
    %1794 = vmatpush.bf16.msra.mxu0 %v1461
    %1795 = vmatpush.bf16.msra.mxu0 %v1460
    %1796 = vmatpush.bf16.msra.mxu0 %v1459
    %1797 = vmatpush.bf16.msra.mxu0 %v1458
    %1798 = vmatpush.bf16.msra.mxu0 %v1457
    %1799 = vmatpush.bf16.msra.mxu0 %v1456
    %1800 = vmatpush.bf16.msra.mxu0 %v1455
    %1801 = vmatpush.bf16.msra.mxu0 %v1454
    %1802 = vmatmul.bf16.gmra.mxu0 %v568
    %v1803 = vpop.f32.mrf.mxu0
    %v1804 = vadd.f32 %v1790, %v1803
    %v1805 = vpop.f32.mrf.mxu0
    %v1806 = vadd.f32 %v1792, %v1805
    %1807 = vdwg.mxu0
    %1808 = vmatpush.bf16.msra.mxu0 %v1469
    %1809 = vmatpush.bf16.msra.mxu0 %v1468
    %1810 = vmatpush.bf16.msra.mxu0 %v1467
    %1811 = vmatpush.bf16.msra.mxu0 %v1466
    %1812 = vmatpush.bf16.msra.mxu0 %v1465
    %1813 = vmatpush.bf16.msra.mxu0 %v1464
    %1814 = vmatpush.bf16.msra.mxu0 %v1463
    %1815 = vmatpush.bf16.msra.mxu0 %v1462
    %1816 = vmatmul.bf16.gmra.mxu0 %v569
    %v1817 = vpop.f32.mrf.mxu0
    %v1818 = vadd.f32 %v1804, %v1817
    %v1819 = vpop.f32.mrf.mxu0
    %v1820 = vadd.f32 %v1806, %v1819
    %1821 = vdwg.mxu0
    %v1822 = vunpack.c.l.bf16 %v59
    %v1823 = vunpack.c.l.bf16 %v60
    %v1824 = vadd.f32 %v1822, %v1818
    %v1825 = vadd.f32 %v1823, %v1820
    %v1826 = vsel %vm294, %v1824, 0.0
    %1827 = vadd.xlane.f32.xlu0 %v1826
    %v1828 = vpop.xlane.xlu0 %1827
    %v1829 = vsel %vm294, %v1825, 0.0
    %1830 = vadd.xlane.f32.xlu0 %v1829
    %v1831 = vpop.xlane.xlu0 %1830
    %v1832 = vrcp.pop 32.0
    %v1833 = vmul.f32 32.0, %v1832
    %v1834 = vsub.f32 1.0, %v1833
    %v1835 = vmul.f32 %v1832, %v1834
    %v1836 = vadd.f32 %v1832, %v1835
    %vm1837 = vweird.f32 %v1832
    %v1838 = vsel %vm1837, %v1832, %v1836
    %v1839 = vmul.f32 %v1828, %v1838
    %v1840 = vmul.f32 %v1831, %v1838
    %v1841 = vsub.f32 %v1824, %v1839
    %v1842 = vsub.f32 %v1825, %v1840
    %v1843 = vmul.f32 %v1841, %v1841
    %v1844 = vmul.f32 %v1842, %v1842
    %v1845 = vsel %vm294, %v1843, 0.0
    %1846 = vadd.xlane.f32.xlu0 %v1845
    %v1847 = vpop.xlane.xlu0 %1846
    %v1848 = vsel %vm294, %v1844, 0.0
    %1849 = vadd.xlane.f32.xlu0 %v1848
    %v1850 = vpop.xlane.xlu0 %1849
    %v1851 = vmul.f32 %v1847, %v1838
    %v1852 = vmul.f32 %v1850, %v1838
    %v1853 = vadd.f32 %v1851, 1e-05
    %v1854 = vadd.f32 %v1852, 1e-05
    %v1855 = vrsqrt.pop %v1853
    %v1856 = vmul.f32 %v1855, %v1853
    %v1857 = vmul.f32 %v1856, %v1855
    %v1858 = vmul.f32 0.5, %v1857
    %v1859 = vsub.f32 1.5, %v1858
    %v1860 = vmul.f32 %v1855, %v1859
    %vm1861 = vweird.f32 %v1853
    %vm1862 = vweird.f32 %v1855
    %vm1863 = vmor %vm1861, %vm1862
    %v1864 = vsel %vm1863, %v1855, %v1860
    %v1865 = vrsqrt.pop %v1854
    %v1866 = vmul.f32 %v1865, %v1854
    %v1867 = vmul.f32 %v1866, %v1865
    %v1868 = vmul.f32 0.5, %v1867
    %v1869 = vsub.f32 1.5, %v1868
    %v1870 = vmul.f32 %v1865, %v1869
    %vm1871 = vweird.f32 %v1854
    %vm1872 = vweird.f32 %v1865
    %vm1873 = vmor %vm1871, %vm1872
    %v1874 = vsel %vm1873, %v1865, %v1870
    %v1875 = vmul.f32 %v1841, %v1864
    %v1876 = vmul.f32 %v1842, %v1874
    %v1877 = vld [vmem:[%s5] sm:$0x1]
    %v1879 = vperm.slane %v1877, 0
    %v1881 = vmul.f32 %v1875, %v1879
    %v1882 = vmul.f32 %v1876, %v1879
    %v1883 = vld [vmem:[%s6] sm:$0x1]
    %v1885 = vperm.slane %v1883, 0
    %v1887 = vadd.f32 %v1881, %v1885
    %v1888 = vadd.f32 %v1882, %v1885
    %v1889 = vpack.c.bf16 %v1887, %v1887
    %v1890 = vpack.c.bf16 %v1888, %v1888
    %vm1891 = vcmask 257024
    %1892 = vst.msk [vmem:[%s7] sm:$0xf] %vm1891, %v1889
    %1893 = vst.msk [vmem:[%s7 + $0x4] sm:$0xf] %vm1891, %v1890
    // Predicated region
    $region38: #{_lambda_.14} parent=1 // pred_check
      _
    $region39: #{_lambda_.14} parent=1 // pred_check_branch
      %1895 = sbr.rel (0) target = $region41
    $region40: #{_lambda_.14} parent=1 // pred_region
      _
    $region41: #{_lambda_.14} parent=1 // pred_fallthru
      _
    // Predicated region
    $region42: #{_lambda_.14} parent=1 // pred_check
      _
    $region43: #{_lambda_.14} parent=1 // pred_check_branch
      %1897 = sbr.rel (0) target = $region45
    $region44: #{_lambda_.14} parent=1 // pred_region
      _
    $region45: #{_lambda_.14} parent=1 // pred_fallthru
      _
    %1898 = vsyncpa [#allocation3], 1
    %1899 = vsyncpa [#allocation5], 1

</llo_original>
